<compile_context>
chip_gen: v7x
topology: tpu7x:2x2x1
jax: 0.10.0
libtpu: 0.0.40
codegen_flags: <defaults>
</compile_context>

<pallas_src>
import functools

import jax
import jax.numpy as jnp
from jax.experimental import pallas as pl
from jax.experimental.pallas import tpu as pltpu


def encoder_block_kernel(qh_ref, kh_ref, vh_ref, qres_ref,
                         wq_ref, wk_ref, wv_ref,
                         wfc_ref, bfc_ref,
                         g1_ref, be1_ref,
                         w1_ref, b1_ref,
                         w2_ref, b2_ref,
                         g2_ref, be2_ref,
                         out_ref, *,
                         n_heads, head_dim, seq_len, batches_per_tile,
                         compute_dtype):
    H, D, S, BT = n_heads, head_dim, seq_len, batches_per_tile
    cd = compute_dtype
    f32 = jnp.float32

    # ---- shared-weight per-head projections: one (H*BT*S, D) @ (D, D) each --
    # (contiguous leading-dim reshapes only; no block-diagonal expansion).
    def project(act_ref, w_ref):
        a = act_ref[...].reshape(H * BT * S, D).astype(cd)
        p = jnp.dot(a, w_ref[...], preferred_element_type=f32)
        return p.reshape(H * BT, S, D)

    qp = project(qh_ref, wq_ref)      # sqrt(S) score scale already folded in wq
    kp = project(kh_ref, wk_ref)
    vp = project(vh_ref, wv_ref)

    # ---- per-(head, batch) attention: single batched einsum, f32 softmax ----
    # NOTE: for large S, tile the K/V axis with an online softmax instead of
    # materializing (H*BT, S, S) scores (keeps v7x's 64 MiB VMEM budget).
    scores = jnp.einsum("nqd,nkd->nqk", qp.astype(cd), kp.astype(cd),
                        preferred_element_type=f32)           # (H*BT, S, S)
    scores = scores - jnp.max(scores, axis=-1, keepdims=True)
    e = jnp.exp(scores)
    attn = e * pl.reciprocal(jnp.sum(e, axis=-1, keepdims=True), approx=True)
    ctx = jnp.einsum("nqk,nkd->nqd", attn.astype(cd), vp.astype(cd),
                     preferred_element_type=f32)              # (H*BT, S, D)

    # ---- head merge fused into the fc matmul --------------------------------
    # att[(bt,s), :] = sum_h ctx[h, (bt,s), :] @ wfc[h]   (wfc passed as (H,D,E))
    # Exact fc FLOPs; no (s, h) transpose / lane concat inside the kernel.
    ctx = ctx.reshape(H, BT * S, D)                           # contiguous merge
    att = jnp.dot(ctx[0].astype(cd), wfc_ref[0], preferred_element_type=f32)
    for h in range(1, H):
        att = att + jnp.dot(ctx[h].astype(cd), wfc_ref[h],
                            preferred_element_type=f32)
    att = att + bfc_ref[...]

    def layer_norm(x, g, b):            # f32 math (v5e VPU/EUP have no bf16)
        mu = jnp.mean(x, axis=-1, keepdims=True)
        var = jnp.mean((x - mu) ** 2, axis=-1, keepdims=True)
        return (x - mu) * jax.lax.rsqrt(var + 1e-5) * g + b

    xres = qres_ref[...].astype(f32)
    y1 = layer_norm(att + xres, g1_ref[...], be1_ref[...])
    # TODO(synk): nn.Dropout has no inference-time effect; treated as identity.
    hidden = jnp.maximum(
        jnp.dot(y1.astype(cd), w1_ref[...], preferred_element_type=f32)
        + b1_ref[...], 0.0)
    ff = jnp.dot(hidden.astype(cd), w2_ref[...],
                 preferred_element_type=f32) + b2_ref[...]
    y2 = layer_norm(ff + y1, g2_ref[...], be2_ref[...])
    out_ref[...] = y2.astype(out_ref.dtype)


def prepare_encoder_params(params, n_heads, kv_seq_len,
                           compute_dtype=jnp.bfloat16):
    """One-time host-side parameter prep (NOT on the per-call path).

    * folds the reference's sqrt(seq_len) score scale into wq;
    * reshapes the fc weight to head-major (H, D, E) so the kernel fuses the
      head merge into the fc matmul;
    * casts matmul weights to `compute_dtype` (bf16 MXU on v5e/v6e/v7x);
      layernorm / bias parameters stay float32.
    """
    f32 = jnp.float32
    D = params["wq"].shape[0]
    E = params["wfc"].shape[0]
    scale = jnp.asarray(kv_seq_len, f32) ** 0.5     # softmax(scores * sqrt(S))
    return {
        "wq": (params["wq"].astype(f32) * scale).astype(compute_dtype),
        "wk": params["wk"].astype(compute_dtype),
        "wv": params["wv"].astype(compute_dtype),
        "wfc": params["wfc"].astype(compute_dtype).reshape(n_heads, D, E),
        "bfc": params["bfc"].astype(f32),
        "g1": params["g1"].astype(f32),
        "be1": params["be1"].astype(f32),
        "w1": params["w1"].astype(compute_dtype),
        "b1": params["b1"].astype(f32),
        "w2": params["w2"].astype(compute_dtype),
        "b2": params["b2"].astype(f32),
        "g2": params["g2"].astype(f32),
        "be2": params["be2"].astype(f32),
    }


def _pick_vmem_limit_bytes():
    default = 48 * 1024 * 1024            # fits v7x's 64 MiB physical VMEM
    try:
        cap = int(pltpu.get_tpu_info().vmem_capacity_bytes)
        return min(max(default, (cap * 3) // 4), 100 * 1024 * 1024)
    except Exception:
        return default


def _pick_batches_per_tile(batch, seq_len):
    # ~256 rows per grid step (per-step overhead ~0.35 us), but keep >= 2 grid
    # steps when possible so 'parallel' shards the two v7x TensorCores.
    target = max(1, 256 // max(seq_len, 1))
    bpt = max(1, min(target, max(batch // 2, 1)))
    while batch % bpt:
        bpt -= 1
    return max(bpt, 1)


def encoder_block(q, k, v, prepared, n_heads, *, batches_per_tile=None,
                  out_dtype=None):
    B, S, E = q.shape
    H = n_heads
    assert E % H == 0
    D = E // H
    FE = prepared["w1"].shape[1]
    compute_dtype = prepared["wq"].dtype
    out_dtype = q.dtype if out_dtype is None else out_dtype

    if batches_per_tile is None:
        batches_per_tile = _pick_batches_per_tile(B, S)
    assert B % batches_per_tile == 0
    BT = batches_per_tile
    R = BT * S

    # Wrapper-side layout plumbing (outside the kernel): head-major views so
    # the kernel never lane-slices heads, plus a token-major residual view.
    def to_heads(x):
        return x.reshape(B, S, H, D).transpose(2, 0, 1, 3)    # (H, B, S, D)

    qh, kh, vh = to_heads(q), to_heads(k), to_heads(v)
    qres = q.reshape(B * S, E)

    kernel = functools.partial(
        encoder_block_kernel, n_heads=H, head_dim=D, seq_len=S,
        batches_per_tile=BT, compute_dtype=compute_dtype)

    head_spec = pl.BlockSpec((H, BT, S, D), lambda i: (0, i, 0, 0))
    row_spec = pl.BlockSpec((R, E), lambda i: (i, 0))

    # Advisory scheduling hint: dominated by the FFN matmuls.
    flops = (3 * 2 * B * S * E * D             # q/k/v projections (shared W)
             + 2 * 2 * B * H * S * S * D       # scores + attn @ v
             + 2 * B * S * E * E               # fc (head merge fused)
             + 2 * 2 * B * S * E * FE)         # ffn
    transcendentals = B * H * S * S + B * H * S + 4 * B * S
    param_names = ["wq", "wk", "wv", "wfc", "bfc", "g1", "be1",
                   "w1", "b1", "w2", "b2", "g2", "be2"]
    param_bytes = sum(int(prepared[n].size) * prepared[n].dtype.itemsize
                      for n in param_names)
    act_bytes = (3 * qh.size * qh.dtype.itemsize
                 + qres.size * qres.dtype.itemsize
                 + B * S * E * jnp.dtype(out_dtype).itemsize)
    cost = pl.CostEstimate(flops=flops, transcendentals=transcendentals,
                           bytes_accessed=act_bytes + param_bytes)

    def run(single_buffer_weights):
        def wspec(shape):
            nd = len(shape)
            idx = lambda i, _nd=nd: (0,) * _nd
            if single_buffer_weights:
                # Constant-index weights gain nothing from double buffering.
                return pl.BlockSpec(shape, idx, pipeline_mode=pl.Buffered(1))
            return pl.BlockSpec(shape, idx)

        in_specs = [
            head_spec, head_spec, head_spec, row_spec,          # activations
            wspec((D, D)), wspec((D, D)), wspec((D, D)),        # wq, wk, wv
            wspec((H, D, E)), wspec((1, E)),                    # fc weight/bias
            wspec((1, E)), wspec((1, E)),                       # layernorm1
            wspec((E, FE)), wspec((1, FE)),                     # ffn linear1
            wspec((FE, E)), wspec((1, E)),                      # ffn linear2
            wspec((1, E)), wspec((1, E)),                       # layernorm2
        ]
        return pl.pallas_call(
            kernel,
            out_shape=jax.ShapeDtypeStruct((B * S, E), out_dtype),
            grid=(B // BT,),
            in_specs=in_specs,
            out_specs=row_spec,
            compiler_params=pltpu.CompilerParams(
                dimension_semantics=("parallel",),
                vmem_limit_bytes=_pick_vmem_limit_bytes()),
            cost_estimate=cost,
        )(qh, kh, vh, qres,
          prepared["wq"], prepared["wk"], prepared["wv"],
          prepared["wfc"], prepared["bfc"],
          prepared["g1"], prepared["be1"],
          prepared["w1"], prepared["b1"],
          prepared["w2"], prepared["b2"],
          prepared["g2"], prepared["be2"])

    try:
        out = run(single_buffer_weights=True)
    except Exception:
        # pl.Buffered(1) unsupported on this jax version -> default buffering.
        out = run(single_buffer_weights=False)
    return out.reshape(B, S, E)


def encoder_block_ref(q, k, v, params, n_heads):
    """Pure-JAX reference mirroring the PyTorch forward (mask ineffective, dropout=id)."""
    B, S, E = q.shape
    D = E // n_heads
    scale = jnp.float32(S) ** 0.5

    def split(x):
        return x.reshape(B, S, n_heads, D)

    qh = jnp.einsum("bshd,de->bshe", split(q), params["wq"])
    kh = jnp.einsum("bshd,de->bshe", split(k), params["wk"])
    vh = jnp.einsum("bshd,de->bshe", split(v), params["wv"])
    scores = jnp.einsum("bqhd,bkhd->bhqk", qh, kh) * scale
    attn = jax.nn.softmax(scores, axis=-1)
    out = jnp.einsum("bhqk,bkhd->bqhd", attn, vh).reshape(B, S, E)
    att = out @ params["wfc"] + params["bfc"]

    def ln(x, g, b):
        mu = jnp.mean(x, axis=-1, keepdims=True)
        var = jnp.mean((x - mu) ** 2, axis=-1, keepdims=True)
        return (x - mu) / jnp.sqrt(var + 1e-5) * g + b

    y1 = ln(att + q, params["g1"], params["be1"])
    ff = jnp.maximum(y1 @ params["w1"] + params["b1"], 0.0) @ params["w2"] + params["b2"]
    return ln(ff + y1, params["g2"], params["be2"])


if __name__ == "__main__":
    B, S, E = 2, 8, 32
    n_heads = 4
    forward_expansion = 4
    D = E // n_heads
    FE = forward_expansion * E

    key = jax.random.PRNGKey(0)
    ks = jax.random.split(key, 12)

    params = {
        # weights stored pre-transposed: y = x @ W
        "wq": 0.1 * jax.random.normal(ks[0], (D, D), jnp.float32),
        "wk": 0.1 * jax.random.normal(ks[1], (D, D), jnp.float32),
        "wv": 0.1 * jax.random.normal(ks[2], (D, D), jnp.float32),
        "wfc": 0.1 * jax.random.normal(ks[3], (E, E), jnp.float32),
        "bfc": 0.1 * jax.random.normal(ks[4], (1, E), jnp.float32),
        "g1": jnp.ones((1, E), jnp.float32),
        "be1": jnp.zeros((1, E), jnp.float32),
        "w1": 0.1 * jax.random.normal(ks[5], (E, FE), jnp.float32),
        "b1": 0.1 * jax.random.normal(ks[6], (1, FE), jnp.float32),
        "w2": 0.1 * jax.random.normal(ks[7], (FE, E), jnp.float32),
        "b2": 0.1 * jax.random.normal(ks[8], (1, E), jnp.float32),
        "g2": jnp.ones((1, E), jnp.float32),
        "be2": jnp.zeros((1, E), jnp.float32),
    }

    queries = jax.random.normal(ks[9], (B, S, E), jnp.float32)
    keys_ = jax.random.normal(ks[10], (B, S, E), jnp.float32)
    values = jax.random.normal(ks[11], (B, S, E), jnp.float32)

    ref = encoder_block_ref(queries, keys_, values, params, n_heads)

    # float32 MXU operands + f32 activations: tight numerical check.
    prep_f32 = prepare_encoder_params(params, n_heads, S, compute_dtype=jnp.float32)
    out_f32 = jax.block_until_ready(
        encoder_block(queries, keys_, values, prep_f32, n_heads))
    assert out_f32.shape == (B, S, E)
    assert jnp.allclose(out_f32, ref, rtol=3e-3, atol=3e-3), \
        "f32 kernel mismatch vs reference"

    # bf16 MXU operands + bf16 activation I/O (perf path on v5e/v6e/v7x);
    # softmax / layernorm stay f32 inside the kernel.
    prep_bf16 = prepare_encoder_params(params, n_heads, S, compute_dtype=jnp.bfloat16)
    out_bf16 = jax.block_until_ready(
        encoder_block(queries.astype(jnp.bfloat16),
                      keys_.astype(jnp.bfloat16),
                      values.astype(jnp.bfloat16),
                      prep_bf16, n_heads))
    assert out_bf16.dtype == jnp.bfloat16
    assert jnp.allclose(out_bf16.astype(jnp.float32), ref, rtol=1e-1, atol=1e-1), \
        "bf16 kernel mismatch vs reference"

    print("KERNEL_OK")
</pallas_src>

<mosaic_0001>
module attributes {stable_mosaic.version = 11 : i64} {
  func.func @encoder_block_kernel(%arg0: i32, %arg1: memref<4x1x8x8xf32, #tpu.memory_space<vmem>>, %arg2: memref<4x1x8x8xf32, #tpu.memory_space<vmem>>, %arg3: memref<4x1x8x8xf32, #tpu.memory_space<vmem>>, %arg4: memref<8x32xf32, #tpu.memory_space<vmem>>, %arg5: memref<8x8xf32, #tpu.memory_space<vmem>>, %arg6: memref<8x8xf32, #tpu.memory_space<vmem>>, %arg7: memref<8x8xf32, #tpu.memory_space<vmem>>, %arg8: memref<4x8x32xf32, #tpu.memory_space<vmem>>, %arg9: memref<1x32xf32, #tpu.memory_space<vmem>>, %arg10: memref<1x32xf32, #tpu.memory_space<vmem>>, %arg11: memref<1x32xf32, #tpu.memory_space<vmem>>, %arg12: memref<32x128xf32, #tpu.memory_space<vmem>>, %arg13: memref<1x128xf32, #tpu.memory_space<vmem>>, %arg14: memref<128x32xf32, #tpu.memory_space<vmem>>, %arg15: memref<1x32xf32, #tpu.memory_space<vmem>>, %arg16: memref<1x32xf32, #tpu.memory_space<vmem>>, %arg17: memref<1x32xf32, #tpu.memory_space<vmem>>, %arg18: memref<8x32xf32, #tpu.memory_space<vmem>>) attributes {dimension_semantics = [#tpu.dimension_semantics<parallel>], iteration_bounds = array<i64: 2>, scalar_prefetch = 0 : i64, scratch_operands = 0 : i64, tpu.core_type = #tpu.core_type<tc>, window_params = [{transform_indices = @transform_0, window_bounds = array<i64: 4, 1, 8, 8>}, {transform_indices = @transform_1, window_bounds = array<i64: 4, 1, 8, 8>}, {transform_indices = @transform_2, window_bounds = array<i64: 4, 1, 8, 8>}, {transform_indices = @transform_3, window_bounds = array<i64: 8, 32>}, {pipeline_mode = #tpu.pipeline_mode<synchronous>, transform_indices = @transform_4, window_bounds = array<i64: 8, 8>}, {pipeline_mode = #tpu.pipeline_mode<synchronous>, transform_indices = @transform_5, window_bounds = array<i64: 8, 8>}, {pipeline_mode = #tpu.pipeline_mode<synchronous>, transform_indices = @transform_6, window_bounds = array<i64: 8, 8>}, {pipeline_mode = #tpu.pipeline_mode<synchronous>, transform_indices = @transform_7, window_bounds = array<i64: 4, 8, 32>}, {pipeline_mode = #tpu.pipeline_mode<synchronous>, transform_indices = @transform_8, window_bounds = array<i64: 1, 32>}, {pipeline_mode = #tpu.pipeline_mode<synchronous>, transform_indices = @transform_9, window_bounds = array<i64: 1, 32>}, {pipeline_mode = #tpu.pipeline_mode<synchronous>, transform_indices = @transform_10, window_bounds = array<i64: 1, 32>}, {pipeline_mode = #tpu.pipeline_mode<synchronous>, transform_indices = @transform_11, window_bounds = array<i64: 32, 128>}, {pipeline_mode = #tpu.pipeline_mode<synchronous>, transform_indices = @transform_12, window_bounds = array<i64: 1, 128>}, {pipeline_mode = #tpu.pipeline_mode<synchronous>, transform_indices = @transform_13, window_bounds = array<i64: 128, 32>}, {pipeline_mode = #tpu.pipeline_mode<synchronous>, transform_indices = @transform_14, window_bounds = array<i64: 1, 32>}, {pipeline_mode = #tpu.pipeline_mode<synchronous>, transform_indices = @transform_15, window_bounds = array<i64: 1, 32>}, {pipeline_mode = #tpu.pipeline_mode<synchronous>, transform_indices = @transform_16, window_bounds = array<i64: 1, 32>}, {transform_indices = @transform_17, window_bounds = array<i64: 8, 32>}]} {
    %c0 = arith.constant 0 : index
    %c0_0 = arith.constant 0 : index
    %c0_1 = arith.constant 0 : index
    %c0_2 = arith.constant 0 : index
    %0 = vector.load %arg1[%c0, %c0_0, %c0_1, %c0_2] : memref<4x1x8x8xf32, #tpu.memory_space<vmem>>, vector<4x1x8x8xf32>
    %1 = vector.shape_cast %0 : vector<4x1x8x8xf32> to vector<32x8xf32>
    %c0_3 = arith.constant 0 : index
    %c0_4 = arith.constant 0 : index
    %2 = vector.load %arg5[%c0_3, %c0_4] : memref<8x8xf32, #tpu.memory_space<vmem>>, vector<8x8xf32>
    %cst = arith.constant dense<0.000000e+00> : vector<32x8xf32>
    %3 = tpu.matmul %1, %2, %cst {dimension_numbers = #tpu.dot_dimension_numbers<[1], [0], [0], [1], [0, 0, 1, 1], [], []>} : vector<32x8xf32>, vector<8x8xf32>, vector<32x8xf32> -> vector<32x8xf32>
    %4 = vector.shape_cast %3 : vector<32x8xf32> to vector<4x8x8xf32>
    %c0_5 = arith.constant 0 : index
    %c0_6 = arith.constant 0 : index
    %c0_7 = arith.constant 0 : index
    %c0_8 = arith.constant 0 : index
    %5 = vector.load %arg2[%c0_5, %c0_6, %c0_7, %c0_8] : memref<4x1x8x8xf32, #tpu.memory_space<vmem>>, vector<4x1x8x8xf32>
    %6 = vector.shape_cast %5 : vector<4x1x8x8xf32> to vector<32x8xf32>
    %c0_9 = arith.constant 0 : index
    %c0_10 = arith.constant 0 : index
    %7 = vector.load %arg6[%c0_9, %c0_10] : memref<8x8xf32, #tpu.memory_space<vmem>>, vector<8x8xf32>
    %cst_11 = arith.constant dense<0.000000e+00> : vector<32x8xf32>
    %8 = tpu.matmul %6, %7, %cst_11 {dimension_numbers = #tpu.dot_dimension_numbers<[1], [0], [0], [1], [0, 0, 1, 1], [], []>} : vector<32x8xf32>, vector<8x8xf32>, vector<32x8xf32> -> vector<32x8xf32>
    %9 = vector.shape_cast %8 : vector<32x8xf32> to vector<4x8x8xf32>
    %c0_12 = arith.constant 0 : index
    %c0_13 = arith.constant 0 : index
    %c0_14 = arith.constant 0 : index
    %c0_15 = arith.constant 0 : index
    %10 = vector.load %arg3[%c0_12, %c0_13, %c0_14, %c0_15] : memref<4x1x8x8xf32, #tpu.memory_space<vmem>>, vector<4x1x8x8xf32>
    %11 = vector.shape_cast %10 : vector<4x1x8x8xf32> to vector<32x8xf32>
    %c0_16 = arith.constant 0 : index
    %c0_17 = arith.constant 0 : index
    %12 = vector.load %arg7[%c0_16, %c0_17] : memref<8x8xf32, #tpu.memory_space<vmem>>, vector<8x8xf32>
    %cst_18 = arith.constant dense<0.000000e+00> : vector<32x8xf32>
    %13 = tpu.matmul %11, %12, %cst_18 {dimension_numbers = #tpu.dot_dimension_numbers<[1], [0], [0], [1], [0, 0, 1, 1], [], []>} : vector<32x8xf32>, vector<8x8xf32>, vector<32x8xf32> -> vector<32x8xf32>
    %14 = vector.shape_cast %13 : vector<32x8xf32> to vector<4x8x8xf32>
    "tpu.trace_start"() <{level = 10 : i32, message = "nqd,nkd->nqk"}> : () -> ()
    %cst_19 = arith.constant dense<0.000000e+00> : vector<4x8x8xf32>
    %15 = tpu.matmul %4, %9, %cst_19 {dimension_numbers = #tpu.dot_dimension_numbers<[2], [2], [1], [1], [0, 0, 0, 1, 1, 1], [0], [0]>} : vector<4x8x8xf32>, vector<4x8x8xf32>, vector<4x8x8xf32> -> vector<4x8x8xf32>
    "tpu.trace_stop"() : () -> ()
    %cst_20 = arith.constant dense<0xFF800000> : vector<4x8xf32>
    %16 = vector.multi_reduction <maximumf>, %15, %cst_20 [2] : vector<4x8x8xf32> to vector<4x8xf32>
    %17 = vector.shape_cast %16 : vector<4x8xf32> to vector<4x8x1xf32>
    %18 = vector.broadcast %17 : vector<4x8x1xf32> to vector<4x8x8xf32>
    %19 = arith.subf %15, %18 : vector<4x8x8xf32>
    %20 = math.exp %19 : vector<4x8x8xf32>
    %cst_21 = arith.constant dense<0.000000e+00> : vector<4x8xf32>
    %21 = vector.multi_reduction <add>, %20, %cst_21 [2] : vector<4x8x8xf32> to vector<4x8xf32>
    %22 = vector.shape_cast %21 : vector<4x8xf32> to vector<4x8x1xf32>
    %23 = tpu.reciprocal %22 {approx = true} : vector<4x8x1xf32> -> vector<4x8x1xf32>
    %24 = vector.broadcast %23 : vector<4x8x1xf32> to vector<4x8x8xf32>
    %25 = arith.mulf %20, %24 : vector<4x8x8xf32>
    "tpu.trace_start"() <{level = 10 : i32, message = "nqk,nkd->nqd"}> : () -> ()
    %cst_22 = arith.constant dense<0.000000e+00> : vector<4x8x8xf32>
    %26 = tpu.matmul %25, %14, %cst_22 {dimension_numbers = #tpu.dot_dimension_numbers<[2], [1], [1], [2], [0, 0, 0, 1, 1, 2], [0], [0]>} : vector<4x8x8xf32>, vector<4x8x8xf32>, vector<4x8x8xf32> -> vector<4x8x8xf32>
    "tpu.trace_stop"() : () -> ()
    %27 = vector.extract_strided_slice %26 {offsets = [0, 0, 0], sizes = [1, 8, 8], strides = [1, 1, 1]} : vector<4x8x8xf32> to vector<1x8x8xf32>
    %28 = vector.shape_cast %27 : vector<1x8x8xf32> to vector<8x8xf32>
    %c0_23 = arith.constant 0 : index
    %c0_24 = arith.constant 0 : index
    %c0_25 = arith.constant 0 : index
    %29 = vector.load %arg8[%c0_23, %c0_24, %c0_25] : memref<4x8x32xf32, #tpu.memory_space<vmem>>, vector<1x8x32xf32>
    %30 = vector.shape_cast %29 : vector<1x8x32xf32> to vector<8x32xf32>
    %cst_26 = arith.constant dense<0.000000e+00> : vector<8x32xf32>
    %31 = tpu.matmul %28, %30, %cst_26 {dimension_numbers = #tpu.dot_dimension_numbers<[1], [0], [0], [1], [0, 0, 1, 1], [], []>} : vector<8x8xf32>, vector<8x32xf32>, vector<8x32xf32> -> vector<8x32xf32>
    %32 = vector.extract_strided_slice %26 {offsets = [1, 0, 0], sizes = [1, 8, 8], strides = [1, 1, 1]} : vector<4x8x8xf32> to vector<1x8x8xf32>
    %33 = vector.shape_cast %32 : vector<1x8x8xf32> to vector<8x8xf32>
    %c1 = arith.constant 1 : index
    %c0_27 = arith.constant 0 : index
    %c0_28 = arith.constant 0 : index
    %34 = vector.load %arg8[%c1, %c0_27, %c0_28] : memref<4x8x32xf32, #tpu.memory_space<vmem>>, vector<1x8x32xf32>
    %35 = vector.shape_cast %34 : vector<1x8x32xf32> to vector<8x32xf32>
    %cst_29 = arith.constant dense<0.000000e+00> : vector<8x32xf32>
    %36 = tpu.matmul %33, %35, %cst_29 {dimension_numbers = #tpu.dot_dimension_numbers<[1], [0], [0], [1], [0, 0, 1, 1], [], []>} : vector<8x8xf32>, vector<8x32xf32>, vector<8x32xf32> -> vector<8x32xf32>
    %37 = arith.addf %31, %36 : vector<8x32xf32>
    %38 = vector.extract_strided_slice %26 {offsets = [2, 0, 0], sizes = [1, 8, 8], strides = [1, 1, 1]} : vector<4x8x8xf32> to vector<1x8x8xf32>
    %39 = vector.shape_cast %38 : vector<1x8x8xf32> to vector<8x8xf32>
    %c2 = arith.constant 2 : index
    %c0_30 = arith.constant 0 : index
    %c0_31 = arith.constant 0 : index
    %40 = vector.load %arg8[%c2, %c0_30, %c0_31] : memref<4x8x32xf32, #tpu.memory_space<vmem>>, vector<1x8x32xf32>
    %41 = vector.shape_cast %40 : vector<1x8x32xf32> to vector<8x32xf32>
    %cst_32 = arith.constant dense<0.000000e+00> : vector<8x32xf32>
    %42 = tpu.matmul %39, %41, %cst_32 {dimension_numbers = #tpu.dot_dimension_numbers<[1], [0], [0], [1], [0, 0, 1, 1], [], []>} : vector<8x8xf32>, vector<8x32xf32>, vector<8x32xf32> -> vector<8x32xf32>
    %43 = arith.addf %37, %42 : vector<8x32xf32>
    %44 = vector.extract_strided_slice %26 {offsets = [3, 0, 0], sizes = [1, 8, 8], strides = [1, 1, 1]} : vector<4x8x8xf32> to vector<1x8x8xf32>
    %45 = vector.shape_cast %44 : vector<1x8x8xf32> to vector<8x8xf32>
    %c3 = arith.constant 3 : index
    %c0_33 = arith.constant 0 : index
    %c0_34 = arith.constant 0 : index
    %46 = vector.load %arg8[%c3, %c0_33, %c0_34] : memref<4x8x32xf32, #tpu.memory_space<vmem>>, vector<1x8x32xf32>
    %47 = vector.shape_cast %46 : vector<1x8x32xf32> to vector<8x32xf32>
    %cst_35 = arith.constant dense<0.000000e+00> : vector<8x32xf32>
    %48 = tpu.matmul %45, %47, %cst_35 {dimension_numbers = #tpu.dot_dimension_numbers<[1], [0], [0], [1], [0, 0, 1, 1], [], []>} : vector<8x8xf32>, vector<8x32xf32>, vector<8x32xf32> -> vector<8x32xf32>
    %49 = arith.addf %43, %48 : vector<8x32xf32>
    %c0_36 = arith.constant 0 : index
    %c0_37 = arith.constant 0 : index
    %50 = vector.load %arg9[%c0_36, %c0_37] : memref<1x32xf32, #tpu.memory_space<vmem>>, vector<1x32xf32>
    %51 = vector.broadcast %50 : vector<1x32xf32> to vector<8x32xf32>
    %52 = arith.addf %49, %51 : vector<8x32xf32>
    %c0_38 = arith.constant 0 : index
    %c0_39 = arith.constant 0 : index
    %53 = vector.load %arg4[%c0_38, %c0_39] : memref<8x32xf32, #tpu.memory_space<vmem>>, vector<8x32xf32>
    %54 = arith.addf %52, %53 : vector<8x32xf32>
    %c0_40 = arith.constant 0 : index
    %c0_41 = arith.constant 0 : index
    %55 = vector.load %arg10[%c0_40, %c0_41] : memref<1x32xf32, #tpu.memory_space<vmem>>, vector<1x32xf32>
    %c0_42 = arith.constant 0 : index
    %c0_43 = arith.constant 0 : index
    %56 = vector.load %arg11[%c0_42, %c0_43] : memref<1x32xf32, #tpu.memory_space<vmem>>, vector<1x32xf32>
    %cst_44 = arith.constant dense<0.000000e+00> : vector<8xf32>
    %57 = vector.multi_reduction <add>, %54, %cst_44 [1] : vector<8x32xf32> to vector<8xf32>
    %58 = vector.shape_cast %57 : vector<8xf32> to vector<8x1xf32>
    %cst_45 = arith.constant 3.200000e+01 : f32
    %59 = vector.broadcast %cst_45 : f32 to vector<8x1xf32>
    %60 = arith.divf %58, %59 : vector<8x1xf32>
    %61 = vector.broadcast %60 : vector<8x1xf32> to vector<8x32xf32>
    %62 = arith.subf %54, %61 : vector<8x32xf32>
    %63 = arith.mulf %62, %62 : vector<8x32xf32>
    %cst_46 = arith.constant dense<0.000000e+00> : vector<8xf32>
    %64 = vector.multi_reduction <add>, %63, %cst_46 [1] : vector<8x32xf32> to vector<8xf32>
    %65 = vector.shape_cast %64 : vector<8xf32> to vector<8x1xf32>
    %cst_47 = arith.constant 3.200000e+01 : f32
    %66 = vector.broadcast %cst_47 : f32 to vector<8x1xf32>
    %67 = arith.divf %65, %66 : vector<8x1xf32>
    %68 = vector.broadcast %60 : vector<8x1xf32> to vector<8x32xf32>
    %69 = arith.subf %54, %68 : vector<8x32xf32>
    %cst_48 = arith.constant 9.99999974E-6 : f32
    %70 = vector.broadcast %cst_48 : f32 to vector<8x1xf32>
    %71 = arith.addf %67, %70 : vector<8x1xf32>
    %72 = math.rsqrt %71 : vector<8x1xf32>
    %73 = vector.broadcast %72 : vector<8x1xf32> to vector<8x32xf32>
    %74 = arith.mulf %69, %73 : vector<8x32xf32>
    %75 = vector.broadcast %55 : vector<1x32xf32> to vector<8x32xf32>
    %76 = arith.mulf %74, %75 : vector<8x32xf32>
    %77 = vector.broadcast %56 : vector<1x32xf32> to vector<8x32xf32>
    %78 = arith.addf %76, %77 : vector<8x32xf32>
    %c0_49 = arith.constant 0 : index
    %c0_50 = arith.constant 0 : index
    %79 = vector.load %arg12[%c0_49, %c0_50] : memref<32x128xf32, #tpu.memory_space<vmem>>, vector<32x128xf32>
    %cst_51 = arith.constant dense<0.000000e+00> : vector<8x128xf32>
    %80 = tpu.matmul %78, %79, %cst_51 {dimension_numbers = #tpu.dot_dimension_numbers<[1], [0], [0], [1], [0, 0, 1, 1], [], []>} : vector<8x32xf32>, vector<32x128xf32>, vector<8x128xf32> -> vector<8x128xf32>
    %c0_52 = arith.constant 0 : index
    %c0_53 = arith.constant 0 : index
    %81 = vector.load %arg13[%c0_52, %c0_53] : memref<1x128xf32, #tpu.memory_space<vmem>>, vector<1x128xf32>
    %82 = vector.broadcast %81 : vector<1x128xf32> to vector<8x128xf32>
    %83 = arith.addf %80, %82 : vector<8x128xf32>
    %cst_54 = arith.constant 0.000000e+00 : f32
    %84 = vector.broadcast %cst_54 : f32 to vector<8x128xf32>
    %85 = arith.maximumf %83, %84 : vector<8x128xf32>
    %c0_55 = arith.constant 0 : index
    %c0_56 = arith.constant 0 : index
    %86 = vector.load %arg14[%c0_55, %c0_56] : memref<128x32xf32, #tpu.memory_space<vmem>>, vector<128x32xf32>
    %cst_57 = arith.constant dense<0.000000e+00> : vector<8x32xf32>
    %87 = tpu.matmul %85, %86, %cst_57 {dimension_numbers = #tpu.dot_dimension_numbers<[1], [0], [0], [1], [0, 0, 1, 1], [], []>} : vector<8x128xf32>, vector<128x32xf32>, vector<8x32xf32> -> vector<8x32xf32>
    %c0_58 = arith.constant 0 : index
    %c0_59 = arith.constant 0 : index
    %88 = vector.load %arg15[%c0_58, %c0_59] : memref<1x32xf32, #tpu.memory_space<vmem>>, vector<1x32xf32>
    %89 = vector.broadcast %88 : vector<1x32xf32> to vector<8x32xf32>
    %90 = arith.addf %87, %89 : vector<8x32xf32>
    %91 = arith.addf %90, %78 : vector<8x32xf32>
    %c0_60 = arith.constant 0 : index
    %c0_61 = arith.constant 0 : index
    %92 = vector.load %arg16[%c0_60, %c0_61] : memref<1x32xf32, #tpu.memory_space<vmem>>, vector<1x32xf32>
    %c0_62 = arith.constant 0 : index
    %c0_63 = arith.constant 0 : index
    %93 = vector.load %arg17[%c0_62, %c0_63] : memref<1x32xf32, #tpu.memory_space<vmem>>, vector<1x32xf32>
    %cst_64 = arith.constant dense<0.000000e+00> : vector<8xf32>
    %94 = vector.multi_reduction <add>, %91, %cst_64 [1] : vector<8x32xf32> to vector<8xf32>
    %95 = vector.shape_cast %94 : vector<8xf32> to vector<8x1xf32>
    %cst_65 = arith.constant 3.200000e+01 : f32
    %96 = vector.broadcast %cst_65 : f32 to vector<8x1xf32>
    %97 = arith.divf %95, %96 : vector<8x1xf32>
    %98 = vector.broadcast %97 : vector<8x1xf32> to vector<8x32xf32>
    %99 = arith.subf %91, %98 : vector<8x32xf32>
    %100 = arith.mulf %99, %99 : vector<8x32xf32>
    %cst_66 = arith.constant dense<0.000000e+00> : vector<8xf32>
    %101 = vector.multi_reduction <add>, %100, %cst_66 [1] : vector<8x32xf32> to vector<8xf32>
    %102 = vector.shape_cast %101 : vector<8xf32> to vector<8x1xf32>
    %cst_67 = arith.constant 3.200000e+01 : f32
    %103 = vector.broadcast %cst_67 : f32 to vector<8x1xf32>
    %104 = arith.divf %102, %103 : vector<8x1xf32>
    %105 = vector.broadcast %97 : vector<8x1xf32> to vector<8x32xf32>
    %106 = arith.subf %91, %105 : vector<8x32xf32>
    %cst_68 = arith.constant 9.99999974E-6 : f32
    %107 = vector.broadcast %cst_68 : f32 to vector<8x1xf32>
    %108 = arith.addf %104, %107 : vector<8x1xf32>
    %109 = math.rsqrt %108 : vector<8x1xf32>
    %110 = vector.broadcast %109 : vector<8x1xf32> to vector<8x32xf32>
    %111 = arith.mulf %106, %110 : vector<8x32xf32>
    %112 = vector.broadcast %92 : vector<1x32xf32> to vector<8x32xf32>
    %113 = arith.mulf %111, %112 : vector<8x32xf32>
    %114 = vector.broadcast %93 : vector<1x32xf32> to vector<8x32xf32>
    %115 = arith.addf %113, %114 : vector<8x32xf32>
    %c0_69 = arith.constant 0 : index
    %c0_70 = arith.constant 0 : index
    %116 = vector.load %arg18[%c0_69, %c0_70] : memref<8x32xf32, #tpu.memory_space<vmem>>, vector<8x32xf32>
    tpu.vector_store %arg18[%c0_69, %c0_70], %115 {strides = array<i32>} : memref<8x32xf32, #tpu.memory_space<vmem>>, vector<8x32xf32>,
    return
  }
  func.func @transform_0(%arg0: i32) -> (i32, i32, i32, i32) {
    %c0_i32 = arith.constant 0 : i32
    %c0_i32_0 = arith.constant 0 : i32
    %c0_i32_1 = arith.constant 0 : i32
    %c0_i32_2 = arith.constant 0 : i32
    return %c0_i32, %arg0, %c0_i32_0, %c0_i32_1 : i32, i32, i32, i32
  }
  func.func @transform_1(%arg0: i32) -> (i32, i32, i32, i32) {
    %c0_i32 = arith.constant 0 : i32
    %c0_i32_0 = arith.constant 0 : i32
    %c0_i32_1 = arith.constant 0 : i32
    %c0_i32_2 = arith.constant 0 : i32
    return %c0_i32, %arg0, %c0_i32_0, %c0_i32_1 : i32, i32, i32, i32
  }
  func.func @transform_2(%arg0: i32) -> (i32, i32, i32, i32) {
    %c0_i32 = arith.constant 0 : i32
    %c0_i32_0 = arith.constant 0 : i32
    %c0_i32_1 = arith.constant 0 : i32
    %c0_i32_2 = arith.constant 0 : i32
    return %c0_i32, %arg0, %c0_i32_0, %c0_i32_1 : i32, i32, i32, i32
  }
  func.func @transform_3(%arg0: i32) -> (i32, i32) {
    %c0_i32 = arith.constant 0 : i32
    %c0_i32_0 = arith.constant 0 : i32
    return %arg0, %c0_i32 : i32, i32
  }
  func.func @transform_4(%arg0: i32) -> (i32, i32) {
    %c0_i32 = arith.constant 0 : i32
    %c0_i32_0 = arith.constant 0 : i32
    %c0_i32_1 = arith.constant 0 : i32
    return %c0_i32, %c0_i32_0 : i32, i32
  }
  func.func @transform_5(%arg0: i32) -> (i32, i32) {
    %c0_i32 = arith.constant 0 : i32
    %c0_i32_0 = arith.constant 0 : i32
    %c0_i32_1 = arith.constant 0 : i32
    return %c0_i32, %c0_i32_0 : i32, i32
  }
  func.func @transform_6(%arg0: i32) -> (i32, i32) {
    %c0_i32 = arith.constant 0 : i32
    %c0_i32_0 = arith.constant 0 : i32
    %c0_i32_1 = arith.constant 0 : i32
    return %c0_i32, %c0_i32_0 : i32, i32
  }
  func.func @transform_7(%arg0: i32) -> (i32, i32, i32) {
    %c0_i32 = arith.constant 0 : i32
    %c0_i32_0 = arith.constant 0 : i32
    %c0_i32_1 = arith.constant 0 : i32
    %c0_i32_2 = arith.constant 0 : i32
    return %c0_i32, %c0_i32_0, %c0_i32_1 : i32, i32, i32
  }
  func.func @transform_8(%arg0: i32) -> (i32, i32) {
    %c0_i32 = arith.constant 0 : i32
    %c0_i32_0 = arith.constant 0 : i32
    %c0_i32_1 = arith.constant 0 : i32
    return %c0_i32, %c0_i32_0 : i32, i32
  }
  func.func @transform_9(%arg0: i32) -> (i32, i32) {
    %c0_i32 = arith.constant 0 : i32
    %c0_i32_0 = arith.constant 0 : i32
    %c0_i32_1 = arith.constant 0 : i32
    return %c0_i32, %c0_i32_0 : i32, i32
  }
  func.func @transform_10(%arg0: i32) -> (i32, i32) {
    %c0_i32 = arith.constant 0 : i32
    %c0_i32_0 = arith.constant 0 : i32
    %c0_i32_1 = arith.constant 0 : i32
    return %c0_i32, %c0_i32_0 : i32, i32
  }
  func.func @transform_11(%arg0: i32) -> (i32, i32) {
    %c0_i32 = arith.constant 0 : i32
    %c0_i32_0 = arith.constant 0 : i32
    %c0_i32_1 = arith.constant 0 : i32
    return %c0_i32, %c0_i32_0 : i32, i32
  }
  func.func @transform_12(%arg0: i32) -> (i32, i32) {
    %c0_i32 = arith.constant 0 : i32
    %c0_i32_0 = arith.constant 0 : i32
    %c0_i32_1 = arith.constant 0 : i32
    return %c0_i32, %c0_i32_0 : i32, i32
  }
  func.func @transform_13(%arg0: i32) -> (i32, i32) {
    %c0_i32 = arith.constant 0 : i32
    %c0_i32_0 = arith.constant 0 : i32
    %c0_i32_1 = arith.constant 0 : i32
    return %c0_i32, %c0_i32_0 : i32, i32
  }
  func.func @transform_14(%arg0: i32) -> (i32, i32) {
    %c0_i32 = arith.constant 0 : i32
    %c0_i32_0 = arith.constant 0 : i32
    %c0_i32_1 = arith.constant 0 : i32
    return %c0_i32, %c0_i32_0 : i32, i32
  }
  func.func @transform_15(%arg0: i32) -> (i32, i32) {
    %c0_i32 = arith.constant 0 : i32
    %c0_i32_0 = arith.constant 0 : i32
    %c0_i32_1 = arith.constant 0 : i32
    return %c0_i32, %c0_i32_0 : i32, i32
  }
  func.func @transform_16(%arg0: i32) -> (i32, i32) {
    %c0_i32 = arith.constant 0 : i32
    %c0_i32_0 = arith.constant 0 : i32
    %c0_i32_1 = arith.constant 0 : i32
    return %c0_i32, %c0_i32_0 : i32, i32
  }
  func.func @transform_17(%arg0: i32) -> (i32, i32) {
    %c0_i32 = arith.constant 0 : i32
    %c0_i32_0 = arith.constant 0 : i32
    return %arg0, %c0_i32 : i32, i32
  }
}

module attributes {stable_mosaic.version = 11 : i64} {
  func.func @encoder_block_kernel(%arg0: i32, %arg1: memref<4x1x8x8xf32, #tpu.memory_space<vmem>>, %arg2: memref<4x1x8x8xf32, #tpu.memory_space<vmem>>, %arg3: memref<4x1x8x8xf32, #tpu.memory_space<vmem>>, %arg4: memref<8x32xf32, #tpu.memory_space<vmem>>, %arg5: memref<8x8xf32, #tpu.memory_space<vmem>>, %arg6: memref<8x8xf32, #tpu.memory_space<vmem>>, %arg7: memref<8x8xf32, #tpu.memory_space<vmem>>, %arg8: memref<4x8x32xf32, #tpu.memory_space<vmem>>, %arg9: memref<1x32xf32, #tpu.memory_space<vmem>>, %arg10: memref<1x32xf32, #tpu.memory_space<vmem>>, %arg11: memref<1x32xf32, #tpu.memory_space<vmem>>, %arg12: memref<32x128xf32, #tpu.memory_space<vmem>>, %arg13: memref<1x128xf32, #tpu.memory_space<vmem>>, %arg14: memref<128x32xf32, #tpu.memory_space<vmem>>, %arg15: memref<1x32xf32, #tpu.memory_space<vmem>>, %arg16: memref<1x32xf32, #tpu.memory_space<vmem>>, %arg17: memref<1x32xf32, #tpu.memory_space<vmem>>, %arg18: memref<8x32xf32, #tpu.memory_space<vmem>>) attributes {dimension_semantics = [#tpu.dimension_semantics<parallel>], iteration_bounds = array<i64: 2>, scalar_prefetch = 0 : i64, scratch_operands = 0 : i64, tpu.core_type = #tpu.core_type<tc>, window_params = [{transform_indices = @transform_0, window_bounds = array<i64: 4, 1, 8, 8>}, {transform_indices = @transform_1, window_bounds = array<i64: 4, 1, 8, 8>}, {transform_indices = @transform_2, window_bounds = array<i64: 4, 1, 8, 8>}, {transform_indices = @transform_3, window_bounds = array<i64: 8, 32>}, {pipeline_mode = #tpu.pipeline_mode<synchronous>, transform_indices = @transform_4, window_bounds = array<i64: 8, 8>}, {pipeline_mode = #tpu.pipeline_mode<synchronous>, transform_indices = @transform_5, window_bounds = array<i64: 8, 8>}, {pipeline_mode = #tpu.pipeline_mode<synchronous>, transform_indices = @transform_6, window_bounds = array<i64: 8, 8>}, {pipeline_mode = #tpu.pipeline_mode<synchronous>, transform_indices = @transform_7, window_bounds = array<i64: 4, 8, 32>}, {pipeline_mode = #tpu.pipeline_mode<synchronous>, transform_indices = @transform_8, window_bounds = array<i64: 1, 32>}, {pipeline_mode = #tpu.pipeline_mode<synchronous>, transform_indices = @transform_9, window_bounds = array<i64: 1, 32>}, {pipeline_mode = #tpu.pipeline_mode<synchronous>, transform_indices = @transform_10, window_bounds = array<i64: 1, 32>}, {pipeline_mode = #tpu.pipeline_mode<synchronous>, transform_indices = @transform_11, window_bounds = array<i64: 32, 128>}, {pipeline_mode = #tpu.pipeline_mode<synchronous>, transform_indices = @transform_12, window_bounds = array<i64: 1, 128>}, {pipeline_mode = #tpu.pipeline_mode<synchronous>, transform_indices = @transform_13, window_bounds = array<i64: 128, 32>}, {pipeline_mode = #tpu.pipeline_mode<synchronous>, transform_indices = @transform_14, window_bounds = array<i64: 1, 32>}, {pipeline_mode = #tpu.pipeline_mode<synchronous>, transform_indices = @transform_15, window_bounds = array<i64: 1, 32>}, {pipeline_mode = #tpu.pipeline_mode<synchronous>, transform_indices = @transform_16, window_bounds = array<i64: 1, 32>}, {transform_indices = @transform_17, window_bounds = array<i64: 8, 32>}]} {
    %c0 = arith.constant 0 : index
    %c0_0 = arith.constant 0 : index
    %c0_1 = arith.constant 0 : index
    %c0_2 = arith.constant 0 : index
    %0 = vector.load %arg1[%c0, %c0_0, %c0_1, %c0_2] : memref<4x1x8x8xf32, #tpu.memory_space<vmem>>, vector<4x1x8x8xf32>
    %1 = vector.shape_cast %0 : vector<4x1x8x8xf32> to vector<32x8xf32>
    %c0_3 = arith.constant 0 : index
    %c0_4 = arith.constant 0 : index
    %2 = vector.load %arg5[%c0_3, %c0_4] : memref<8x8xf32, #tpu.memory_space<vmem>>, vector<8x8xf32>
    %cst = arith.constant dense<0.000000e+00> : vector<32x8xf32>
    %3 = tpu.matmul %1, %2, %cst {dimension_numbers = #tpu.dot_dimension_numbers<[1], [0], [0], [1], [0, 0, 1, 1], [], []>} : vector<32x8xf32>, vector<8x8xf32>, vector<32x8xf32> -> vector<32x8xf32>
    %4 = vector.shape_cast %3 : vector<32x8xf32> to vector<4x8x8xf32>
    %c0_5 = arith.constant 0 : index
    %c0_6 = arith.constant 0 : index
    %c0_7 = arith.constant 0 : index
    %c0_8 = arith.constant 0 : index
    %5 = vector.load %arg2[%c0_5, %c0_6, %c0_7, %c0_8] : memref<4x1x8x8xf32, #tpu.memory_space<vmem>>, vector<4x1x8x8xf32>
    %6 = vector.shape_cast %5 : vector<4x1x8x8xf32> to vector<32x8xf32>
    %c0_9 = arith.constant 0 : index
    %c0_10 = arith.constant 0 : index
    %7 = vector.load %arg6[%c0_9, %c0_10] : memref<8x8xf32, #tpu.memory_space<vmem>>, vector<8x8xf32>
    %cst_11 = arith.constant dense<0.000000e+00> : vector<32x8xf32>
    %8 = tpu.matmul %6, %7, %cst_11 {dimension_numbers = #tpu.dot_dimension_numbers<[1], [0], [0], [1], [0, 0, 1, 1], [], []>} : vector<32x8xf32>, vector<8x8xf32>, vector<32x8xf32> -> vector<32x8xf32>
    %9 = vector.shape_cast %8 : vector<32x8xf32> to vector<4x8x8xf32>
    %c0_12 = arith.constant 0 : index
    %c0_13 = arith.constant 0 : index
    %c0_14 = arith.constant 0 : index
    %c0_15 = arith.constant 0 : index
    %10 = vector.load %arg3[%c0_12, %c0_13, %c0_14, %c0_15] : memref<4x1x8x8xf32, #tpu.memory_space<vmem>>, vector<4x1x8x8xf32>
    %11 = vector.shape_cast %10 : vector<4x1x8x8xf32> to vector<32x8xf32>
    %c0_16 = arith.constant 0 : index
    %c0_17 = arith.constant 0 : index
    %12 = vector.load %arg7[%c0_16, %c0_17] : memref<8x8xf32, #tpu.memory_space<vmem>>, vector<8x8xf32>
    %cst_18 = arith.constant dense<0.000000e+00> : vector<32x8xf32>
    %13 = tpu.matmul %11, %12, %cst_18 {dimension_numbers = #tpu.dot_dimension_numbers<[1], [0], [0], [1], [0, 0, 1, 1], [], []>} : vector<32x8xf32>, vector<8x8xf32>, vector<32x8xf32> -> vector<32x8xf32>
    %14 = vector.shape_cast %13 : vector<32x8xf32> to vector<4x8x8xf32>
    "tpu.trace_start"() <{level = 10 : i32, message = "nqd,nkd->nqk"}> : () -> ()
    %cst_19 = arith.constant dense<0.000000e+00> : vector<4x8x8xf32>
    %15 = tpu.matmul %4, %9, %cst_19 {dimension_numbers = #tpu.dot_dimension_numbers<[2], [2], [1], [1], [0, 0, 0, 1, 1, 1], [0], [0]>} : vector<4x8x8xf32>, vector<4x8x8xf32>, vector<4x8x8xf32> -> vector<4x8x8xf32>
    "tpu.trace_stop"() : () -> ()
    %cst_20 = arith.constant dense<0xFF800000> : vector<4x8xf32>
    %16 = vector.multi_reduction <maximumf>, %15, %cst_20 [2] : vector<4x8x8xf32> to vector<4x8xf32>
    %17 = vector.shape_cast %16 : vector<4x8xf32> to vector<4x8x1xf32>
    %18 = vector.broadcast %17 : vector<4x8x1xf32> to vector<4x8x8xf32>
    %19 = arith.subf %15, %18 : vector<4x8x8xf32>
    %20 = math.exp %19 : vector<4x8x8xf32>
    %cst_21 = arith.constant dense<0.000000e+00> : vector<4x8xf32>
    %21 = vector.multi_reduction <add>, %20, %cst_21 [2] : vector<4x8x8xf32> to vector<4x8xf32>
    %22 = vector.shape_cast %21 : vector<4x8xf32> to vector<4x8x1xf32>
    %23 = tpu.reciprocal %22 {approx = true} : vector<4x8x1xf32> -> vector<4x8x1xf32>
    %24 = vector.broadcast %23 : vector<4x8x1xf32> to vector<4x8x8xf32>
    %25 = arith.mulf %20, %24 : vector<4x8x8xf32>
    "tpu.trace_start"() <{level = 10 : i32, message = "nqk,nkd->nqd"}> : () -> ()
    %cst_22 = arith.constant dense<0.000000e+00> : vector<4x8x8xf32>
    %26 = tpu.matmul %25, %14, %cst_22 {dimension_numbers = #tpu.dot_dimension_numbers<[2], [1], [1], [2], [0, 0, 0, 1, 1, 2], [0], [0]>} : vector<4x8x8xf32>, vector<4x8x8xf32>, vector<4x8x8xf32> -> vector<4x8x8xf32>
    "tpu.trace_stop"() : () -> ()
    %27 = vector.extract_strided_slice %26 {offsets = [0, 0, 0], sizes = [1, 8, 8], strides = [1, 1, 1]} : vector<4x8x8xf32> to vector<1x8x8xf32>
    %28 = vector.shape_cast %27 : vector<1x8x8xf32> to vector<8x8xf32>
    %c0_23 = arith.constant 0 : index
    %c0_24 = arith.constant 0 : index
    %c0_25 = arith.constant 0 : index
    %29 = vector.load %arg8[%c0_23, %c0_24, %c0_25] : memref<4x8x32xf32, #tpu.memory_space<vmem>>, vector<1x8x32xf32>
    %30 = vector.shape_cast %29 : vector<1x8x32xf32> to vector<8x32xf32>
    %cst_26 = arith.constant dense<0.000000e+00> : vector<8x32xf32>
    %31 = tpu.matmul %28, %30, %cst_26 {dimension_numbers = #tpu.dot_dimension_numbers<[1], [0], [0], [1], [0, 0, 1, 1], [], []>} : vector<8x8xf32>, vector<8x32xf32>, vector<8x32xf32> -> vector<8x32xf32>
    %32 = vector.extract_strided_slice %26 {offsets = [1, 0, 0], sizes = [1, 8, 8], strides = [1, 1, 1]} : vector<4x8x8xf32> to vector<1x8x8xf32>
    %33 = vector.shape_cast %32 : vector<1x8x8xf32> to vector<8x8xf32>
    %c1 = arith.constant 1 : index
    %c0_27 = arith.constant 0 : index
    %c0_28 = arith.constant 0 : index
    %34 = vector.load %arg8[%c1, %c0_27, %c0_28] : memref<4x8x32xf32, #tpu.memory_space<vmem>>, vector<1x8x32xf32>
    %35 = vector.shape_cast %34 : vector<1x8x32xf32> to vector<8x32xf32>
    %cst_29 = arith.constant dense<0.000000e+00> : vector<8x32xf32>
    %36 = tpu.matmul %33, %35, %cst_29 {dimension_numbers = #tpu.dot_dimension_numbers<[1], [0], [0], [1], [0, 0, 1, 1], [], []>} : vector<8x8xf32>, vector<8x32xf32>, vector<8x32xf32> -> vector<8x32xf32>
    %37 = arith.addf %31, %36 : vector<8x32xf32>
    %38 = vector.extract_strided_slice %26 {offsets = [2, 0, 0], sizes = [1, 8, 8], strides = [1, 1, 1]} : vector<4x8x8xf32> to vector<1x8x8xf32>
    %39 = vector.shape_cast %38 : vector<1x8x8xf32> to vector<8x8xf32>
    %c2 = arith.constant 2 : index
    %c0_30 = arith.constant 0 : index
    %c0_31 = arith.constant 0 : index
    %40 = vector.load %arg8[%c2, %c0_30, %c0_31] : memref<4x8x32xf32, #tpu.memory_space<vmem>>, vector<1x8x32xf32>
    %41 = vector.shape_cast %40 : vector<1x8x32xf32> to vector<8x32xf32>
    %cst_32 = arith.constant dense<0.000000e+00> : vector<8x32xf32>
    %42 = tpu.matmul %39, %41, %cst_32 {dimension_numbers = #tpu.dot_dimension_numbers<[1], [0], [0], [1], [0, 0, 1, 1], [], []>} : vector<8x8xf32>, vector<8x32xf32>, vector<8x32xf32> -> vector<8x32xf32>
    %43 = arith.addf %37, %42 : vector<8x32xf32>
    %44 = vector.extract_strided_slice %26 {offsets = [3, 0, 0], sizes = [1, 8, 8], strides = [1, 1, 1]} : vector<4x8x8xf32> to vector<1x8x8xf32>
    %45 = vector.shape_cast %44 : vector<1x8x8xf32> to vector<8x8xf32>
    %c3 = arith.constant 3 : index
    %c0_33 = arith.constant 0 : index
    %c0_34 = arith.constant 0 : index
    %46 = vector.load %arg8[%c3, %c0_33, %c0_34] : memref<4x8x32xf32, #tpu.memory_space<vmem>>, vector<1x8x32xf32>
    %47 = vector.shape_cast %46 : vector<1x8x32xf32> to vector<8x32xf32>
    %cst_35 = arith.constant dense<0.000000e+00> : vector<8x32xf32>
    %48 = tpu.matmul %45, %47, %cst_35 {dimension_numbers = #tpu.dot_dimension_numbers<[1], [0], [0], [1], [0, 0, 1, 1], [], []>} : vector<8x8xf32>, vector<8x32xf32>, vector<8x32xf32> -> vector<8x32xf32>
    %49 = arith.addf %43, %48 : vector<8x32xf32>
    %c0_36 = arith.constant 0 : index
    %c0_37 = arith.constant 0 : index
    %50 = vector.load %arg9[%c0_36, %c0_37] : memref<1x32xf32, #tpu.memory_space<vmem>>, vector<1x32xf32>
    %51 = vector.broadcast %50 : vector<1x32xf32> to vector<8x32xf32>
    %52 = arith.addf %49, %51 : vector<8x32xf32>
    %c0_38 = arith.constant 0 : index
    %c0_39 = arith.constant 0 : index
    %53 = vector.load %arg4[%c0_38, %c0_39] : memref<8x32xf32, #tpu.memory_space<vmem>>, vector<8x32xf32>
    %54 = arith.addf %52, %53 : vector<8x32xf32>
    %c0_40 = arith.constant 0 : index
    %c0_41 = arith.constant 0 : index
    %55 = vector.load %arg10[%c0_40, %c0_41] : memref<1x32xf32, #tpu.memory_space<vmem>>, vector<1x32xf32>
    %c0_42 = arith.constant 0 : index
    %c0_43 = arith.constant 0 : index
    %56 = vector.load %arg11[%c0_42, %c0_43] : memref<1x32xf32, #tpu.memory_space<vmem>>, vector<1x32xf32>
    %cst_44 = arith.constant dense<0.000000e+00> : vector<8xf32>
    %57 = vector.multi_reduction <add>, %54, %cst_44 [1] : vector<8x32xf32> to vector<8xf32>
    %58 = vector.shape_cast %57 : vector<8xf32> to vector<8x1xf32>
    %cst_45 = arith.constant 3.200000e+01 : f32
    %59 = vector.broadcast %cst_45 : f32 to vector<8x1xf32>
    %60 = arith.divf %58, %59 : vector<8x1xf32>
    %61 = vector.broadcast %60 : vector<8x1xf32> to vector<8x32xf32>
    %62 = arith.subf %54, %61 : vector<8x32xf32>
    %63 = arith.mulf %62, %62 : vector<8x32xf32>
    %cst_46 = arith.constant dense<0.000000e+00> : vector<8xf32>
    %64 = vector.multi_reduction <add>, %63, %cst_46 [1] : vector<8x32xf32> to vector<8xf32>
    %65 = vector.shape_cast %64 : vector<8xf32> to vector<8x1xf32>
    %cst_47 = arith.constant 3.200000e+01 : f32
    %66 = vector.broadcast %cst_47 : f32 to vector<8x1xf32>
    %67 = arith.divf %65, %66 : vector<8x1xf32>
    %68 = vector.broadcast %60 : vector<8x1xf32> to vector<8x32xf32>
    %69 = arith.subf %54, %68 : vector<8x32xf32>
    %cst_48 = arith.constant 9.99999974E-6 : f32
    %70 = vector.broadcast %cst_48 : f32 to vector<8x1xf32>
    %71 = arith.addf %67, %70 : vector<8x1xf32>
    %72 = math.rsqrt %71 : vector<8x1xf32>
    %73 = vector.broadcast %72 : vector<8x1xf32> to vector<8x32xf32>
    %74 = arith.mulf %69, %73 : vector<8x32xf32>
    %75 = vector.broadcast %55 : vector<1x32xf32> to vector<8x32xf32>
    %76 = arith.mulf %74, %75 : vector<8x32xf32>
    %77 = vector.broadcast %56 : vector<1x32xf32> to vector<8x32xf32>
    %78 = arith.addf %76, %77 : vector<8x32xf32>
    %c0_49 = arith.constant 0 : index
    %c0_50 = arith.constant 0 : index
    %79 = vector.load %arg12[%c0_49, %c0_50] : memref<32x128xf32, #tpu.memory_space<vmem>>, vector<32x128xf32>
    %cst_51 = arith.constant dense<0.000000e+00> : vector<8x128xf32>
    %80 = tpu.matmul %78, %79, %cst_51 {dimension_numbers = #tpu.dot_dimension_numbers<[1], [0], [0], [1], [0, 0, 1, 1], [], []>} : vector<8x32xf32>, vector<32x128xf32>, vector<8x128xf32> -> vector<8x128xf32>
    %c0_52 = arith.constant 0 : index
    %c0_53 = arith.constant 0 : index
    %81 = vector.load %arg13[%c0_52, %c0_53] : memref<1x128xf32, #tpu.memory_space<vmem>>, vector<1x128xf32>
    %82 = vector.broadcast %81 : vector<1x128xf32> to vector<8x128xf32>
    %83 = arith.addf %80, %82 : vector<8x128xf32>
    %cst_54 = arith.constant 0.000000e+00 : f32
    %84 = vector.broadcast %cst_54 : f32 to vector<8x128xf32>
    %85 = arith.maximumf %83, %84 : vector<8x128xf32>
    %c0_55 = arith.constant 0 : index
    %c0_56 = arith.constant 0 : index
    %86 = vector.load %arg14[%c0_55, %c0_56] : memref<128x32xf32, #tpu.memory_space<vmem>>, vector<128x32xf32>
    %cst_57 = arith.constant dense<0.000000e+00> : vector<8x32xf32>
    %87 = tpu.matmul %85, %86, %cst_57 {dimension_numbers = #tpu.dot_dimension_numbers<[1], [0], [0], [1], [0, 0, 1, 1], [], []>} : vector<8x128xf32>, vector<128x32xf32>, vector<8x32xf32> -> vector<8x32xf32>
    %c0_58 = arith.constant 0 : index
    %c0_59 = arith.constant 0 : index
    %88 = vector.load %arg15[%c0_58, %c0_59] : memref<1x32xf32, #tpu.memory_space<vmem>>, vector<1x32xf32>
    %89 = vector.broadcast %88 : vector<1x32xf32> to vector<8x32xf32>
    %90 = arith.addf %87, %89 : vector<8x32xf32>
    %91 = arith.addf %90, %78 : vector<8x32xf32>
    %c0_60 = arith.constant 0 : index
    %c0_61 = arith.constant 0 : index
    %92 = vector.load %arg16[%c0_60, %c0_61] : memref<1x32xf32, #tpu.memory_space<vmem>>, vector<1x32xf32>
    %c0_62 = arith.constant 0 : index
    %c0_63 = arith.constant 0 : index
    %93 = vector.load %arg17[%c0_62, %c0_63] : memref<1x32xf32, #tpu.memory_space<vmem>>, vector<1x32xf32>
    %cst_64 = arith.constant dense<0.000000e+00> : vector<8xf32>
    %94 = vector.multi_reduction <add>, %91, %cst_64 [1] : vector<8x32xf32> to vector<8xf32>
    %95 = vector.shape_cast %94 : vector<8xf32> to vector<8x1xf32>
    %cst_65 = arith.constant 3.200000e+01 : f32
    %96 = vector.broadcast %cst_65 : f32 to vector<8x1xf32>
    %97 = arith.divf %95, %96 : vector<8x1xf32>
    %98 = vector.broadcast %97 : vector<8x1xf32> to vector<8x32xf32>
    %99 = arith.subf %91, %98 : vector<8x32xf32>
    %100 = arith.mulf %99, %99 : vector<8x32xf32>
    %cst_66 = arith.constant dense<0.000000e+00> : vector<8xf32>
    %101 = vector.multi_reduction <add>, %100, %cst_66 [1] : vector<8x32xf32> to vector<8xf32>
    %102 = vector.shape_cast %101 : vector<8xf32> to vector<8x1xf32>
    %cst_67 = arith.constant 3.200000e+01 : f32
    %103 = vector.broadcast %cst_67 : f32 to vector<8x1xf32>
    %104 = arith.divf %102, %103 : vector<8x1xf32>
    %105 = vector.broadcast %97 : vector<8x1xf32> to vector<8x32xf32>
    %106 = arith.subf %91, %105 : vector<8x32xf32>
    %cst_68 = arith.constant 9.99999974E-6 : f32
    %107 = vector.broadcast %cst_68 : f32 to vector<8x1xf32>
    %108 = arith.addf %104, %107 : vector<8x1xf32>
    %109 = math.rsqrt %108 : vector<8x1xf32>
    %110 = vector.broadcast %109 : vector<8x1xf32> to vector<8x32xf32>
    %111 = arith.mulf %106, %110 : vector<8x32xf32>
    %112 = vector.broadcast %92 : vector<1x32xf32> to vector<8x32xf32>
    %113 = arith.mulf %111, %112 : vector<8x32xf32>
    %114 = vector.broadcast %93 : vector<1x32xf32> to vector<8x32xf32>
    %115 = arith.addf %113, %114 : vector<8x32xf32>
    %c0_69 = arith.constant 0 : index
    %c0_70 = arith.constant 0 : index
    %116 = vector.load %arg18[%c0_69, %c0_70] : memref<8x32xf32, #tpu.memory_space<vmem>>, vector<8x32xf32>
    tpu.vector_store %arg18[%c0_69, %c0_70], %115 {strides = array<i32>} : memref<8x32xf32, #tpu.memory_space<vmem>>, vector<8x32xf32>,
    return
  }
  func.func @transform_0(%arg0: i32) -> (i32, i32, i32, i32) {
    %c0_i32 = arith.constant 0 : i32
    %c0_i32_0 = arith.constant 0 : i32
    %c0_i32_1 = arith.constant 0 : i32
    %c0_i32_2 = arith.constant 0 : i32
    return %c0_i32, %arg0, %c0_i32_0, %c0_i32_1 : i32, i32, i32, i32
  }
  func.func @transform_1(%arg0: i32) -> (i32, i32, i32, i32) {
    %c0_i32 = arith.constant 0 : i32
    %c0_i32_0 = arith.constant 0 : i32
    %c0_i32_1 = arith.constant 0 : i32
    %c0_i32_2 = arith.constant 0 : i32
    return %c0_i32, %arg0, %c0_i32_0, %c0_i32_1 : i32, i32, i32, i32
  }
  func.func @transform_2(%arg0: i32) -> (i32, i32, i32, i32) {
    %c0_i32 = arith.constant 0 : i32
    %c0_i32_0 = arith.constant 0 : i32
    %c0_i32_1 = arith.constant 0 : i32
    %c0_i32_2 = arith.constant 0 : i32
    return %c0_i32, %arg0, %c0_i32_0, %c0_i32_1 : i32, i32, i32, i32
  }
  func.func @transform_3(%arg0: i32) -> (i32, i32) {
    %c0_i32 = arith.constant 0 : i32
    %c0_i32_0 = arith.constant 0 : i32
    return %arg0, %c0_i32 : i32, i32
  }
  func.func @transform_4(%arg0: i32) -> (i32, i32) {
    %c0_i32 = arith.constant 0 : i32
    %c0_i32_0 = arith.constant 0 : i32
    %c0_i32_1 = arith.constant 0 : i32
    return %c0_i32, %c0_i32_0 : i32, i32
  }
  func.func @transform_5(%arg0: i32) -> (i32, i32) {
    %c0_i32 = arith.constant 0 : i32
    %c0_i32_0 = arith.constant 0 : i32
    %c0_i32_1 = arith.constant 0 : i32
    return %c0_i32, %c0_i32_0 : i32, i32
  }
  func.func @transform_6(%arg0: i32) -> (i32, i32) {
    %c0_i32 = arith.constant 0 : i32
    %c0_i32_0 = arith.constant 0 : i32
    %c0_i32_1 = arith.constant 0 : i32
    return %c0_i32, %c0_i32_0 : i32, i32
  }
  func.func @transform_7(%arg0: i32) -> (i32, i32, i32) {
    %c0_i32 = arith.constant 0 : i32
    %c0_i32_0 = arith.constant 0 : i32
    %c0_i32_1 = arith.constant 0 : i32
    %c0_i32_2 = arith.constant 0 : i32
    return %c0_i32, %c0_i32_0, %c0_i32_1 : i32, i32, i32
  }
  func.func @transform_8(%arg0: i32) -> (i32, i32) {
    %c0_i32 = arith.constant 0 : i32
    %c0_i32_0 = arith.constant 0 : i32
    %c0_i32_1 = arith.constant 0 : i32
    return %c0_i32, %c0_i32_0 : i32, i32
  }
  func.func @transform_9(%arg0: i32) -> (i32, i32) {
    %c0_i32 = arith.constant 0 : i32
    %c0_i32_0 = arith.constant 0 : i32
    %c0_i32_1 = arith.constant 0 : i32
    return %c0_i32, %c0_i32_0 : i32, i32
  }
  func.func @transform_10(%arg0: i32) -> (i32, i32) {
    %c0_i32 = arith.constant 0 : i32
    %c0_i32_0 = arith.constant 0 : i32
    %c0_i32_1 = arith.constant 0 : i32
    return %c0_i32, %c0_i32_0 : i32, i32
  }
  func.func @transform_11(%arg0: i32) -> (i32, i32) {
    %c0_i32 = arith.constant 0 : i32
    %c0_i32_0 = arith.constant 0 : i32
    %c0_i32_1 = arith.constant 0 : i32
    return %c0_i32, %c0_i32_0 : i32, i32
  }
  func.func @transform_12(%arg0: i32) -> (i32, i32) {
    %c0_i32 = arith.constant 0 : i32
    %c0_i32_0 = arith.constant 0 : i32
    %c0_i32_1 = arith.constant 0 : i32
    return %c0_i32, %c0_i32_0 : i32, i32
  }
  func.func @transform_13(%arg0: i32) -> (i32, i32) {
    %c0_i32 = arith.constant 0 : i32
    %c0_i32_0 = arith.constant 0 : i32
    %c0_i32_1 = arith.constant 0 : i32
    return %c0_i32, %c0_i32_0 : i32, i32
  }
  func.func @transform_14(%arg0: i32) -> (i32, i32) {
    %c0_i32 = arith.constant 0 : i32
    %c0_i32_0 = arith.constant 0 : i32
    %c0_i32_1 = arith.constant 0 : i32
    return %c0_i32, %c0_i32_0 : i32, i32
  }
  func.func @transform_15(%arg0: i32) -> (i32, i32) {
    %c0_i32 = arith.constant 0 : i32
    %c0_i32_0 = arith.constant 0 : i32
    %c0_i32_1 = arith.constant 0 : i32
    return %c0_i32, %c0_i32_0 : i32, i32
  }
  func.func @transform_16(%arg0: i32) -> (i32, i32) {
    %c0_i32 = arith.constant 0 : i32
    %c0_i32_0 = arith.constant 0 : i32
    %c0_i32_1 = arith.constant 0 : i32
    return %c0_i32, %c0_i32_0 : i32, i32
  }
  func.func @transform_17(%arg0: i32) -> (i32, i32) {
    %c0_i32 = arith.constant 0 : i32
    %c0_i32_0 = arith.constant 0 : i32
    return %arg0, %c0_i32 : i32, i32
  }
}

</mosaic_0001>

<llo_original>
// kernel: tpu_custom_call.1
$region0: #{tpu_custom_call.1}
  #allocation0 [shape = 'u32[]', space=smem, size = 0x4, offset = 0x4, fixed_abs, tag = 'smem constant byte address 0x4 - core index']
  #allocation1 [shape = 'u32[144,128]{1,0:T(1,128)}', space=vmem, size = 0x12000, scoped, tag = 'internal scratch']
  %s0 = inlined_call_operand.vmem [shape: f32[4,2,8,8], index: 0, kind: input, shape index: {}]
  %s1 = inlined_call_operand.vmem [shape: f32[4,2,8,8], index: 1, kind: input, shape index: {}]
  %s2 = inlined_call_operand.hbm [shape: f32[4,2,8,8], index: 2, kind: input, shape index: {}]
  %s3 = inlined_call_operand.hbm [shape: f32[16,32], index: 3, kind: input, shape index: {}]
  %s4 = inlined_call_operand.vmem [shape: f32[8,8], index: 4, kind: input, shape index: {}]
  %s5 = inlined_call_operand.vmem [shape: f32[8,8], index: 5, kind: input, shape index: {}]
  %s6 = inlined_call_operand.hbm [shape: f32[8,8], index: 6, kind: input, shape index: {}]
  %s7 = inlined_call_operand.vmem [shape: f32[4,8,32], index: 7, kind: input, shape index: {}]
  %s8 = inlined_call_operand.vmem [shape: f32[1,32], index: 8, kind: input, shape index: {}]
  %s9 = inlined_call_operand.hbm [shape: f32[1,32], index: 9, kind: input, shape index: {}]
  %s10 = inlined_call_operand.hbm [shape: f32[1,32], index: 10, kind: input, shape index: {}]
  %s11 = inlined_call_operand.hbm [shape: f32[32,128], index: 11, kind: input, shape index: {}]
  %s12 = inlined_call_operand.hbm [shape: f32[1,128], index: 12, kind: input, shape index: {}]
  %s13 = inlined_call_operand.vmem [shape: f32[128,32], index: 13, kind: input, shape index: {}]
  %s14 = inlined_call_operand.vmem [shape: f32[1,32], index: 14, kind: input, shape index: {}]
  %s15 = inlined_call_operand.vmem [shape: f32[1,32], index: 15, kind: input, shape index: {}]
  %s16 = inlined_call_operand.vmem [shape: f32[1,32], index: 16, kind: input, shape index: {}]
  %s17 = inlined_call_operand.hbm [shape: f32[16,32], index: 17, kind: output, shape index: {}]
  %s18 = sld [smem:[#allocation0]]
  $region205: #{tpu_custom_call.1} parent=0
    _
  %s20 = ssub.s32 1, %s18
  %s21 = scalar_select 0, %s20, %s18
  $region1: #{tpu_custom_call.1} parent=0
    #allocation2 [shape = 'u8[32768]{0}', space=vmem, size = 0x8000, scoped, tag = 'input window, operand 0']
    #allocation3 [shape = 'u8[32768]{0}', space=vmem, size = 0x8000, scoped, tag = 'input window, operand 1']
    #allocation4 [shape = 'u8[32768]{0}', space=vmem, size = 0x8000, scoped, tag = 'input window, operand 2']
    #allocation5 [shape = 's32[2]{0}', space=sflag, size = 0x8, scoped, tag = 'scoped memory for tpu_custom_call.1']
    #allocation6 [shape = 's32[2]{0}', space=sflag, size = 0x8, scoped, tag = 'scoped memory for tpu_custom_call.1']
    #allocation7 [shape = 'u8[8192]{0}', space=vmem, size = 0x2000, scoped, tag = 'input window, operand 3']
    #allocation8 [shape = 's32[2]{0}', space=sflag, size = 0x8, scoped, tag = 'scoped memory for tpu_custom_call.1']
    #allocation9 [shape = 'u8[4096]{0}', space=vmem, size = 0x1000, scoped, tag = 'input window, operand 6, single buffered']
    #allocation10 [shape = 'u8[512]{0}', space=vmem, size = 0x400, scoped, tag = 'input window, operand 9, single buffered']
    #allocation11 [shape = 's32[1]{0}', space=sflag, size = 0x4, scoped, tag = 'scoped memory for tpu_custom_call.1']
    #allocation12 [shape = 'u8[512]{0}', space=vmem, size = 0x400, scoped, tag = 'input window, operand 10, single buffered']
    #allocation13 [shape = 'u8[16384]{0}', space=vmem, size = 0x4000, scoped, tag = 'input window, operand 11, single buffered']
    #allocation14 [shape = 's32[1]{0}', space=sflag, size = 0x4, scoped, tag = 'scoped memory for tpu_custom_call.1']
    #allocation15 [shape = 'u8[512]{0}', space=vmem, size = 0x400, scoped, tag = 'input window, operand 12, single buffered']
    #allocation16 [shape = 'u8[8192]{0}', space=vmem, size = 0x2000, scoped, tag = 'output window, operand 0']
    %22 = vsyncpa [#allocation5], 0
    %s23 = scalar_lea.sflag [#allocation5], 1
    %24 = vsyncpa %s23, 0
    %25 = vsyncpa [#allocation8], 0
    %s26 = scalar_lea.sflag [#allocation8], 1
    %27 = vsyncpa %s26, 0
    %28 = vsyncpa [#allocation11], 0
    %29 = vsyncpa [#allocation14], 0
    %30 = vsyncpa [#allocation6], 0
    %s31 = scalar_lea.sflag [#allocation6], 1
    %32 = vsyncpa %s31, 0
    loop: start=0, step=1, limit=4
    $region2: #{tpu_custom_call.1} parent=1 // loop_pre_header
      _
    $region3: #{tpu_custom_call.1} parent=1 // loop_header
      %s34 = sphi 0, %s38
      %p35 = scmp.ge.s32.totalorder %s34, 4
      %s44 = sphi 0, %s46
      %s47 = sphi 0, %s44
      %s48 = sphi 0, %s47
      %s64 = sphi 0, %s48
      %s70 = sphi 0, %s72
      %s73 = sphi 0, %s70
      %s74 = sphi 0, %s73
      %s90 = sphi 0, %s74
      %s96 = sphi 0, %s98
      %s99 = sphi 0, %s96
      %s100 = sphi 0, %s99
      %s116 = sphi 0, %s100
      %s122 = sphi 0, %s124
      %s125 = sphi 0, %s122
      %s126 = sphi 0, %s125
      %s142 = sphi 0, %s126
      %s146 = sphi 0, %s146
      %s148 = sphi 0, %s146
      %s149 = sphi 0, %s148
      %s163 = sphi 0, %s149
      %s167 = sphi 0, %s167
      %s169 = sphi 0, %s167
      %s170 = sphi 0, %s169
      %s184 = sphi 0, %s170
      %s188 = sphi 0, %s188
      %s190 = sphi 0, %s188
      %s191 = sphi 0, %s190
      %s205 = sphi 0, %s191
      %s209 = sphi 0, %s209
      %s211 = sphi 0, %s209
      %s212 = sphi 0, %s211
      %s226 = sphi 0, %s212
      %s230 = sphi 0, %s230
      %s232 = sphi 0, %s230
      %s233 = sphi 0, %s232
      %s247 = sphi 0, %s233
      %s251 = sphi 0, %s251
      %s253 = sphi 0, %s251
      %s254 = sphi 0, %s253
      %s268 = sphi 0, %s254
      %s272 = sphi 0, %s272
      %s274 = sphi 0, %s272
      %s275 = sphi 0, %s274
      %s289 = sphi 0, %s275
      %s293 = sphi 0, %s293
      %s295 = sphi 0, %s293
      %s296 = sphi 0, %s295
      %s310 = sphi 0, %s296
      %s314 = sphi 0, %s314
      %s316 = sphi 0, %s314
      %s317 = sphi 0, %s316
      %s331 = sphi 0, %s317
      %s335 = sphi 0, %s335
      %s337 = sphi 0, %s335
      %s338 = sphi 0, %s337
      %s352 = sphi 0, %s338
      %s356 = sphi 0, %s356
      %s358 = sphi 0, %s356
      %s359 = sphi 0, %s358
      %s373 = sphi 0, %s359
      %s377 = sphi 0, %s377
      %s379 = sphi 0, %s377
      %s380 = sphi 0, %s379
      %s394 = sphi 0, %s380
      %s398 = sphi 0, %s398
      %s400 = sphi 0, %s398
      %s401 = sphi 0, %s400
      %s415 = sphi 0, %s401
      %s421 = sphi 0, %s423
      %s424 = sphi 0, %s421
      %s425 = sphi 0, %s424
      %s441 = sphi 0, %s425
    $region4: #{tpu_custom_call.1} parent=1 // loop_header_branch
      %37 = sbr.rel (%p35) target = $region8
    $region5: #{tpu_custom_call.1} parent=1 // loop_body
      %s39 = ssub.s32 %s34, 1
      %s40 = ssub.s32 %s34, 2
      %s41 = sadd.s32 %s34, 1
      %s42 = ssub.s32 %s34, %s41
      %p43 = scmp.eq.s32.totalorder %s42, 0
      %s45 = sadd.s32 %s44, 1
      %s46 = scalar_select %p43, %s44, %s45
      %p49 = pneg %p43
      %p50 = scmp.eq.s32.totalorder %s34, 1
      %p51 = por %p49, %p50
      %p52 = scmp.ne.s32.totalorder %s44, %s47
      %p53 = scmp.eq.s32.totalorder %s34, 0
      %p54 = por %p52, %p53
      %p55 = scmp.ne.s32.totalorder %s44, %s47
      %p56 = scmp.eq.s32.totalorder %s39, 1
      %p57 = por %p55, %p56
      %p58 = scmp.ne.s32.totalorder %s47, %s48
      %p59 = scmp.eq.s32.totalorder %s39, 0
      %p60 = por %p58, %p59
      %p61 = scmp.ne.s32.totalorder %s47, %s48
      %p62 = scmp.eq.s32.totalorder %s40, 1
      %p63 = por %p61, %p62
      %p65 = scmp.ne.s32.totalorder %s48, %s64
      %p66 = scmp.eq.s32.totalorder %s40, 0
      %p67 = por %p65, %p66
      %s68 = ssub.s32 %s34, %s41
      %p69 = scmp.eq.s32.totalorder %s68, 0
      %s71 = sadd.s32 %s70, 1
      %s72 = scalar_select %p69, %s70, %s71
      %p75 = pneg %p69
      %p76 = scmp.eq.s32.totalorder %s34, 1
      %p77 = por %p75, %p76
      %p78 = scmp.ne.s32.totalorder %s70, %s73
      %p79 = scmp.eq.s32.totalorder %s34, 0
      %p80 = por %p78, %p79
      %p81 = scmp.ne.s32.totalorder %s70, %s73
      %p82 = scmp.eq.s32.totalorder %s39, 1
      %p83 = por %p81, %p82
      %p84 = scmp.ne.s32.totalorder %s73, %s74
      %p85 = scmp.eq.s32.totalorder %s39, 0
      %p86 = por %p84, %p85
      %p87 = scmp.ne.s32.totalorder %s73, %s74
      %p88 = scmp.eq.s32.totalorder %s40, 1
      %p89 = por %p87, %p88
      %p91 = scmp.ne.s32.totalorder %s74, %s90
      %p92 = scmp.eq.s32.totalorder %s40, 0
      %p93 = por %p91, %p92
      %s94 = ssub.s32 %s34, %s41
      %p95 = scmp.eq.s32.totalorder %s94, 0
      %s97 = sadd.s32 %s96, 1
      %s98 = scalar_select %p95, %s96, %s97
      %p101 = pneg %p95
      %p102 = scmp.eq.s32.totalorder %s34, 1
      %p103 = por %p101, %p102
      %p104 = scmp.ne.s32.totalorder %s96, %s99
      %p105 = scmp.eq.s32.totalorder %s34, 0
      %p106 = por %p104, %p105
      %p107 = scmp.ne.s32.totalorder %s96, %s99
      %p108 = scmp.eq.s32.totalorder %s39, 1
      %p109 = por %p107, %p108
      %p110 = scmp.ne.s32.totalorder %s99, %s100
      %p111 = scmp.eq.s32.totalorder %s39, 0
      %p112 = por %p110, %p111
      %p113 = scmp.ne.s32.totalorder %s99, %s100
      %p114 = scmp.eq.s32.totalorder %s40, 1
      %p115 = por %p113, %p114
      %p117 = scmp.ne.s32.totalorder %s100, %s116
      %p118 = scmp.eq.s32.totalorder %s40, 0
      %p119 = por %p117, %p118
      %s120 = ssub.s32 %s34, %s41
      %p121 = scmp.eq.s32.totalorder %s120, 0
      %s123 = sadd.s32 %s122, 1
      %s124 = scalar_select %p121, %s122, %s123
      %p127 = pneg %p121
      %p128 = scmp.eq.s32.totalorder %s34, 1
      %p129 = por %p127, %p128
      %p130 = scmp.ne.s32.totalorder %s122, %s125
      %p131 = scmp.eq.s32.totalorder %s34, 0
      %p132 = por %p130, %p131
      %p133 = scmp.ne.s32.totalorder %s122, %s125
      %p134 = scmp.eq.s32.totalorder %s39, 1
      %p135 = por %p133, %p134
      %p136 = scmp.ne.s32.totalorder %s125, %s126
      %p137 = scmp.eq.s32.totalorder %s39, 0
      %p138 = por %p136, %p137
      %p139 = scmp.ne.s32.totalorder %s125, %s126
      %p140 = scmp.eq.s32.totalorder %s40, 1
      %p141 = por %p139, %p140
      %p143 = scmp.ne.s32.totalorder %s126, %s142
      %p144 = scmp.eq.s32.totalorder %s40, 0
      %p145 = por %p143, %p144
      %s147 = sadd.s32 %s146, 1
      %p150 = scmp.eq.s32.totalorder %s34, 1
      %p151 = scmp.ne.s32.totalorder %s146, %s148
      %p152 = scmp.eq.s32.totalorder %s34, 0
      %p153 = por %p151, %p152
      %p154 = scmp.ne.s32.totalorder %s146, %s148
      %p155 = scmp.eq.s32.totalorder %s39, 1
      %p156 = por %p154, %p155
      %p157 = scmp.ne.s32.totalorder %s148, %s149
      %p158 = scmp.eq.s32.totalorder %s39, 0
      %p159 = por %p157, %p158
      %p160 = scmp.ne.s32.totalorder %s148, %s149
      %p161 = scmp.eq.s32.totalorder %s40, 1
      %p162 = por %p160, %p161
      %p164 = scmp.ne.s32.totalorder %s149, %s163
      %p165 = scmp.eq.s32.totalorder %s40, 0
      %p166 = por %p164, %p165
      %s168 = sadd.s32 %s167, 1
      %p171 = scmp.eq.s32.totalorder %s34, 1
      %p172 = scmp.ne.s32.totalorder %s167, %s169
      %p173 = scmp.eq.s32.totalorder %s34, 0
      %p174 = por %p172, %p173
      %p175 = scmp.ne.s32.totalorder %s167, %s169
      %p176 = scmp.eq.s32.totalorder %s39, 1
      %p177 = por %p175, %p176
      %p178 = scmp.ne.s32.totalorder %s169, %s170
      %p179 = scmp.eq.s32.totalorder %s39, 0
      %p180 = por %p178, %p179
      %p181 = scmp.ne.s32.totalorder %s169, %s170
      %p182 = scmp.eq.s32.totalorder %s40, 1
      %p183 = por %p181, %p182
      %p185 = scmp.ne.s32.totalorder %s170, %s184
      %p186 = scmp.eq.s32.totalorder %s40, 0
      %p187 = por %p185, %p186
      %s189 = sadd.s32 %s188, 1
      %p192 = scmp.eq.s32.totalorder %s34, 1
      %p193 = scmp.ne.s32.totalorder %s188, %s190
      %p194 = scmp.eq.s32.totalorder %s34, 0
      %p195 = por %p193, %p194
      %p196 = scmp.ne.s32.totalorder %s188, %s190
      %p197 = scmp.eq.s32.totalorder %s39, 1
      %p198 = por %p196, %p197
      %p199 = scmp.ne.s32.totalorder %s190, %s191
      %p200 = scmp.eq.s32.totalorder %s39, 0
      %p201 = por %p199, %p200
      %p202 = scmp.ne.s32.totalorder %s190, %s191
      %p203 = scmp.eq.s32.totalorder %s40, 1
      %p204 = por %p202, %p203
      %p206 = scmp.ne.s32.totalorder %s191, %s205
      %p207 = scmp.eq.s32.totalorder %s40, 0
      %p208 = por %p206, %p207
      %s210 = sadd.s32 %s209, 1
      %p213 = scmp.eq.s32.totalorder %s34, 1
      %p214 = scmp.ne.s32.totalorder %s209, %s211
      %p215 = scmp.eq.s32.totalorder %s34, 0
      %p216 = por %p214, %p215
      %p217 = scmp.ne.s32.totalorder %s209, %s211
      %p218 = scmp.eq.s32.totalorder %s39, 1
      %p219 = por %p217, %p218
      %p220 = scmp.ne.s32.totalorder %s211, %s212
      %p221 = scmp.eq.s32.totalorder %s39, 0
      %p222 = por %p220, %p221
      %p223 = scmp.ne.s32.totalorder %s211, %s212
      %p224 = scmp.eq.s32.totalorder %s40, 1
      %p225 = por %p223, %p224
      %p227 = scmp.ne.s32.totalorder %s212, %s226
      %p228 = scmp.eq.s32.totalorder %s40, 0
      %p229 = por %p227, %p228
      %s231 = sadd.s32 %s230, 1
      %p234 = scmp.eq.s32.totalorder %s34, 1
      %p235 = scmp.ne.s32.totalorder %s230, %s232
      %p236 = scmp.eq.s32.totalorder %s34, 0
      %p237 = por %p235, %p236
      %p238 = scmp.ne.s32.totalorder %s230, %s232
      %p239 = scmp.eq.s32.totalorder %s39, 1
      %p240 = por %p238, %p239
      %p241 = scmp.ne.s32.totalorder %s232, %s233
      %p242 = scmp.eq.s32.totalorder %s39, 0
      %p243 = por %p241, %p242
      %p244 = scmp.ne.s32.totalorder %s232, %s233
      %p245 = scmp.eq.s32.totalorder %s40, 1
      %p246 = por %p244, %p245
      %p248 = scmp.ne.s32.totalorder %s233, %s247
      %p249 = scmp.eq.s32.totalorder %s40, 0
      %p250 = por %p248, %p249
      %s252 = sadd.s32 %s251, 1
      %p255 = scmp.eq.s32.totalorder %s34, 1
      %p256 = scmp.ne.s32.totalorder %s251, %s253
      %p257 = scmp.eq.s32.totalorder %s34, 0
      %p258 = por %p256, %p257
      %p259 = scmp.ne.s32.totalorder %s251, %s253
      %p260 = scmp.eq.s32.totalorder %s39, 1
      %p261 = por %p259, %p260
      %p262 = scmp.ne.s32.totalorder %s253, %s254
      %p263 = scmp.eq.s32.totalorder %s39, 0
      %p264 = por %p262, %p263
      %p265 = scmp.ne.s32.totalorder %s253, %s254
      %p266 = scmp.eq.s32.totalorder %s40, 1
      %p267 = por %p265, %p266
      %p269 = scmp.ne.s32.totalorder %s254, %s268
      %p270 = scmp.eq.s32.totalorder %s40, 0
      %p271 = por %p269, %p270
      %s273 = sadd.s32 %s272, 1
      %p276 = scmp.eq.s32.totalorder %s34, 1
      %p277 = scmp.ne.s32.totalorder %s272, %s274
      %p278 = scmp.eq.s32.totalorder %s34, 0
      %p279 = por %p277, %p278
      %p280 = scmp.ne.s32.totalorder %s272, %s274
      %p281 = scmp.eq.s32.totalorder %s39, 1
      %p282 = por %p280, %p281
      %p283 = scmp.ne.s32.totalorder %s274, %s275
      %p284 = scmp.eq.s32.totalorder %s39, 0
      %p285 = por %p283, %p284
      %p286 = scmp.ne.s32.totalorder %s274, %s275
      %p287 = scmp.eq.s32.totalorder %s40, 1
      %p288 = por %p286, %p287
      %p290 = scmp.ne.s32.totalorder %s275, %s289
      %p291 = scmp.eq.s32.totalorder %s40, 0
      %p292 = por %p290, %p291
      %s294 = sadd.s32 %s293, 1
      %p297 = scmp.eq.s32.totalorder %s34, 1
      %p298 = scmp.ne.s32.totalorder %s293, %s295
      %p299 = scmp.eq.s32.totalorder %s34, 0
      %p300 = por %p298, %p299
      %p301 = scmp.ne.s32.totalorder %s293, %s295
      %p302 = scmp.eq.s32.totalorder %s39, 1
      %p303 = por %p301, %p302
      %p304 = scmp.ne.s32.totalorder %s295, %s296
      %p305 = scmp.eq.s32.totalorder %s39, 0
      %p306 = por %p304, %p305
      %p307 = scmp.ne.s32.totalorder %s295, %s296
      %p308 = scmp.eq.s32.totalorder %s40, 1
      %p309 = por %p307, %p308
      %p311 = scmp.ne.s32.totalorder %s296, %s310
      %p312 = scmp.eq.s32.totalorder %s40, 0
      %p313 = por %p311, %p312
      %s315 = sadd.s32 %s314, 1
      %p318 = scmp.eq.s32.totalorder %s34, 1
      %p319 = scmp.ne.s32.totalorder %s314, %s316
      %p320 = scmp.eq.s32.totalorder %s34, 0
      %p321 = por %p319, %p320
      %p322 = scmp.ne.s32.totalorder %s314, %s316
      %p323 = scmp.eq.s32.totalorder %s39, 1
      %p324 = por %p322, %p323
      %p325 = scmp.ne.s32.totalorder %s316, %s317
      %p326 = scmp.eq.s32.totalorder %s39, 0
      %p327 = por %p325, %p326
      %p328 = scmp.ne.s32.totalorder %s316, %s317
      %p329 = scmp.eq.s32.totalorder %s40, 1
      %p330 = por %p328, %p329
      %p332 = scmp.ne.s32.totalorder %s317, %s331
      %p333 = scmp.eq.s32.totalorder %s40, 0
      %p334 = por %p332, %p333
      %s336 = sadd.s32 %s335, 1
      %p339 = scmp.eq.s32.totalorder %s34, 1
      %p340 = scmp.ne.s32.totalorder %s335, %s337
      %p341 = scmp.eq.s32.totalorder %s34, 0
      %p342 = por %p340, %p341
      %p343 = scmp.ne.s32.totalorder %s335, %s337
      %p344 = scmp.eq.s32.totalorder %s39, 1
      %p345 = por %p343, %p344
      %p346 = scmp.ne.s32.totalorder %s337, %s338
      %p347 = scmp.eq.s32.totalorder %s39, 0
      %p348 = por %p346, %p347
      %p349 = scmp.ne.s32.totalorder %s337, %s338
      %p350 = scmp.eq.s32.totalorder %s40, 1
      %p351 = por %p349, %p350
      %p353 = scmp.ne.s32.totalorder %s338, %s352
      %p354 = scmp.eq.s32.totalorder %s40, 0
      %p355 = por %p353, %p354
      %s357 = sadd.s32 %s356, 1
      %p360 = scmp.eq.s32.totalorder %s34, 1
      %p361 = scmp.ne.s32.totalorder %s356, %s358
      %p362 = scmp.eq.s32.totalorder %s34, 0
      %p363 = por %p361, %p362
      %p364 = scmp.ne.s32.totalorder %s356, %s358
      %p365 = scmp.eq.s32.totalorder %s39, 1
      %p366 = por %p364, %p365
      %p367 = scmp.ne.s32.totalorder %s358, %s359
      %p368 = scmp.eq.s32.totalorder %s39, 0
      %p369 = por %p367, %p368
      %p370 = scmp.ne.s32.totalorder %s358, %s359
      %p371 = scmp.eq.s32.totalorder %s40, 1
      %p372 = por %p370, %p371
      %p374 = scmp.ne.s32.totalorder %s359, %s373
      %p375 = scmp.eq.s32.totalorder %s40, 0
      %p376 = por %p374, %p375
      %s378 = sadd.s32 %s377, 1
      %p381 = scmp.eq.s32.totalorder %s34, 1
      %p382 = scmp.ne.s32.totalorder %s377, %s379
      %p383 = scmp.eq.s32.totalorder %s34, 0
      %p384 = por %p382, %p383
      %p385 = scmp.ne.s32.totalorder %s377, %s379
      %p386 = scmp.eq.s32.totalorder %s39, 1
      %p387 = por %p385, %p386
      %p388 = scmp.ne.s32.totalorder %s379, %s380
      %p389 = scmp.eq.s32.totalorder %s39, 0
      %p390 = por %p388, %p389
      %p391 = scmp.ne.s32.totalorder %s379, %s380
      %p392 = scmp.eq.s32.totalorder %s40, 1
      %p393 = por %p391, %p392
      %p395 = scmp.ne.s32.totalorder %s380, %s394
      %p396 = scmp.eq.s32.totalorder %s40, 0
      %p397 = por %p395, %p396
      %s399 = sadd.s32 %s398, 1
      %p402 = scmp.eq.s32.totalorder %s34, 1
      %p403 = scmp.ne.s32.totalorder %s398, %s400
      %p404 = scmp.eq.s32.totalorder %s34, 0
      %p405 = por %p403, %p404
      %p406 = scmp.ne.s32.totalorder %s398, %s400
      %p407 = scmp.eq.s32.totalorder %s39, 1
      %p408 = por %p406, %p407
      %p409 = scmp.ne.s32.totalorder %s400, %s401
      %p410 = scmp.eq.s32.totalorder %s39, 0
      %p411 = por %p409, %p410
      %p412 = scmp.ne.s32.totalorder %s400, %s401
      %p413 = scmp.eq.s32.totalorder %s40, 1
      %p414 = por %p412, %p413
      %p416 = scmp.ne.s32.totalorder %s401, %s415
      %p417 = scmp.eq.s32.totalorder %s40, 0
      %p418 = por %p416, %p417
      %s419 = ssub.s32 %s34, %s41
      %p420 = scmp.eq.s32.totalorder %s419, 0
      %s422 = sadd.s32 %s421, 1
      %s423 = scalar_select %p420, %s421, %s422
      %p426 = pneg %p420
      %p427 = scmp.eq.s32.totalorder %s34, 1
      %p428 = por %p426, %p427
      %p429 = scmp.ne.s32.totalorder %s421, %s424
      %p430 = scmp.eq.s32.totalorder %s34, 0
      %p431 = por %p429, %p430
      %p432 = scmp.ne.s32.totalorder %s421, %s424
      %p433 = scmp.eq.s32.totalorder %s39, 1
      %p434 = por %p432, %p433
      %p435 = scmp.ne.s32.totalorder %s424, %s425
      %p436 = scmp.eq.s32.totalorder %s39, 0
      %p437 = por %p435, %p436
      %p438 = scmp.ne.s32.totalorder %s424, %s425
      %p439 = scmp.eq.s32.totalorder %s40, 1
      %p440 = por %p438, %p439
      %p442 = scmp.ne.s32.totalorder %s425, %s441
      %p443 = scmp.eq.s32.totalorder %s40, 0
      %p444 = por %p442, %p443
      %p445 = scmp.le.s32.totalorder 1, %s34
      %p446 = scmp.lt.s32.totalorder %s34, 3
      %p447 = pnand %p445, %p446
      %p448 = pneg %p447
      // Predicated region
      $region9: #{tpu_custom_call.1} parent=5 // pred_check
        _
      $region10: #{tpu_custom_call.1} parent=5 // pred_check_branch
        %450 = sbr.rel (%p447) target = $region12
      $region11: #{tpu_custom_call.1} parent=5 // pred_region
        %s451 = ssub.s32 %s34, 1
        // Predicated region
        $region13: #{tpu_custom_call.1} parent=11 // pred_check
          %p452 = pneg %p159
        $region14: #{tpu_custom_call.1} parent=11 // pred_check_branch
          %454 = sbr.rel (%p452) target = $region16
        $region15: #{tpu_custom_call.1} parent=11 // pred_region
          _
        $region16: #{tpu_custom_call.1} parent=11 // pred_fallthru
          _
        // Predicated region
        $region17: #{tpu_custom_call.1} parent=11 // pred_check
          %p455 = pneg %p180
        $region18: #{tpu_custom_call.1} parent=11 // pred_check_branch
          %457 = sbr.rel (%p455) target = $region20
        $region19: #{tpu_custom_call.1} parent=11 // pred_region
          _
        $region20: #{tpu_custom_call.1} parent=11 // pred_fallthru
          _
        // Predicated region
        $region21: #{tpu_custom_call.1} parent=11 // pred_check
          %p458 = pneg %p201
        $region22: #{tpu_custom_call.1} parent=11 // pred_check_branch
          %460 = sbr.rel (%p458) target = $region24
        $region23: #{tpu_custom_call.1} parent=11 // pred_region
          %s462 = ssub.s32 128, 128
          %463 = vsyncadd [#allocation8], %s462
          %s465 = sshll.u32 [#allocation9], 4
          %s466 = int_to_ptr.vmem [resolvable:$true] %s465
          %468 = dma.hbm_to_vmem [thread:$0]  %s6, 128, %s466, [#allocation8]
        $region24: #{tpu_custom_call.1} parent=11 // pred_fallthru
          _
        // Predicated region
        $region25: #{tpu_custom_call.1} parent=11 // pred_check
          %p469 = pneg %p222
        $region26: #{tpu_custom_call.1} parent=11 // pred_check_branch
          %471 = sbr.rel (%p469) target = $region28
        $region27: #{tpu_custom_call.1} parent=11 // pred_region
          _
        $region28: #{tpu_custom_call.1} parent=11 // pred_fallthru
          _
        // Predicated region
        $region29: #{tpu_custom_call.1} parent=11 // pred_check
          %p472 = pneg %p243
        $region30: #{tpu_custom_call.1} parent=11 // pred_check_branch
          %474 = sbr.rel (%p472) target = $region32
        $region31: #{tpu_custom_call.1} parent=11 // pred_region
          _
        $region32: #{tpu_custom_call.1} parent=11 // pred_fallthru
          _
        // Predicated region
        $region33: #{tpu_custom_call.1} parent=11 // pred_check
          %p475 = pneg %p264
        $region34: #{tpu_custom_call.1} parent=11 // pred_check_branch
          %477 = sbr.rel (%p475) target = $region36
        $region35: #{tpu_custom_call.1} parent=11 // pred_region
          %s479 = ssub.s32 16, 16
          %480 = vsyncadd [#allocation11], %s479
          %s482 = sshll.u32 [#allocation10], 4
          %s483 = int_to_ptr.vmem [resolvable:$true] %s482
          %485 = dma.hbm_to_vmem [thread:$0]  %s9, 16, %s483, [#allocation11]
        $region36: #{tpu_custom_call.1} parent=11 // pred_fallthru
          _
        // Predicated region
        $region37: #{tpu_custom_call.1} parent=11 // pred_check
          %p486 = pneg %p285
        $region38: #{tpu_custom_call.1} parent=11 // pred_check_branch
          %488 = sbr.rel (%p486) target = $region40
        $region39: #{tpu_custom_call.1} parent=11 // pred_region
          %s490 = ssub.s32 16, 16
          %491 = vsyncadd [#allocation11], %s490
          %s493 = sshll.u32 [#allocation12], 4
          %s494 = int_to_ptr.vmem [resolvable:$true] %s493
          %496 = dma.hbm_to_vmem [thread:$0]  %s10, 16, %s494, [#allocation11]
        $region40: #{tpu_custom_call.1} parent=11 // pred_fallthru
          _
        // Predicated region
        $region41: #{tpu_custom_call.1} parent=11 // pred_check
          %p497 = pneg %p306
        $region42: #{tpu_custom_call.1} parent=11 // pred_check_branch
          %499 = sbr.rel (%p497) target = $region44
        $region43: #{tpu_custom_call.1} parent=11 // pred_region
          %s501 = ssub.s32 512, 512
          %502 = vsyncadd [#allocation14], %s501
          %s503 = sshll.u32 [#allocation13], 4
          %s504 = int_to_ptr.vmem [resolvable:$true] %s503
          %509 = dma.hbm_to_vmem [thread:$0]  %s11, 512, %s504, [#allocation14], 128, 128, 8
        $region44: #{tpu_custom_call.1} parent=11 // pred_fallthru
          _
        // Predicated region
        $region45: #{tpu_custom_call.1} parent=11 // pred_check
          %p510 = pneg %p327
        $region46: #{tpu_custom_call.1} parent=11 // pred_check_branch
          %512 = sbr.rel (%p510) target = $region48
        $region47: #{tpu_custom_call.1} parent=11 // pred_region
          %s514 = ssub.s32 16, 16
          %515 = vsyncadd [#allocation14], %s514
          %s517 = sshll.u32 [#allocation15], 4
          %s518 = int_to_ptr.vmem [resolvable:$true] %s517
          %520 = dma.hbm_to_vmem [thread:$0]  %s12, 16, %s518, [#allocation14]
        $region48: #{tpu_custom_call.1} parent=11 // pred_fallthru
          _
        // Predicated region
        $region49: #{tpu_custom_call.1} parent=11 // pred_check
          %p521 = pneg %p348
        $region50: #{tpu_custom_call.1} parent=11 // pred_check_branch
          %523 = sbr.rel (%p521) target = $region52
        $region51: #{tpu_custom_call.1} parent=11 // pred_region
          _
        $region52: #{tpu_custom_call.1} parent=11 // pred_fallthru
          _
        // Predicated region
        $region53: #{tpu_custom_call.1} parent=11 // pred_check
          %p524 = pneg %p369
        $region54: #{tpu_custom_call.1} parent=11 // pred_check_branch
          %526 = sbr.rel (%p524) target = $region56
        $region55: #{tpu_custom_call.1} parent=11 // pred_region
          _
        $region56: #{tpu_custom_call.1} parent=11 // pred_fallthru
          _
        // Predicated region
        $region57: #{tpu_custom_call.1} parent=11 // pred_check
          %p527 = pneg %p390
        $region58: #{tpu_custom_call.1} parent=11 // pred_check_branch
          %529 = sbr.rel (%p527) target = $region60
        $region59: #{tpu_custom_call.1} parent=11 // pred_region
          _
        $region60: #{tpu_custom_call.1} parent=11 // pred_fallthru
          _
        // Predicated region
        $region61: #{tpu_custom_call.1} parent=11 // pred_check
          %p530 = pneg %p411
        $region62: #{tpu_custom_call.1} parent=11 // pred_check_branch
          %532 = sbr.rel (%p530) target = $region64
        $region63: #{tpu_custom_call.1} parent=11 // pred_region
          _
        $region64: #{tpu_custom_call.1} parent=11 // pred_fallthru
          _
      $region12: #{tpu_custom_call.1} parent=5 // pred_fallthru
        _
      %p533 = scmp.lt.s32.totalorder %s34, 2
      // Predicated region
      $region65: #{tpu_custom_call.1} parent=5 // pred_check
        %p534 = pneg %p533
      $region66: #{tpu_custom_call.1} parent=5 // pred_check_branch
        %536 = sbr.rel (%p534) target = $region68
      $region67: #{tpu_custom_call.1} parent=5 // pred_region
        // Predicated region
        $region69: #{tpu_custom_call.1} parent=67 // pred_check
          %p537 = pneg %p54
        $region70: #{tpu_custom_call.1} parent=67 // pred_check_branch
          %539 = sbr.rel (%p537) target = $region72
        $region71: #{tpu_custom_call.1} parent=67 // pred_region
          %s540 = sand.u32 %s44, 1
          %s541 = sand.u32 %s44, 1
          %s542 = smul.addr %s541, 32
          %s543 = scalar_lea.vmem [#allocation2], %s542
          %s544 = smul.addr %s34, 8
          %s545 = scalar_lea.vmem %s0, %s544
          // Predicated region
          $region73: #{tpu_custom_call.1} parent=71 // pred_check
            _
          $region74: #{tpu_custom_call.1} parent=71 // pred_check_branch
            %547 = sbr.rel (0) target = $region76
          $region75: #{tpu_custom_call.1} parent=71 // pred_region
            // Predicated region
            $region77: #{tpu_custom_call.1} parent=75 // pred_check
              _
            $region78: #{tpu_custom_call.1} parent=75 // pred_check_branch
              %549 = sbr.rel (0) target = $region80
            $region79: #{tpu_custom_call.1} parent=75 // pred_region
              // Predicated region
              $region92: #{tpu_custom_call.1} parent=79 // pred_check
                _
              $region93: #{tpu_custom_call.1} parent=79 // pred_check_branch
                %570 = sbr.rel (0) target = $region95
              $region94: #{tpu_custom_call.1} parent=79 // pred_region
                loop: start=0, step=1, limit=1
                $region96: #{tpu_custom_call.1} parent=94 // loop_pre_header
                  _
                $region97: #{tpu_custom_call.1} parent=94 // loop_header
                  %s572 = sphi 0, %s576
                  %p573 = scmp.ge.s32.totalorder %s572, 1
                  %s577 = sphi %s545, %s545
                  %s578 = sphi %s543, %s543
                $region98: #{tpu_custom_call.1} parent=94 // loop_header_branch
                  %575 = sbr.rel (%p573) target = $region102
                $region99: #{tpu_custom_call.1} parent=94 // loop_body
                  %v579 = vld [vmem:[%s577] sm:$0xff]
                  %580 = vst [vmem:[%s578] sm:$0xff] %v579
                  %v581 = vld [vmem:[%s577 + $0x10] sm:$0xff]
                  %582 = vst [vmem:[%s578 + $0x8] sm:$0xff] %v581
                  %v583 = vld [vmem:[%s577 + $0x20] sm:$0xff]
                  %584 = vst [vmem:[%s578 + $0x10] sm:$0xff] %v583
                  %v585 = vld [vmem:[%s577 + $0x30] sm:$0xff]
                  %586 = vst [vmem:[%s578 + $0x18] sm:$0xff] %v585
                $region100: #{tpu_custom_call.1} parent=94 // loop_footer
                  %s576 = sadd.s32 1, %s572
                $region101: #{tpu_custom_call.1} parent=94 // loop_footer_branch
                  %571 = sbr.rel target = $region97
                $region102: #{tpu_custom_call.1} parent=94 // loop_exit
                  _
              $region95: #{tpu_custom_call.1} parent=79 // pred_fallthru
                _
              // Predicated region
              $region103: #{tpu_custom_call.1} parent=79 // pred_check
                _
              $region104: #{tpu_custom_call.1} parent=79 // pred_check_branch
                %588 = sbr.rel target = $region106
              $region105: #{tpu_custom_call.1} parent=79 // pred_region
                _
              $region106: #{tpu_custom_call.1} parent=79 // pred_fallthru
                _
            $region80: #{tpu_custom_call.1} parent=75 // pred_fallthru
              _
            // Predicated region
            $region81: #{tpu_custom_call.1} parent=75 // pred_check
              _
            $region82: #{tpu_custom_call.1} parent=75 // pred_check_branch
              %551 = sbr.rel target = $region84
            $region83: #{tpu_custom_call.1} parent=75 // pred_region
              loop: start=0, step=1, limit=1
              $region85: #{tpu_custom_call.1} parent=83 // loop_pre_header
                _
              $region86: #{tpu_custom_call.1} parent=83 // loop_header
                %s554 = sphi 0, %s558
                %p555 = scmp.ge.s32.totalorder %s554, 1
                %s559 = sphi %s545, %s545
                %s560 = sphi %s543, %s543
              $region87: #{tpu_custom_call.1} parent=83 // loop_header_branch
                %557 = sbr.rel (%p555) target = $region91
              $region88: #{tpu_custom_call.1} parent=83 // loop_body
                %v561 = vld [vmem:[%s559] sm:$0xff]
                %562 = vst [vmem:[%s560] sm:$0xff] %v561
                %v563 = vld [vmem:[%s559 + $0x10] sm:$0xff]
                %564 = vst [vmem:[%s560 + $0x8] sm:$0xff] %v563
                %v565 = vld [vmem:[%s559 + $0x20] sm:$0xff]
                %566 = vst [vmem:[%s560 + $0x10] sm:$0xff] %v565
                %v567 = vld [vmem:[%s559 + $0x30] sm:$0xff]
                %568 = vst [vmem:[%s560 + $0x18] sm:$0xff] %v567
              $region89: #{tpu_custom_call.1} parent=83 // loop_footer
                %s558 = sadd.s32 1, %s554
              $region90: #{tpu_custom_call.1} parent=83 // loop_footer_branch
                %553 = sbr.rel target = $region86
              $region91: #{tpu_custom_call.1} parent=83 // loop_exit
                _
            $region84: #{tpu_custom_call.1} parent=75 // pred_fallthru
              _
          $region76: #{tpu_custom_call.1} parent=71 // pred_fallthru
            _
          %589 = vnop
        $region72: #{tpu_custom_call.1} parent=67 // pred_fallthru
          _
        // Predicated region
        $region107: #{tpu_custom_call.1} parent=67 // pred_check
          %p590 = pneg %p80
        $region108: #{tpu_custom_call.1} parent=67 // pred_check_branch
          %592 = sbr.rel (%p590) target = $region110
        $region109: #{tpu_custom_call.1} parent=67 // pred_region
          %s593 = sand.u32 %s70, 1
          %s594 = sand.u32 %s70, 1
          %s595 = smul.addr %s594, 32
          %s596 = scalar_lea.vmem [#allocation3], %s595
          %s597 = smul.addr %s34, 8
          %s598 = scalar_lea.vmem %s1, %s597
          // Predicated region
          $region111: #{tpu_custom_call.1} parent=109 // pred_check
            _
          $region112: #{tpu_custom_call.1} parent=109 // pred_check_branch
            %600 = sbr.rel (0) target = $region114
          $region113: #{tpu_custom_call.1} parent=109 // pred_region
            // Predicated region
            $region115: #{tpu_custom_call.1} parent=113 // pred_check
              _
            $region116: #{tpu_custom_call.1} parent=113 // pred_check_branch
              %602 = sbr.rel (0) target = $region118
            $region117: #{tpu_custom_call.1} parent=113 // pred_region
              // Predicated region
              $region130: #{tpu_custom_call.1} parent=117 // pred_check
                _
              $region131: #{tpu_custom_call.1} parent=117 // pred_check_branch
                %623 = sbr.rel (0) target = $region133
              $region132: #{tpu_custom_call.1} parent=117 // pred_region
                loop: start=0, step=1, limit=1
                $region134: #{tpu_custom_call.1} parent=132 // loop_pre_header
                  _
                $region135: #{tpu_custom_call.1} parent=132 // loop_header
                  %s625 = sphi 0, %s629
                  %p626 = scmp.ge.s32.totalorder %s625, 1
                  %s630 = sphi %s598, %s598
                  %s631 = sphi %s596, %s596
                $region136: #{tpu_custom_call.1} parent=132 // loop_header_branch
                  %628 = sbr.rel (%p626) target = $region140
                $region137: #{tpu_custom_call.1} parent=132 // loop_body
                  %v632 = vld [vmem:[%s630] sm:$0xff]
                  %633 = vst [vmem:[%s631] sm:$0xff] %v632
                  %v634 = vld [vmem:[%s630 + $0x10] sm:$0xff]
                  %635 = vst [vmem:[%s631 + $0x8] sm:$0xff] %v634
                  %v636 = vld [vmem:[%s630 + $0x20] sm:$0xff]
                  %637 = vst [vmem:[%s631 + $0x10] sm:$0xff] %v636
                  %v638 = vld [vmem:[%s630 + $0x30] sm:$0xff]
                  %639 = vst [vmem:[%s631 + $0x18] sm:$0xff] %v638
                $region138: #{tpu_custom_call.1} parent=132 // loop_footer
                  %s629 = sadd.s32 1, %s625
                $region139: #{tpu_custom_call.1} parent=132 // loop_footer_branch
                  %624 = sbr.rel target = $region135
                $region140: #{tpu_custom_call.1} parent=132 // loop_exit
                  _
              $region133: #{tpu_custom_call.1} parent=117 // pred_fallthru
                _
              // Predicated region
              $region141: #{tpu_custom_call.1} parent=117 // pred_check
                _
              $region142: #{tpu_custom_call.1} parent=117 // pred_check_branch
                %641 = sbr.rel target = $region144
              $region143: #{tpu_custom_call.1} parent=117 // pred_region
                _
              $region144: #{tpu_custom_call.1} parent=117 // pred_fallthru
                _
            $region118: #{tpu_custom_call.1} parent=113 // pred_fallthru
              _
            // Predicated region
            $region119: #{tpu_custom_call.1} parent=113 // pred_check
              _
            $region120: #{tpu_custom_call.1} parent=113 // pred_check_branch
              %604 = sbr.rel target = $region122
            $region121: #{tpu_custom_call.1} parent=113 // pred_region
              loop: start=0, step=1, limit=1
              $region123: #{tpu_custom_call.1} parent=121 // loop_pre_header
                _
              $region124: #{tpu_custom_call.1} parent=121 // loop_header
                %s607 = sphi 0, %s611
                %p608 = scmp.ge.s32.totalorder %s607, 1
                %s612 = sphi %s598, %s598
                %s613 = sphi %s596, %s596
              $region125: #{tpu_custom_call.1} parent=121 // loop_header_branch
                %610 = sbr.rel (%p608) target = $region129
              $region126: #{tpu_custom_call.1} parent=121 // loop_body
                %v614 = vld [vmem:[%s612] sm:$0xff]
                %615 = vst [vmem:[%s613] sm:$0xff] %v614
                %v616 = vld [vmem:[%s612 + $0x10] sm:$0xff]
                %617 = vst [vmem:[%s613 + $0x8] sm:$0xff] %v616
                %v618 = vld [vmem:[%s612 + $0x20] sm:$0xff]
                %619 = vst [vmem:[%s613 + $0x10] sm:$0xff] %v618
                %v620 = vld [vmem:[%s612 + $0x30] sm:$0xff]
                %621 = vst [vmem:[%s613 + $0x18] sm:$0xff] %v620
              $region127: #{tpu_custom_call.1} parent=121 // loop_footer
                %s611 = sadd.s32 1, %s607
              $region128: #{tpu_custom_call.1} parent=121 // loop_footer_branch
                %606 = sbr.rel target = $region124
              $region129: #{tpu_custom_call.1} parent=121 // loop_exit
                _
            $region122: #{tpu_custom_call.1} parent=113 // pred_fallthru
              _
          $region114: #{tpu_custom_call.1} parent=109 // pred_fallthru
            _
          %642 = vnop
        $region110: #{tpu_custom_call.1} parent=67 // pred_fallthru
          _
        // Predicated region
        $region145: #{tpu_custom_call.1} parent=67 // pred_check
          %p643 = pneg %p106
        $region146: #{tpu_custom_call.1} parent=67 // pred_check_branch
          %645 = sbr.rel (%p643) target = $region148
        $region147: #{tpu_custom_call.1} parent=67 // pred_region
          %s646 = sand.u32 %s96, 1
          %s647 = scalar_lea.sflag [#allocation5], %s646
          %s648 = sand.u32 %s96, 1
          %s649 = smul.addr %s648, 32
          %s650 = scalar_lea.vmem [#allocation4], %s649
          %s652 = ssub.s32 512, 512
          %653 = vsyncadd %s647, %s652
          %s654 = smul.addr %s34, 128
          %s655 = scalar_lea.hbm %s2, %s654
          %s656 = sshll.u32 %s650, 4
          %s657 = int_to_ptr.vmem [resolvable:$true] %s656
          %662 = dma.hbm_to_vmem [thread:$0]  %s655, 512, %s657, %s647, 256, 128, 8
        $region148: #{tpu_custom_call.1} parent=67 // pred_fallthru
          _
        // Predicated region
        $region149: #{tpu_custom_call.1} parent=67 // pred_check
          %p663 = pneg %p132
        $region150: #{tpu_custom_call.1} parent=67 // pred_check_branch
          %665 = sbr.rel (%p663) target = $region152
        $region151: #{tpu_custom_call.1} parent=67 // pred_region
          %s666 = sand.u32 %s34, 1
          %s667 = scalar_lea.sflag [#allocation8], %s666
          %s668 = sand.u32 %s122, 1
          %s669 = smul.addr %s668, 8
          %s670 = scalar_lea.vmem [#allocation7], %s669
          %s672 = ssub.s32 128, 128
          %673 = vsyncadd %s667, %s672
          %s674 = smul.addr %s34, 128
          %s675 = scalar_lea.hbm %s3, %s674
          %s677 = sshll.u32 %s670, 4
          %s678 = int_to_ptr.vmem [resolvable:$true] %s677
          %680 = dma.hbm_to_vmem [thread:$0]  %s675, 128, %s678, %s667
        $region152: #{tpu_custom_call.1} parent=67 // pred_fallthru
          _
      $region68: #{tpu_custom_call.1} parent=5 // pred_fallthru
        _
      %p681 = scmp.le.s32.totalorder 1, %s34
      %p682 = scmp.lt.s32.totalorder %s34, 3
      %p683 = pnand %p681, %p682
      %p684 = pneg %p683
      // Predicated region
      $region153: #{tpu_custom_call.1} parent=5 // pred_check
        _
      $region154: #{tpu_custom_call.1} parent=5 // pred_check_branch
        %686 = sbr.rel (%p683) target = $region156
      $region155: #{tpu_custom_call.1} parent=5 // pred_region
        %s687 = ssub.s32 %s34, 1
        %s688 = sand.u32 %s47, 1
        %s689 = sand.u32 %s47, 1
        %s690 = smul.addr %s689, 32
        %s691 = scalar_lea.vmem [#allocation2], %s690
        // Predicated region
        $region157: #{tpu_custom_call.1} parent=155 // pred_check
          %p692 = pneg %p60
        $region158: #{tpu_custom_call.1} parent=155 // pred_check_branch
          %694 = sbr.rel (%p692) target = $region160
        $region159: #{tpu_custom_call.1} parent=155 // pred_region
          _
        $region160: #{tpu_custom_call.1} parent=155 // pred_fallthru
          _
        %s695 = sand.u32 %s73, 1
        %s696 = sand.u32 %s73, 1
        %s697 = smul.addr %s696, 32
        %s698 = scalar_lea.vmem [#allocation3], %s697
        // Predicated region
        $region161: #{tpu_custom_call.1} parent=155 // pred_check
          %p699 = pneg %p86
        $region162: #{tpu_custom_call.1} parent=155 // pred_check_branch
          %701 = sbr.rel (%p699) target = $region164
        $region163: #{tpu_custom_call.1} parent=155 // pred_region
          _
        $region164: #{tpu_custom_call.1} parent=155 // pred_fallthru
          _
        %s702 = sand.u32 %s99, 1
        %s703 = scalar_lea.sflag [#allocation5], %s702
        %s704 = sand.u32 %s99, 1
        %s705 = smul.addr %s704, 32
        %s706 = scalar_lea.vmem [#allocation4], %s705
        // Predicated region
        $region165: #{tpu_custom_call.1} parent=155 // pred_check
          %p707 = pneg %p112
        $region166: #{tpu_custom_call.1} parent=155 // pred_check_branch
          %709 = sbr.rel (%p707) target = $region168
        $region167: #{tpu_custom_call.1} parent=155 // pred_region
          %710 = dma.done %s703, 512
        $region168: #{tpu_custom_call.1} parent=155 // pred_fallthru
          _
        %s711 = sand.u32 %s39, 1
        %s712 = scalar_lea.sflag [#allocation8], %s711
        %s713 = sand.u32 %s125, 1
        %s714 = smul.addr %s713, 8
        %s715 = scalar_lea.vmem [#allocation7], %s714
        // Predicated region
        $region169: #{tpu_custom_call.1} parent=155 // pred_check
          %p716 = pneg %p138
        $region170: #{tpu_custom_call.1} parent=155 // pred_check_branch
          %718 = sbr.rel (%p716) target = $region172
        $region171: #{tpu_custom_call.1} parent=155 // pred_region
          %719 = dma.done %s712, 128
        $region172: #{tpu_custom_call.1} parent=155 // pred_fallthru
          _
        // Predicated region
        $region173: #{tpu_custom_call.1} parent=155 // pred_check
          %p720 = pneg %p201
        $region174: #{tpu_custom_call.1} parent=155 // pred_check_branch
          %722 = sbr.rel (%p720) target = $region176
        $region175: #{tpu_custom_call.1} parent=155 // pred_region
          %723 = dma.done [#allocation8], 128
        $region176: #{tpu_custom_call.1} parent=155 // pred_fallthru
          _
        // Predicated region
        $region177: #{tpu_custom_call.1} parent=155 // pred_check
          %p724 = pneg %p264
        $region178: #{tpu_custom_call.1} parent=155 // pred_check_branch
          %726 = sbr.rel (%p724) target = $region180
        $region179: #{tpu_custom_call.1} parent=155 // pred_region
          %727 = dma.done [#allocation11], 16
        $region180: #{tpu_custom_call.1} parent=155 // pred_fallthru
          _
        // Predicated region
        $region181: #{tpu_custom_call.1} parent=155 // pred_check
          %p728 = pneg %p285
        $region182: #{tpu_custom_call.1} parent=155 // pred_check_branch
          %730 = sbr.rel (%p728) target = $region184
        $region183: #{tpu_custom_call.1} parent=155 // pred_region
          %731 = dma.done [#allocation11], 16
        $region184: #{tpu_custom_call.1} parent=155 // pred_fallthru
          _
        // Predicated region
        $region185: #{tpu_custom_call.1} parent=155 // pred_check
          %p732 = pneg %p306
        $region186: #{tpu_custom_call.1} parent=155 // pred_check_branch
          %734 = sbr.rel (%p732) target = $region188
        $region187: #{tpu_custom_call.1} parent=155 // pred_region
          %735 = dma.done [#allocation14], 512
        $region188: #{tpu_custom_call.1} parent=155 // pred_fallthru
          _
        // Predicated region
        $region189: #{tpu_custom_call.1} parent=155 // pred_check
          %p736 = pneg %p327
        $region190: #{tpu_custom_call.1} parent=155 // pred_check_branch
          %738 = sbr.rel (%p736) target = $region192
        $region191: #{tpu_custom_call.1} parent=155 // pred_region
          %739 = dma.done [#allocation14], 16
        $region192: #{tpu_custom_call.1} parent=155 // pred_fallthru
          _
        %s740 = sand.u32 %s47, 1
        %s741 = sand.u32 %s47, 1
        %s742 = smul.addr %s741, 32
        %s743 = scalar_lea.vmem [#allocation2], %s742
        %p744 = pneg %p60
        %p745 = pneg %p57
        %s746 = sand.u32 %s73, 1
        %s747 = sand.u32 %s73, 1
        %s748 = smul.addr %s747, 32
        %s749 = scalar_lea.vmem [#allocation3], %s748
        %p750 = pneg %p86
        %p751 = pneg %p83
        %s752 = sand.u32 %s99, 1
        %s753 = scalar_lea.sflag [#allocation5], %s752
        %s754 = sand.u32 %s99, 1
        %s755 = smul.addr %s754, 32
        %s756 = scalar_lea.vmem [#allocation4], %s755
        %p757 = pneg %p112
        %p758 = pneg %p109
        %s759 = sand.u32 %s39, 1
        %s760 = scalar_lea.sflag [#allocation8], %s759
        %s761 = sand.u32 %s125, 1
        %s762 = smul.addr %s761, 8
        %s763 = scalar_lea.vmem [#allocation7], %s762
        %p764 = pneg %p138
        %p765 = pneg %p135
        %p766 = pneg %p159
        %p767 = pneg %p156
        %p768 = pneg %p180
        %p769 = pneg %p177
        %p770 = pneg %p201
        %p771 = pneg %p198
        %p772 = pneg %p222
        %p773 = pneg %p219
        %p774 = pneg %p243
        %p775 = pneg %p240
        %p776 = pneg %p264
        %p777 = pneg %p261
        %p778 = pneg %p285
        %p779 = pneg %p282
        %p780 = pneg %p306
        %p781 = pneg %p303
        %p782 = pneg %p327
        %p783 = pneg %p324
        %p784 = pneg %p348
        %p785 = pneg %p345
        %p786 = pneg %p369
        %p787 = pneg %p366
        %p788 = pneg %p390
        %p789 = pneg %p387
        %p790 = pneg %p411
        %p791 = pneg %p408
        %p792 = pneg %p437
        %p793 = pneg %p434
        %s794 = sand.u32 %s424, 1
        %s795 = scalar_lea.sflag [#allocation6], %s794
        %s796 = sand.u32 %s424, 1
        %s797 = smul.addr %s796, 8
        %s798 = scalar_lea.vmem [#allocation16], %s797
        %v799 = vld [vmem:[%s691] sm:$0xff]
        %v800 = vld [vmem:[%s691 + $0x8] sm:$0xff]
        %v801 = vld [vmem:[%s691 + $0x10] sm:$0xff]
        %v802 = vld [vmem:[%s691 + $0x18] sm:$0xff]
        %v803 = vld [vmem:[%s4] sm:$0xff]
        %vm804 = vcmask 64512
        %v806 = vsel %vm804, %v799, 0
        %v809 = vsel %vm804, %v800, 0
        %v812 = vsel %vm804, %v801, 0
        %v815 = vsel %vm804, %v802, 0
        %817 = vmatprep.subr.mxu0 0.0
        %818 = vmatpush1.msra.mxu0 %v803
        %819 = vmatprep.subr.mxu0 0.0
        %820 = vmatpush1.msra.mxu0 0.0
        %821 = vmatprep.subr.mxu0 0.0
        %822 = vmatpush1.msra.mxu0 0.0
        %823 = vmatprep.subr.mxu0 0.0
        %824 = vmatpush1.msra.mxu0 0.0
        %825 = vmatprep.subr.mxu0 0.0
        %826 = vmatpush1.msra.mxu0 0.0
        %827 = vmatprep.subr.mxu0 0.0
        %828 = vmatpush1.msra.mxu0 0.0
        %829 = vmatprep.subr.mxu0 0.0
        %830 = vmatpush1.msra.mxu0 0.0
        %831 = vmatprep.subr.mxu0 0.0
        %832 = vmatpush1.msra.mxu0 0.0
        %833 = vmatprep.subr.mxu0 0.0
        %834 = vmatpush1.msra.mxu0 0.0
        %835 = vmatprep.subr.mxu0 0.0
        %836 = vmatpush1.msra.mxu0 0.0
        %837 = vmatprep.subr.mxu0 0.0
        %838 = vmatpush1.msra.mxu0 0.0
        %839 = vmatprep.subr.mxu0 0.0
        %840 = vmatpush1.msra.mxu0 0.0
        %841 = vmatprep.subr.mxu0 0.0
        %842 = vmatpush1.msra.mxu0 0.0
        %843 = vmatprep.subr.mxu0 0.0
        %844 = vmatpush1.msra.mxu0 0.0
        %845 = vmatprep.subr.mxu0 0.0
        %846 = vmatpush1.msra.mxu0 0.0
        %847 = vmatprep.subr.mxu0 0.0
        %848 = vmatpush1.msra.mxu0 0.0
        %849 = vmatprep.subr.mxu0 0.0
        %850 = vmatpush1.msra.mxu0 0.0
        %851 = vmatprep.subr.mxu0 0.0
        %852 = vmatpush1.msra.mxu0 0.0
        %853 = vmatprep.subr.mxu0 0.0
        %854 = vmatpush1.msra.mxu0 0.0
        %855 = vmatprep.subr.mxu0 0.0
        %856 = vmatpush1.msra.mxu0 0.0
        %857 = vmatprep.subr.mxu0 0.0
        %858 = vmatpush1.msra.mxu0 0.0
        %859 = vmatprep.subr.mxu0 0.0
        %860 = vmatpush1.msra.mxu0 0.0
        %861 = vmatprep.subr.mxu0 0.0
        %862 = vmatpush1.msra.mxu0 0.0
        %863 = vmatprep.subr.mxu0 0.0
        %864 = vmatpush1.msra.mxu0 0.0
        %865 = vmatprep.subr.mxu0 0.0
        %866 = vmatpush1.msra.mxu0 0.0
        %867 = vmatprep.subr.mxu0 0.0
        %868 = vmatpush1.msra.mxu0 0.0
        %869 = vmatprep.subr.mxu0 0.0
        %870 = vmatpush1.msra.mxu0 0.0
        %871 = vmatprep.subr.mxu0 0.0
        %872 = vmatpush1.msra.mxu0 0.0
        %873 = vmatprep.subr.mxu0 0.0
        %874 = vmatpush1.msra.mxu0 0.0
        %875 = vmatprep.subr.mxu0 0.0
        %876 = vmatpush1.msra.mxu0 0.0
        %877 = vmatprep.subr.mxu0 0.0
        %878 = vmatpush1.msra.mxu0 0.0
        %879 = vmatprep.subr.mxu0 0.0
        %880 = vmatpush1.msra.mxu0 0.0
        %881 = vmatprep.mubr.f32.mxu0 0.0
        %882 = vmatmul.mubr.f32.gmra.mrb[0].mxu0 %v806
        %v883 = vpop.f32.mrb[0].mxu0
        %v884 = vadd.f32 0.0, %v883
        %v885 = vpop.f32.mrb[0].mxu0
        %886 = vmatprep.mubr.f32.mxu0 0.0
        %887 = vmatmul.mubr.f32.gmra.mrb[0].mxu0 %v809
        %v888 = vpop.f32.mrb[0].mxu0
        %v889 = vadd.f32 0.0, %v888
        %v890 = vpop.f32.mrb[0].mxu0
        %891 = vmatprep.mubr.f32.mxu0 0.0
        %892 = vmatmul.mubr.f32.gmra.mrb[0].mxu0 %v812
        %v893 = vpop.f32.mrb[0].mxu0
        %v894 = vadd.f32 0.0, %v893
        %v895 = vpop.f32.mrb[0].mxu0
        %896 = vmatprep.mubr.f32.mxu0 0.0
        %897 = vmatmul.mubr.f32.gmra.mrb[0].mxu0 %v815
        %v898 = vpop.f32.mrb[0].mxu0
        %v899 = vadd.f32 0.0, %v898
        %v900 = vpop.f32.mrb[0].mxu0
        %901 = vdwg.mxu0
        %v902 = vld [vmem:[%s698] sm:$0xff]
        %v903 = vld [vmem:[%s698 + $0x8] sm:$0xff]
        %v904 = vld [vmem:[%s698 + $0x10] sm:$0xff]
        %v905 = vld [vmem:[%s698 + $0x18] sm:$0xff]
        %v906 = vld [vmem:[%s5] sm:$0xff]
        %v908 = vsel %vm804, %v902, 0
        %v911 = vsel %vm804, %v903, 0
        %v914 = vsel %vm804, %v904, 0
        %v917 = vsel %vm804, %v905, 0
        %919 = vmatprep.subr.mxu0 0.0
        %920 = vmatpush1.msra.mxu0 %v906
        %921 = vmatprep.subr.mxu0 0.0
        %922 = vmatpush1.msra.mxu0 0.0
        %923 = vmatprep.subr.mxu0 0.0
        %924 = vmatpush1.msra.mxu0 0.0
        %925 = vmatprep.subr.mxu0 0.0
        %926 = vmatpush1.msra.mxu0 0.0
        %927 = vmatprep.subr.mxu0 0.0
        %928 = vmatpush1.msra.mxu0 0.0
        %929 = vmatprep.subr.mxu0 0.0
        %930 = vmatpush1.msra.mxu0 0.0
        %931 = vmatprep.subr.mxu0 0.0
        %932 = vmatpush1.msra.mxu0 0.0
        %933 = vmatprep.subr.mxu0 0.0
        %934 = vmatpush1.msra.mxu0 0.0
        %935 = vmatprep.subr.mxu0 0.0
        %936 = vmatpush1.msra.mxu0 0.0
        %937 = vmatprep.subr.mxu0 0.0
        %938 = vmatpush1.msra.mxu0 0.0
        %939 = vmatprep.subr.mxu0 0.0
        %940 = vmatpush1.msra.mxu0 0.0
        %941 = vmatprep.subr.mxu0 0.0
        %942 = vmatpush1.msra.mxu0 0.0
        %943 = vmatprep.subr.mxu0 0.0
        %944 = vmatpush1.msra.mxu0 0.0
        %945 = vmatprep.subr.mxu0 0.0
        %946 = vmatpush1.msra.mxu0 0.0
        %947 = vmatprep.subr.mxu0 0.0
        %948 = vmatpush1.msra.mxu0 0.0
        %949 = vmatprep.subr.mxu0 0.0
        %950 = vmatpush1.msra.mxu0 0.0
        %951 = vmatprep.subr.mxu0 0.0
        %952 = vmatpush1.msra.mxu0 0.0
        %953 = vmatprep.subr.mxu0 0.0
        %954 = vmatpush1.msra.mxu0 0.0
        %955 = vmatprep.subr.mxu0 0.0
        %956 = vmatpush1.msra.mxu0 0.0
        %957 = vmatprep.subr.mxu0 0.0
        %958 = vmatpush1.msra.mxu0 0.0
        %959 = vmatprep.subr.mxu0 0.0
        %960 = vmatpush1.msra.mxu0 0.0
        %961 = vmatprep.subr.mxu0 0.0
        %962 = vmatpush1.msra.mxu0 0.0
        %963 = vmatprep.subr.mxu0 0.0
        %964 = vmatpush1.msra.mxu0 0.0
        %965 = vmatprep.subr.mxu0 0.0
        %966 = vmatpush1.msra.mxu0 0.0
        %967 = vmatprep.subr.mxu0 0.0
        %968 = vmatpush1.msra.mxu0 0.0
        %969 = vmatprep.subr.mxu0 0.0
        %970 = vmatpush1.msra.mxu0 0.0
        %971 = vmatprep.subr.mxu0 0.0
        %972 = vmatpush1.msra.mxu0 0.0
        %973 = vmatprep.subr.mxu0 0.0
        %974 = vmatpush1.msra.mxu0 0.0
        %975 = vmatprep.subr.mxu0 0.0
        %976 = vmatpush1.msra.mxu0 0.0
        %977 = vmatprep.subr.mxu0 0.0
        %978 = vmatpush1.msra.mxu0 0.0
        %979 = vmatprep.subr.mxu0 0.0
        %980 = vmatpush1.msra.mxu0 0.0
        %981 = vmatprep.subr.mxu0 0.0
        %982 = vmatpush1.msra.mxu0 0.0
        %983 = vmatprep.mubr.f32.mxu0 0.0
        %984 = vmatmul.mubr.f32.gmra.mrb[0].mxu0 %v908
        %v985 = vpop.f32.mrb[0].mxu0
        %v986 = vadd.f32 0.0, %v985
        %v987 = vpop.f32.mrb[0].mxu0
        %988 = vmatprep.mubr.f32.mxu0 0.0
        %989 = vmatmul.mubr.f32.gmra.mrb[0].mxu0 %v911
        %v990 = vpop.f32.mrb[0].mxu0
        %v991 = vadd.f32 0.0, %v990
        %v992 = vpop.f32.mrb[0].mxu0
        %993 = vmatprep.mubr.f32.mxu0 0.0
        %994 = vmatmul.mubr.f32.gmra.mrb[0].mxu0 %v914
        %v995 = vpop.f32.mrb[0].mxu0
        %v996 = vadd.f32 0.0, %v995
        %v997 = vpop.f32.mrb[0].mxu0
        %998 = vmatprep.mubr.f32.mxu0 0.0
        %999 = vmatmul.mubr.f32.gmra.mrb[0].mxu0 %v917
        %v1000 = vpop.f32.mrb[0].mxu0
        %v1001 = vadd.f32 0.0, %v1000
        %v1002 = vpop.f32.mrb[0].mxu0
        %1003 = vdwg.mxu0
        %v1004 = vld [vmem:[%s706] sm:$0xff]
        %v1005 = vld [vmem:[%s706 + $0x8] sm:$0xff]
        %v1006 = vld [vmem:[%s706 + $0x10] sm:$0xff]
        %v1007 = vld [vmem:[%s706 + $0x18] sm:$0xff]
        %v1008 = vld [vmem:[#allocation9] sm:$0xff]
        %v1010 = vsel %vm804, %v1004, 0
        %v1013 = vsel %vm804, %v1005, 0
        %v1016 = vsel %vm804, %v1006, 0
        %v1019 = vsel %vm804, %v1007, 0
        %1021 = vmatprep.subr.mxu0 0.0
        %1022 = vmatpush1.msra.mxu0 %v1008
        %1023 = vmatprep.subr.mxu0 0.0
        %1024 = vmatpush1.msra.mxu0 0.0
        %1025 = vmatprep.subr.mxu0 0.0
        %1026 = vmatpush1.msra.mxu0 0.0
        %1027 = vmatprep.subr.mxu0 0.0
        %1028 = vmatpush1.msra.mxu0 0.0
        %1029 = vmatprep.subr.mxu0 0.0
        %1030 = vmatpush1.msra.mxu0 0.0
        %1031 = vmatprep.subr.mxu0 0.0
        %1032 = vmatpush1.msra.mxu0 0.0
        %1033 = vmatprep.subr.mxu0 0.0
        %1034 = vmatpush1.msra.mxu0 0.0
        %1035 = vmatprep.subr.mxu0 0.0
        %1036 = vmatpush1.msra.mxu0 0.0
        %1037 = vmatprep.subr.mxu0 0.0
        %1038 = vmatpush1.msra.mxu0 0.0
        %1039 = vmatprep.subr.mxu0 0.0
        %1040 = vmatpush1.msra.mxu0 0.0
        %1041 = vmatprep.subr.mxu0 0.0
        %1042 = vmatpush1.msra.mxu0 0.0
        %1043 = vmatprep.subr.mxu0 0.0
        %1044 = vmatpush1.msra.mxu0 0.0
        %1045 = vmatprep.subr.mxu0 0.0
        %1046 = vmatpush1.msra.mxu0 0.0
        %1047 = vmatprep.subr.mxu0 0.0
        %1048 = vmatpush1.msra.mxu0 0.0
        %1049 = vmatprep.subr.mxu0 0.0
        %1050 = vmatpush1.msra.mxu0 0.0
        %1051 = vmatprep.subr.mxu0 0.0
        %1052 = vmatpush1.msra.mxu0 0.0
        %1053 = vmatprep.subr.mxu0 0.0
        %1054 = vmatpush1.msra.mxu0 0.0
        %1055 = vmatprep.subr.mxu0 0.0
        %1056 = vmatpush1.msra.mxu0 0.0
        %1057 = vmatprep.subr.mxu0 0.0
        %1058 = vmatpush1.msra.mxu0 0.0
        %1059 = vmatprep.subr.mxu0 0.0
        %1060 = vmatpush1.msra.mxu0 0.0
        %1061 = vmatprep.subr.mxu0 0.0
        %1062 = vmatpush1.msra.mxu0 0.0
        %1063 = vmatprep.subr.mxu0 0.0
        %1064 = vmatpush1.msra.mxu0 0.0
        %1065 = vmatprep.subr.mxu0 0.0
        %1066 = vmatpush1.msra.mxu0 0.0
        %1067 = vmatprep.subr.mxu0 0.0
        %1068 = vmatpush1.msra.mxu0 0.0
        %1069 = vmatprep.subr.mxu0 0.0
        %1070 = vmatpush1.msra.mxu0 0.0
        %1071 = vmatprep.subr.mxu0 0.0
        %1072 = vmatpush1.msra.mxu0 0.0
        %1073 = vmatprep.subr.mxu0 0.0
        %1074 = vmatpush1.msra.mxu0 0.0
        %1075 = vmatprep.subr.mxu0 0.0
        %1076 = vmatpush1.msra.mxu0 0.0
        %1077 = vmatprep.subr.mxu0 0.0
        %1078 = vmatpush1.msra.mxu0 0.0
        %1079 = vmatprep.subr.mxu0 0.0
        %1080 = vmatpush1.msra.mxu0 0.0
        %1081 = vmatprep.subr.mxu0 0.0
        %1082 = vmatpush1.msra.mxu0 0.0
        %1083 = vmatprep.subr.mxu0 0.0
        %1084 = vmatpush1.msra.mxu0 0.0
        %1085 = vmatprep.mubr.f32.mxu0 0.0
        %1086 = vmatmul.mubr.f32.gmra.mrb[0].mxu0 %v1010
        %v1087 = vpop.f32.mrb[0].mxu0
        %v1088 = vadd.f32 0.0, %v1087
        %v1089 = vpop.f32.mrb[0].mxu0
        %1090 = vmatprep.mubr.f32.mxu0 0.0
        %1091 = vmatmul.mubr.f32.gmra.mrb[0].mxu0 %v1013
        %v1092 = vpop.f32.mrb[0].mxu0
        %v1093 = vadd.f32 0.0, %v1092
        %v1094 = vpop.f32.mrb[0].mxu0
        %1095 = vmatprep.mubr.f32.mxu0 0.0
        %1096 = vmatmul.mubr.f32.gmra.mrb[0].mxu0 %v1016
        %v1097 = vpop.f32.mrb[0].mxu0
        %v1098 = vadd.f32 0.0, %v1097
        %v1099 = vpop.f32.mrb[0].mxu0
        %1100 = vmatprep.mubr.f32.mxu0 0.0
        %1101 = vmatmul.mubr.f32.gmra.mrb[0].mxu0 %v1019
        %v1102 = vpop.f32.mrb[0].mxu0
        %v1103 = vadd.f32 0.0, %v1102
        %v1104 = vpop.f32.mrb[0].mxu0
        %1105 = vdwg.mxu0
        %v1107 = vsel %vm804, %v884, 0
        %v1110 = vsel %vm804, %v986, 0
        %1112 = vmatprep.subr.mxu0 0.0
        %1113 = vmatpush1.xpose.msra.mxu0 %v1110
        %1114 = vmatprep.subr.mxu0 0.0
        %1115 = vmatpush1.xpose.msra.mxu0 0.0
        %1116 = vmatprep.subr.mxu0 0.0
        %1117 = vmatpush1.xpose.msra.mxu0 0.0
        %1118 = vmatprep.subr.mxu0 0.0
        %1119 = vmatpush1.xpose.msra.mxu0 0.0
        %1120 = vmatprep.subr.mxu0 0.0
        %1121 = vmatpush1.xpose.msra.mxu0 0.0
        %1122 = vmatprep.subr.mxu0 0.0
        %1123 = vmatpush1.xpose.msra.mxu0 0.0
        %1124 = vmatprep.subr.mxu0 0.0
        %1125 = vmatpush1.xpose.msra.mxu0 0.0
        %1126 = vmatprep.subr.mxu0 0.0
        %1127 = vmatpush1.xpose.msra.mxu0 0.0
        %1128 = vmatprep.subr.mxu0 0.0
        %1129 = vmatpush1.xpose.msra.mxu0 0.0
        %1130 = vmatprep.subr.mxu0 0.0
        %1131 = vmatpush1.xpose.msra.mxu0 0.0
        %1132 = vmatprep.subr.mxu0 0.0
        %1133 = vmatpush1.xpose.msra.mxu0 0.0
        %1134 = vmatprep.subr.mxu0 0.0
        %1135 = vmatpush1.xpose.msra.mxu0 0.0
        %1136 = vmatprep.subr.mxu0 0.0
        %1137 = vmatpush1.xpose.msra.mxu0 0.0
        %1138 = vmatprep.subr.mxu0 0.0
        %1139 = vmatpush1.xpose.msra.mxu0 0.0
        %1140 = vmatprep.subr.mxu0 0.0
        %1141 = vmatpush1.xpose.msra.mxu0 0.0
        %1142 = vmatprep.subr.mxu0 0.0
        %1143 = vmatpush1.xpose.msra.mxu0 0.0
        %1144 = vmatprep.subr.mxu0 0.0
        %1145 = vmatpush1.xpose.msra.mxu0 0.0
        %1146 = vmatprep.subr.mxu0 0.0
        %1147 = vmatpush1.xpose.msra.mxu0 0.0
        %1148 = vmatprep.subr.mxu0 0.0
        %1149 = vmatpush1.xpose.msra.mxu0 0.0
        %1150 = vmatprep.subr.mxu0 0.0
        %1151 = vmatpush1.xpose.msra.mxu0 0.0
        %1152 = vmatprep.subr.mxu0 0.0
        %1153 = vmatpush1.xpose.msra.mxu0 0.0
        %1154 = vmatprep.subr.mxu0 0.0
        %1155 = vmatpush1.xpose.msra.mxu0 0.0
        %1156 = vmatprep.subr.mxu0 0.0
        %1157 = vmatpush1.xpose.msra.mxu0 0.0
        %1158 = vmatprep.subr.mxu0 0.0
        %1159 = vmatpush1.xpose.msra.mxu0 0.0
        %1160 = vmatprep.subr.mxu0 0.0
        %1161 = vmatpush1.xpose.msra.mxu0 0.0
        %1162 = vmatprep.subr.mxu0 0.0
        %1163 = vmatpush1.xpose.msra.mxu0 0.0
        %1164 = vmatprep.subr.mxu0 0.0
        %1165 = vmatpush1.xpose.msra.mxu0 0.0
        %1166 = vmatprep.subr.mxu0 0.0
        %1167 = vmatpush1.xpose.msra.mxu0 0.0
        %1168 = vmatprep.subr.mxu0 0.0
        %1169 = vmatpush1.xpose.msra.mxu0 0.0
        %1170 = vmatprep.subr.mxu0 0.0
        %1171 = vmatpush1.xpose.msra.mxu0 0.0
        %1172 = vmatprep.subr.mxu0 0.0
        %1173 = vmatpush1.xpose.msra.mxu0 0.0
        %1174 = vmatprep.subr.mxu0 0.0
        %1175 = vmatpush1.xpose.msra.mxu0 0.0
        %1176 = vmatprep.mubr.f32.mxu0 0.0
        %1177 = vmatmul.mubr.f32.gmra.mrb[0].mxu0 %v1107
        %v1178 = vpop.f32.mrb[0].mxu0
        %v1179 = vadd.f32 0.0, %v1178
        %v1180 = vpop.f32.mrb[0].mxu0
        %1181 = vdwg.mxu0
        %v1183 = vsel %vm804, %v889, 0
        %v1186 = vsel %vm804, %v991, 0
        %1188 = vmatprep.subr.mxu0 0.0
        %1189 = vmatpush1.xpose.msra.mxu0 %v1186
        %1190 = vmatprep.subr.mxu0 0.0
        %1191 = vmatpush1.xpose.msra.mxu0 0.0
        %1192 = vmatprep.subr.mxu0 0.0
        %1193 = vmatpush1.xpose.msra.mxu0 0.0
        %1194 = vmatprep.subr.mxu0 0.0
        %1195 = vmatpush1.xpose.msra.mxu0 0.0
        %1196 = vmatprep.subr.mxu0 0.0
        %1197 = vmatpush1.xpose.msra.mxu0 0.0
        %1198 = vmatprep.subr.mxu0 0.0
        %1199 = vmatpush1.xpose.msra.mxu0 0.0
        %1200 = vmatprep.subr.mxu0 0.0
        %1201 = vmatpush1.xpose.msra.mxu0 0.0
        %1202 = vmatprep.subr.mxu0 0.0
        %1203 = vmatpush1.xpose.msra.mxu0 0.0
        %1204 = vmatprep.subr.mxu0 0.0
        %1205 = vmatpush1.xpose.msra.mxu0 0.0
        %1206 = vmatprep.subr.mxu0 0.0
        %1207 = vmatpush1.xpose.msra.mxu0 0.0
        %1208 = vmatprep.subr.mxu0 0.0
        %1209 = vmatpush1.xpose.msra.mxu0 0.0
        %1210 = vmatprep.subr.mxu0 0.0
        %1211 = vmatpush1.xpose.msra.mxu0 0.0
        %1212 = vmatprep.subr.mxu0 0.0
        %1213 = vmatpush1.xpose.msra.mxu0 0.0
        %1214 = vmatprep.subr.mxu0 0.0
        %1215 = vmatpush1.xpose.msra.mxu0 0.0
        %1216 = vmatprep.subr.mxu0 0.0
        %1217 = vmatpush1.xpose.msra.mxu0 0.0
        %1218 = vmatprep.subr.mxu0 0.0
        %1219 = vmatpush1.xpose.msra.mxu0 0.0
        %1220 = vmatprep.subr.mxu0 0.0
        %1221 = vmatpush1.xpose.msra.mxu0 0.0
        %1222 = vmatprep.subr.mxu0 0.0
        %1223 = vmatpush1.xpose.msra.mxu0 0.0
        %1224 = vmatprep.subr.mxu0 0.0
        %1225 = vmatpush1.xpose.msra.mxu0 0.0
        %1226 = vmatprep.subr.mxu0 0.0
        %1227 = vmatpush1.xpose.msra.mxu0 0.0
        %1228 = vmatprep.subr.mxu0 0.0
        %1229 = vmatpush1.xpose.msra.mxu0 0.0
        %1230 = vmatprep.subr.mxu0 0.0
        %1231 = vmatpush1.xpose.msra.mxu0 0.0
        %1232 = vmatprep.subr.mxu0 0.0
        %1233 = vmatpush1.xpose.msra.mxu0 0.0
        %1234 = vmatprep.subr.mxu0 0.0
        %1235 = vmatpush1.xpose.msra.mxu0 0.0
        %1236 = vmatprep.subr.mxu0 0.0
        %1237 = vmatpush1.xpose.msra.mxu0 0.0
        %1238 = vmatprep.subr.mxu0 0.0
        %1239 = vmatpush1.xpose.msra.mxu0 0.0
        %1240 = vmatprep.subr.mxu0 0.0
        %1241 = vmatpush1.xpose.msra.mxu0 0.0
        %1242 = vmatprep.subr.mxu0 0.0
        %1243 = vmatpush1.xpose.msra.mxu0 0.0
        %1244 = vmatprep.subr.mxu0 0.0
        %1245 = vmatpush1.xpose.msra.mxu0 0.0
        %1246 = vmatprep.subr.mxu0 0.0
        %1247 = vmatpush1.xpose.msra.mxu0 0.0
        %1248 = vmatprep.subr.mxu0 0.0
        %1249 = vmatpush1.xpose.msra.mxu0 0.0
        %1250 = vmatprep.subr.mxu0 0.0
        %1251 = vmatpush1.xpose.msra.mxu0 0.0
        %1252 = vmatprep.mubr.f32.mxu0 0.0
        %1253 = vmatmul.mubr.f32.gmra.mrb[0].mxu0 %v1183
        %v1254 = vpop.f32.mrb[0].mxu0
        %v1255 = vadd.f32 0.0, %v1254
        %v1256 = vpop.f32.mrb[0].mxu0
        %1257 = vdwg.mxu0
        %v1259 = vsel %vm804, %v894, 0
        %v1262 = vsel %vm804, %v996, 0
        %1264 = vmatprep.subr.mxu0 0.0
        %1265 = vmatpush1.xpose.msra.mxu0 %v1262
        %1266 = vmatprep.subr.mxu0 0.0
        %1267 = vmatpush1.xpose.msra.mxu0 0.0
        %1268 = vmatprep.subr.mxu0 0.0
        %1269 = vmatpush1.xpose.msra.mxu0 0.0
        %1270 = vmatprep.subr.mxu0 0.0
        %1271 = vmatpush1.xpose.msra.mxu0 0.0
        %1272 = vmatprep.subr.mxu0 0.0
        %1273 = vmatpush1.xpose.msra.mxu0 0.0
        %1274 = vmatprep.subr.mxu0 0.0
        %1275 = vmatpush1.xpose.msra.mxu0 0.0
        %1276 = vmatprep.subr.mxu0 0.0
        %1277 = vmatpush1.xpose.msra.mxu0 0.0
        %1278 = vmatprep.subr.mxu0 0.0
        %1279 = vmatpush1.xpose.msra.mxu0 0.0
        %1280 = vmatprep.subr.mxu0 0.0
        %1281 = vmatpush1.xpose.msra.mxu0 0.0
        %1282 = vmatprep.subr.mxu0 0.0
        %1283 = vmatpush1.xpose.msra.mxu0 0.0
        %1284 = vmatprep.subr.mxu0 0.0
        %1285 = vmatpush1.xpose.msra.mxu0 0.0
        %1286 = vmatprep.subr.mxu0 0.0
        %1287 = vmatpush1.xpose.msra.mxu0 0.0
        %1288 = vmatprep.subr.mxu0 0.0
        %1289 = vmatpush1.xpose.msra.mxu0 0.0
        %1290 = vmatprep.subr.mxu0 0.0
        %1291 = vmatpush1.xpose.msra.mxu0 0.0
        %1292 = vmatprep.subr.mxu0 0.0
        %1293 = vmatpush1.xpose.msra.mxu0 0.0
        %1294 = vmatprep.subr.mxu0 0.0
        %1295 = vmatpush1.xpose.msra.mxu0 0.0
        %1296 = vmatprep.subr.mxu0 0.0
        %1297 = vmatpush1.xpose.msra.mxu0 0.0
        %1298 = vmatprep.subr.mxu0 0.0
        %1299 = vmatpush1.xpose.msra.mxu0 0.0
        %1300 = vmatprep.subr.mxu0 0.0
        %1301 = vmatpush1.xpose.msra.mxu0 0.0
        %1302 = vmatprep.subr.mxu0 0.0
        %1303 = vmatpush1.xpose.msra.mxu0 0.0
        %1304 = vmatprep.subr.mxu0 0.0
        %1305 = vmatpush1.xpose.msra.mxu0 0.0
        %1306 = vmatprep.subr.mxu0 0.0
        %1307 = vmatpush1.xpose.msra.mxu0 0.0
        %1308 = vmatprep.subr.mxu0 0.0
        %1309 = vmatpush1.xpose.msra.mxu0 0.0
        %1310 = vmatprep.subr.mxu0 0.0
        %1311 = vmatpush1.xpose.msra.mxu0 0.0
        %1312 = vmatprep.subr.mxu0 0.0
        %1313 = vmatpush1.xpose.msra.mxu0 0.0
        %1314 = vmatprep.subr.mxu0 0.0
        %1315 = vmatpush1.xpose.msra.mxu0 0.0
        %1316 = vmatprep.subr.mxu0 0.0
        %1317 = vmatpush1.xpose.msra.mxu0 0.0
        %1318 = vmatprep.subr.mxu0 0.0
        %1319 = vmatpush1.xpose.msra.mxu0 0.0
        %1320 = vmatprep.subr.mxu0 0.0
        %1321 = vmatpush1.xpose.msra.mxu0 0.0
        %1322 = vmatprep.subr.mxu0 0.0
        %1323 = vmatpush1.xpose.msra.mxu0 0.0
        %1324 = vmatprep.subr.mxu0 0.0
        %1325 = vmatpush1.xpose.msra.mxu0 0.0
        %1326 = vmatprep.subr.mxu0 0.0
        %1327 = vmatpush1.xpose.msra.mxu0 0.0
        %1328 = vmatprep.mubr.f32.mxu0 0.0
        %1329 = vmatmul.mubr.f32.gmra.mrb[0].mxu0 %v1259
        %v1330 = vpop.f32.mrb[0].mxu0
        %v1331 = vadd.f32 0.0, %v1330
        %v1332 = vpop.f32.mrb[0].mxu0
        %1333 = vdwg.mxu0
        %v1335 = vsel %vm804, %v899, 0
        %v1338 = vsel %vm804, %v1001, 0
        %1340 = vmatprep.subr.mxu0 0.0
        %1341 = vmatpush1.xpose.msra.mxu0 %v1338
        %1342 = vmatprep.subr.mxu0 0.0
        %1343 = vmatpush1.xpose.msra.mxu0 0.0
        %1344 = vmatprep.subr.mxu0 0.0
        %1345 = vmatpush1.xpose.msra.mxu0 0.0
        %1346 = vmatprep.subr.mxu0 0.0
        %1347 = vmatpush1.xpose.msra.mxu0 0.0
        %1348 = vmatprep.subr.mxu0 0.0
        %1349 = vmatpush1.xpose.msra.mxu0 0.0
        %1350 = vmatprep.subr.mxu0 0.0
        %1351 = vmatpush1.xpose.msra.mxu0 0.0
        %1352 = vmatprep.subr.mxu0 0.0
        %1353 = vmatpush1.xpose.msra.mxu0 0.0
        %1354 = vmatprep.subr.mxu0 0.0
        %1355 = vmatpush1.xpose.msra.mxu0 0.0
        %1356 = vmatprep.subr.mxu0 0.0
        %1357 = vmatpush1.xpose.msra.mxu0 0.0
        %1358 = vmatprep.subr.mxu0 0.0
        %1359 = vmatpush1.xpose.msra.mxu0 0.0
        %1360 = vmatprep.subr.mxu0 0.0
        %1361 = vmatpush1.xpose.msra.mxu0 0.0
        %1362 = vmatprep.subr.mxu0 0.0
        %1363 = vmatpush1.xpose.msra.mxu0 0.0
        %1364 = vmatprep.subr.mxu0 0.0
        %1365 = vmatpush1.xpose.msra.mxu0 0.0
        %1366 = vmatprep.subr.mxu0 0.0
        %1367 = vmatpush1.xpose.msra.mxu0 0.0
        %1368 = vmatprep.subr.mxu0 0.0
        %1369 = vmatpush1.xpose.msra.mxu0 0.0
        %1370 = vmatprep.subr.mxu0 0.0
        %1371 = vmatpush1.xpose.msra.mxu0 0.0
        %1372 = vmatprep.subr.mxu0 0.0
        %1373 = vmatpush1.xpose.msra.mxu0 0.0
        %1374 = vmatprep.subr.mxu0 0.0
        %1375 = vmatpush1.xpose.msra.mxu0 0.0
        %1376 = vmatprep.subr.mxu0 0.0
        %1377 = vmatpush1.xpose.msra.mxu0 0.0
        %1378 = vmatprep.subr.mxu0 0.0
        %1379 = vmatpush1.xpose.msra.mxu0 0.0
        %1380 = vmatprep.subr.mxu0 0.0
        %1381 = vmatpush1.xpose.msra.mxu0 0.0
        %1382 = vmatprep.subr.mxu0 0.0
        %1383 = vmatpush1.xpose.msra.mxu0 0.0
        %1384 = vmatprep.subr.mxu0 0.0
        %1385 = vmatpush1.xpose.msra.mxu0 0.0
        %1386 = vmatprep.subr.mxu0 0.0
        %1387 = vmatpush1.xpose.msra.mxu0 0.0
        %1388 = vmatprep.subr.mxu0 0.0
        %1389 = vmatpush1.xpose.msra.mxu0 0.0
        %1390 = vmatprep.subr.mxu0 0.0
        %1391 = vmatpush1.xpose.msra.mxu0 0.0
        %1392 = vmatprep.subr.mxu0 0.0
        %1393 = vmatpush1.xpose.msra.mxu0 0.0
        %1394 = vmatprep.subr.mxu0 0.0
        %1395 = vmatpush1.xpose.msra.mxu0 0.0
        %1396 = vmatprep.subr.mxu0 0.0
        %1397 = vmatpush1.xpose.msra.mxu0 0.0
        %1398 = vmatprep.subr.mxu0 0.0
        %1399 = vmatpush1.xpose.msra.mxu0 0.0
        %1400 = vmatprep.subr.mxu0 0.0
        %1401 = vmatpush1.xpose.msra.mxu0 0.0
        %1402 = vmatprep.subr.mxu0 0.0
        %1403 = vmatpush1.xpose.msra.mxu0 0.0
        %1404 = vmatprep.mubr.f32.mxu0 0.0
        %1405 = vmatmul.mubr.f32.gmra.mrb[0].mxu0 %v1335
        %v1406 = vpop.f32.mrb[0].mxu0
        %v1407 = vadd.f32 0.0, %v1406
        %v1408 = vpop.f32.mrb[0].mxu0
        %1409 = vdwg.mxu0
        %v1410 = vsel %vm804, %v1179, -inf
        %1411 = vmax.xlane.f32.xlu0 %v1410
        %v1412 = vpop.xlane.xlu0 %1411
        %v1413 = vsel %vm804, %v1255, -inf
        %1414 = vmax.xlane.f32.xlu0 %v1413
        %v1415 = vpop.xlane.xlu0 %1414
        %v1416 = vsel %vm804, %v1331, -inf
        %1417 = vmax.xlane.f32.xlu0 %v1416
        %v1418 = vpop.xlane.xlu0 %1417
        %v1419 = vsel %vm804, %v1407, -inf
        %1420 = vmax.xlane.f32.xlu0 %v1419
        %v1421 = vpop.xlane.xlu0 %1420
        %v1422 = vsub.f32 %v1179, %v1412
        %v1423 = vsub.f32 %v1255, %v1415
        %v1424 = vsub.f32 %v1331, %v1418
        %v1425 = vsub.f32 %v1407, %v1421
        %v1426 = vmul.f32 %v1422, 1.442695
        %v1427 = vpow.pop %v1426
        %v1428 = vmul.f32 %v1423, 1.442695
        %v1429 = vpow.pop %v1428
        %v1430 = vmul.f32 %v1424, 1.442695
        %v1431 = vpow.pop %v1430
        %v1432 = vmul.f32 %v1425, 1.442695
        %v1433 = vpow.pop %v1432
        %v1434 = vsel %vm804, %v1427, 0.0
        %1435 = vadd.xlane.f32.xlu0 %v1434
        %v1436 = vpop.xlane.xlu0 %1435
        %v1437 = vsel %vm804, %v1429, 0.0
        %1438 = vadd.xlane.f32.xlu0 %v1437
        %v1439 = vpop.xlane.xlu0 %1438
        %v1440 = vsel %vm804, %v1431, 0.0
        %1441 = vadd.xlane.f32.xlu0 %v1440
        %v1442 = vpop.xlane.xlu0 %1441
        %v1443 = vsel %vm804, %v1433, 0.0
        %1444 = vadd.xlane.f32.xlu0 %v1443
        %v1445 = vpop.xlane.xlu0 %1444
        %v1446 = vrcp.pop %v1436
        %v1447 = vrcp.pop %v1439
        %v1448 = vrcp.pop %v1442
        %v1449 = vrcp.pop %v1445
        %v1450 = vmul.f32 %v1427, %v1446
        %v1451 = vmul.f32 %v1429, %v1447
        %v1452 = vmul.f32 %v1431, %v1448
        %v1453 = vmul.f32 %v1433, %v1449
        %v1455 = vsel %vm804, %v1450, 0
        %1457 = vmatprep.subr.mxu0 0.0
        %1458 = vmatpush1.msra.mxu0 %v1088
        %1459 = vmatprep.subr.mxu0 0.0
        %1460 = vmatpush1.msra.mxu0 0.0
        %1461 = vmatprep.subr.mxu0 0.0
        %1462 = vmatpush1.msra.mxu0 0.0
        %1463 = vmatprep.subr.mxu0 0.0
        %1464 = vmatpush1.msra.mxu0 0.0
        %1465 = vmatprep.subr.mxu0 0.0
        %1466 = vmatpush1.msra.mxu0 0.0
        %1467 = vmatprep.subr.mxu0 0.0
        %1468 = vmatpush1.msra.mxu0 0.0
        %1469 = vmatprep.subr.mxu0 0.0
        %1470 = vmatpush1.msra.mxu0 0.0
        %1471 = vmatprep.subr.mxu0 0.0
        %1472 = vmatpush1.msra.mxu0 0.0
        %1473 = vmatprep.subr.mxu0 0.0
        %1474 = vmatpush1.msra.mxu0 0.0
        %1475 = vmatprep.subr.mxu0 0.0
        %1476 = vmatpush1.msra.mxu0 0.0
        %1477 = vmatprep.subr.mxu0 0.0
        %1478 = vmatpush1.msra.mxu0 0.0
        %1479 = vmatprep.subr.mxu0 0.0
        %1480 = vmatpush1.msra.mxu0 0.0
        %1481 = vmatprep.subr.mxu0 0.0
        %1482 = vmatpush1.msra.mxu0 0.0
        %1483 = vmatprep.subr.mxu0 0.0
        %1484 = vmatpush1.msra.mxu0 0.0
        %1485 = vmatprep.subr.mxu0 0.0
        %1486 = vmatpush1.msra.mxu0 0.0
        %1487 = vmatprep.subr.mxu0 0.0
        %1488 = vmatpush1.msra.mxu0 0.0
        %1489 = vmatprep.subr.mxu0 0.0
        %1490 = vmatpush1.msra.mxu0 0.0
        %1491 = vmatprep.subr.mxu0 0.0
        %1492 = vmatpush1.msra.mxu0 0.0
        %1493 = vmatprep.subr.mxu0 0.0
        %1494 = vmatpush1.msra.mxu0 0.0
        %1495 = vmatprep.subr.mxu0 0.0
        %1496 = vmatpush1.msra.mxu0 0.0
        %1497 = vmatprep.subr.mxu0 0.0
        %1498 = vmatpush1.msra.mxu0 0.0
        %1499 = vmatprep.subr.mxu0 0.0
        %1500 = vmatpush1.msra.mxu0 0.0
        %1501 = vmatprep.subr.mxu0 0.0
        %1502 = vmatpush1.msra.mxu0 0.0
        %1503 = vmatprep.subr.mxu0 0.0
        %1504 = vmatpush1.msra.mxu0 0.0
        %1505 = vmatprep.subr.mxu0 0.0
        %1506 = vmatpush1.msra.mxu0 0.0
        %1507 = vmatprep.subr.mxu0 0.0
        %1508 = vmatpush1.msra.mxu0 0.0
        %1509 = vmatprep.subr.mxu0 0.0
        %1510 = vmatpush1.msra.mxu0 0.0
        %1511 = vmatprep.subr.mxu0 0.0
        %1512 = vmatpush1.msra.mxu0 0.0
        %1513 = vmatprep.subr.mxu0 0.0
        %1514 = vmatpush1.msra.mxu0 0.0
        %1515 = vmatprep.subr.mxu0 0.0
        %1516 = vmatpush1.msra.mxu0 0.0
        %1517 = vmatprep.subr.mxu0 0.0
        %1518 = vmatpush1.msra.mxu0 0.0
        %1519 = vmatprep.subr.mxu0 0.0
        %1520 = vmatpush1.msra.mxu0 0.0
        %1521 = vmatprep.mubr.f32.mxu0 0.0
        %1522 = vmatmul.mubr.f32.gmra.mrb[0].mxu0 %v1455
        %v1523 = vpop.f32.mrb[0].mxu0
        %v1524 = vadd.f32 0.0, %v1523
        %v1525 = vpop.f32.mrb[0].mxu0
        %1526 = vdwg.mxu0
        %v1528 = vsel %vm804, %v1451, 0
        %1530 = vmatprep.subr.mxu0 0.0
        %1531 = vmatpush1.msra.mxu0 %v1093
        %1532 = vmatprep.subr.mxu0 0.0
        %1533 = vmatpush1.msra.mxu0 0.0
        %1534 = vmatprep.subr.mxu0 0.0
        %1535 = vmatpush1.msra.mxu0 0.0
        %1536 = vmatprep.subr.mxu0 0.0
        %1537 = vmatpush1.msra.mxu0 0.0
        %1538 = vmatprep.subr.mxu0 0.0
        %1539 = vmatpush1.msra.mxu0 0.0
        %1540 = vmatprep.subr.mxu0 0.0
        %1541 = vmatpush1.msra.mxu0 0.0
        %1542 = vmatprep.subr.mxu0 0.0
        %1543 = vmatpush1.msra.mxu0 0.0
        %1544 = vmatprep.subr.mxu0 0.0
        %1545 = vmatpush1.msra.mxu0 0.0
        %1546 = vmatprep.subr.mxu0 0.0
        %1547 = vmatpush1.msra.mxu0 0.0
        %1548 = vmatprep.subr.mxu0 0.0
        %1549 = vmatpush1.msra.mxu0 0.0
        %1550 = vmatprep.subr.mxu0 0.0
        %1551 = vmatpush1.msra.mxu0 0.0
        %1552 = vmatprep.subr.mxu0 0.0
        %1553 = vmatpush1.msra.mxu0 0.0
        %1554 = vmatprep.subr.mxu0 0.0
        %1555 = vmatpush1.msra.mxu0 0.0
        %1556 = vmatprep.subr.mxu0 0.0
        %1557 = vmatpush1.msra.mxu0 0.0
        %1558 = vmatprep.subr.mxu0 0.0
        %1559 = vmatpush1.msra.mxu0 0.0
        %1560 = vmatprep.subr.mxu0 0.0
        %1561 = vmatpush1.msra.mxu0 0.0
        %1562 = vmatprep.subr.mxu0 0.0
        %1563 = vmatpush1.msra.mxu0 0.0
        %1564 = vmatprep.subr.mxu0 0.0
        %1565 = vmatpush1.msra.mxu0 0.0
        %1566 = vmatprep.subr.mxu0 0.0
        %1567 = vmatpush1.msra.mxu0 0.0
        %1568 = vmatprep.subr.mxu0 0.0
        %1569 = vmatpush1.msra.mxu0 0.0
        %1570 = vmatprep.subr.mxu0 0.0
        %1571 = vmatpush1.msra.mxu0 0.0
        %1572 = vmatprep.subr.mxu0 0.0
        %1573 = vmatpush1.msra.mxu0 0.0
        %1574 = vmatprep.subr.mxu0 0.0
        %1575 = vmatpush1.msra.mxu0 0.0
        %1576 = vmatprep.subr.mxu0 0.0
        %1577 = vmatpush1.msra.mxu0 0.0
        %1578 = vmatprep.subr.mxu0 0.0
        %1579 = vmatpush1.msra.mxu0 0.0
        %1580 = vmatprep.subr.mxu0 0.0
        %1581 = vmatpush1.msra.mxu0 0.0
        %1582 = vmatprep.subr.mxu0 0.0
        %1583 = vmatpush1.msra.mxu0 0.0
        %1584 = vmatprep.subr.mxu0 0.0
        %1585 = vmatpush1.msra.mxu0 0.0
        %1586 = vmatprep.subr.mxu0 0.0
        %1587 = vmatpush1.msra.mxu0 0.0
        %1588 = vmatprep.subr.mxu0 0.0
        %1589 = vmatpush1.msra.mxu0 0.0
        %1590 = vmatprep.subr.mxu0 0.0
        %1591 = vmatpush1.msra.mxu0 0.0
        %1592 = vmatprep.subr.mxu0 0.0
        %1593 = vmatpush1.msra.mxu0 0.0
        %1594 = vmatprep.mubr.f32.mxu0 0.0
        %1595 = vmatmul.mubr.f32.gmra.mrb[0].mxu0 %v1528
        %v1596 = vpop.f32.mrb[0].mxu0
        %v1597 = vadd.f32 0.0, %v1596
        %v1598 = vpop.f32.mrb[0].mxu0
        %1599 = vdwg.mxu0
        %v1601 = vsel %vm804, %v1452, 0
        %1603 = vmatprep.subr.mxu0 0.0
        %1604 = vmatpush1.msra.mxu0 %v1098
        %1605 = vmatprep.subr.mxu0 0.0
        %1606 = vmatpush1.msra.mxu0 0.0
        %1607 = vmatprep.subr.mxu0 0.0
        %1608 = vmatpush1.msra.mxu0 0.0
        %1609 = vmatprep.subr.mxu0 0.0
        %1610 = vmatpush1.msra.mxu0 0.0
        %1611 = vmatprep.subr.mxu0 0.0
        %1612 = vmatpush1.msra.mxu0 0.0
        %1613 = vmatprep.subr.mxu0 0.0
        %1614 = vmatpush1.msra.mxu0 0.0
        %1615 = vmatprep.subr.mxu0 0.0
        %1616 = vmatpush1.msra.mxu0 0.0
        %1617 = vmatprep.subr.mxu0 0.0
        %1618 = vmatpush1.msra.mxu0 0.0
        %1619 = vmatprep.subr.mxu0 0.0
        %1620 = vmatpush1.msra.mxu0 0.0
        %1621 = vmatprep.subr.mxu0 0.0
        %1622 = vmatpush1.msra.mxu0 0.0
        %1623 = vmatprep.subr.mxu0 0.0
        %1624 = vmatpush1.msra.mxu0 0.0
        %1625 = vmatprep.subr.mxu0 0.0
        %1626 = vmatpush1.msra.mxu0 0.0
        %1627 = vmatprep.subr.mxu0 0.0
        %1628 = vmatpush1.msra.mxu0 0.0
        %1629 = vmatprep.subr.mxu0 0.0
        %1630 = vmatpush1.msra.mxu0 0.0
        %1631 = vmatprep.subr.mxu0 0.0
        %1632 = vmatpush1.msra.mxu0 0.0
        %1633 = vmatprep.subr.mxu0 0.0
        %1634 = vmatpush1.msra.mxu0 0.0
        %1635 = vmatprep.subr.mxu0 0.0
        %1636 = vmatpush1.msra.mxu0 0.0
        %1637 = vmatprep.subr.mxu0 0.0
        %1638 = vmatpush1.msra.mxu0 0.0
        %1639 = vmatprep.subr.mxu0 0.0
        %1640 = vmatpush1.msra.mxu0 0.0
        %1641 = vmatprep.subr.mxu0 0.0
        %1642 = vmatpush1.msra.mxu0 0.0
        %1643 = vmatprep.subr.mxu0 0.0
        %1644 = vmatpush1.msra.mxu0 0.0
        %1645 = vmatprep.subr.mxu0 0.0
        %1646 = vmatpush1.msra.mxu0 0.0
        %1647 = vmatprep.subr.mxu0 0.0
        %1648 = vmatpush1.msra.mxu0 0.0
        %1649 = vmatprep.subr.mxu0 0.0
        %1650 = vmatpush1.msra.mxu0 0.0
        %1651 = vmatprep.subr.mxu0 0.0
        %1652 = vmatpush1.msra.mxu0 0.0
        %1653 = vmatprep.subr.mxu0 0.0
        %1654 = vmatpush1.msra.mxu0 0.0
        %1655 = vmatprep.subr.mxu0 0.0
        %1656 = vmatpush1.msra.mxu0 0.0
        %1657 = vmatprep.subr.mxu0 0.0
        %1658 = vmatpush1.msra.mxu0 0.0
        %1659 = vmatprep.subr.mxu0 0.0
        %1660 = vmatpush1.msra.mxu0 0.0
        %1661 = vmatprep.subr.mxu0 0.0
        %1662 = vmatpush1.msra.mxu0 0.0
        %1663 = vmatprep.subr.mxu0 0.0
        %1664 = vmatpush1.msra.mxu0 0.0
        %1665 = vmatprep.subr.mxu0 0.0
        %1666 = vmatpush1.msra.mxu0 0.0
        %1667 = vmatprep.mubr.f32.mxu0 0.0
        %1668 = vmatmul.mubr.f32.gmra.mrb[0].mxu0 %v1601
        %v1669 = vpop.f32.mrb[0].mxu0
        %v1670 = vadd.f32 0.0, %v1669
        %v1671 = vpop.f32.mrb[0].mxu0
        %1672 = vdwg.mxu0
        %v1674 = vsel %vm804, %v1453, 0
        %1676 = vmatprep.subr.mxu0 0.0
        %1677 = vmatpush1.msra.mxu0 %v1103
        %1678 = vmatprep.subr.mxu0 0.0
        %1679 = vmatpush1.msra.mxu0 0.0
        %1680 = vmatprep.subr.mxu0 0.0
        %1681 = vmatpush1.msra.mxu0 0.0
        %1682 = vmatprep.subr.mxu0 0.0
        %1683 = vmatpush1.msra.mxu0 0.0
        %1684 = vmatprep.subr.mxu0 0.0
        %1685 = vmatpush1.msra.mxu0 0.0
        %1686 = vmatprep.subr.mxu0 0.0
        %1687 = vmatpush1.msra.mxu0 0.0
        %1688 = vmatprep.subr.mxu0 0.0
        %1689 = vmatpush1.msra.mxu0 0.0
        %1690 = vmatprep.subr.mxu0 0.0
        %1691 = vmatpush1.msra.mxu0 0.0
        %1692 = vmatprep.subr.mxu0 0.0
        %1693 = vmatpush1.msra.mxu0 0.0
        %1694 = vmatprep.subr.mxu0 0.0
        %1695 = vmatpush1.msra.mxu0 0.0
        %1696 = vmatprep.subr.mxu0 0.0
        %1697 = vmatpush1.msra.mxu0 0.0
        %1698 = vmatprep.subr.mxu0 0.0
        %1699 = vmatpush1.msra.mxu0 0.0
        %1700 = vmatprep.subr.mxu0 0.0
        %1701 = vmatpush1.msra.mxu0 0.0
        %1702 = vmatprep.subr.mxu0 0.0
        %1703 = vmatpush1.msra.mxu0 0.0
        %1704 = vmatprep.subr.mxu0 0.0
        %1705 = vmatpush1.msra.mxu0 0.0
        %1706 = vmatprep.subr.mxu0 0.0
        %1707 = vmatpush1.msra.mxu0 0.0
        %1708 = vmatprep.subr.mxu0 0.0
        %1709 = vmatpush1.msra.mxu0 0.0
        %1710 = vmatprep.subr.mxu0 0.0
        %1711 = vmatpush1.msra.mxu0 0.0
        %1712 = vmatprep.subr.mxu0 0.0
        %1713 = vmatpush1.msra.mxu0 0.0
        %1714 = vmatprep.subr.mxu0 0.0
        %1715 = vmatpush1.msra.mxu0 0.0
        %1716 = vmatprep.subr.mxu0 0.0
        %1717 = vmatpush1.msra.mxu0 0.0
        %1718 = vmatprep.subr.mxu0 0.0
        %1719 = vmatpush1.msra.mxu0 0.0
        %1720 = vmatprep.subr.mxu0 0.0
        %1721 = vmatpush1.msra.mxu0 0.0
        %1722 = vmatprep.subr.mxu0 0.0
        %1723 = vmatpush1.msra.mxu0 0.0
        %1724 = vmatprep.subr.mxu0 0.0
        %1725 = vmatpush1.msra.mxu0 0.0
        %1726 = vmatprep.subr.mxu0 0.0
        %1727 = vmatpush1.msra.mxu0 0.0
        %1728 = vmatprep.subr.mxu0 0.0
        %1729 = vmatpush1.msra.mxu0 0.0
        %1730 = vmatprep.subr.mxu0 0.0
        %1731 = vmatpush1.msra.mxu0 0.0
        %1732 = vmatprep.subr.mxu0 0.0
        %1733 = vmatpush1.msra.mxu0 0.0
        %1734 = vmatprep.subr.mxu0 0.0
        %1735 = vmatpush1.msra.mxu0 0.0
        %1736 = vmatprep.subr.mxu0 0.0
        %1737 = vmatpush1.msra.mxu0 0.0
        %1738 = vmatprep.subr.mxu0 0.0
        %1739 = vmatpush1.msra.mxu0 0.0
        %1740 = vmatprep.mubr.f32.mxu0 0.0
        %1741 = vmatmul.mubr.f32.gmra.mrb[0].mxu0 %v1674
        %v1742 = vpop.f32.mrb[0].mxu0
        %v1743 = vadd.f32 0.0, %v1742
        %v1744 = vpop.f32.mrb[0].mxu0
        %1745 = vdwg.mxu0
        %v1746 = vld [vmem:[%s7] sm:$0xff]
        %s1747 = scalar_lea.vmem %s7, 8
        %v1748 = vld [vmem:[%s1747] sm:$0xff]
        %v1750 = vsel %vm804, %v1597, 0
        %1752 = vmatprep.subr.mxu0 0.0
        %1753 = vmatpush1.msra.mxu0 %v1748
        %1754 = vmatprep.subr.mxu0 0.0
        %1755 = vmatpush1.msra.mxu0 0.0
        %1756 = vmatprep.subr.mxu0 0.0
        %1757 = vmatpush1.msra.mxu0 0.0
        %1758 = vmatprep.subr.mxu0 0.0
        %1759 = vmatpush1.msra.mxu0 0.0
        %1760 = vmatprep.subr.mxu0 0.0
        %1761 = vmatpush1.msra.mxu0 0.0
        %1762 = vmatprep.subr.mxu0 0.0
        %1763 = vmatpush1.msra.mxu0 0.0
        %1764 = vmatprep.subr.mxu0 0.0
        %1765 = vmatpush1.msra.mxu0 0.0
        %1766 = vmatprep.subr.mxu0 0.0
        %1767 = vmatpush1.msra.mxu0 0.0
        %1768 = vmatprep.subr.mxu0 0.0
        %1769 = vmatpush1.msra.mxu0 0.0
        %1770 = vmatprep.subr.mxu0 0.0
        %1771 = vmatpush1.msra.mxu0 0.0
        %1772 = vmatprep.subr.mxu0 0.0
        %1773 = vmatpush1.msra.mxu0 0.0
        %1774 = vmatprep.subr.mxu0 0.0
        %1775 = vmatpush1.msra.mxu0 0.0
        %1776 = vmatprep.subr.mxu0 0.0
        %1777 = vmatpush1.msra.mxu0 0.0
        %1778 = vmatprep.subr.mxu0 0.0
        %1779 = vmatpush1.msra.mxu0 0.0
        %1780 = vmatprep.subr.mxu0 0.0
        %1781 = vmatpush1.msra.mxu0 0.0
        %1782 = vmatprep.subr.mxu0 0.0
        %1783 = vmatpush1.msra.mxu0 0.0
        %1784 = vmatprep.subr.mxu0 0.0
        %1785 = vmatpush1.msra.mxu0 0.0
        %1786 = vmatprep.subr.mxu0 0.0
        %1787 = vmatpush1.msra.mxu0 0.0
        %1788 = vmatprep.subr.mxu0 0.0
        %1789 = vmatpush1.msra.mxu0 0.0
        %1790 = vmatprep.subr.mxu0 0.0
        %1791 = vmatpush1.msra.mxu0 0.0
        %1792 = vmatprep.subr.mxu0 0.0
        %1793 = vmatpush1.msra.mxu0 0.0
        %1794 = vmatprep.subr.mxu0 0.0
        %1795 = vmatpush1.msra.mxu0 0.0
        %1796 = vmatprep.subr.mxu0 0.0
        %1797 = vmatpush1.msra.mxu0 0.0
        %1798 = vmatprep.subr.mxu0 0.0
        %1799 = vmatpush1.msra.mxu0 0.0
        %1800 = vmatprep.subr.mxu0 0.0
        %1801 = vmatpush1.msra.mxu0 0.0
        %1802 = vmatprep.subr.mxu0 0.0
        %1803 = vmatpush1.msra.mxu0 0.0
        %1804 = vmatprep.subr.mxu0 0.0
        %1805 = vmatpush1.msra.mxu0 0.0
        %1806 = vmatprep.subr.mxu0 0.0
        %1807 = vmatpush1.msra.mxu0 0.0
        %1808 = vmatprep.subr.mxu0 0.0
        %1809 = vmatpush1.msra.mxu0 0.0
        %1810 = vmatprep.subr.mxu0 0.0
        %1811 = vmatpush1.msra.mxu0 0.0
        %1812 = vmatprep.subr.mxu0 0.0
        %1813 = vmatpush1.msra.mxu0 0.0
        %1814 = vmatprep.subr.mxu0 0.0
        %1815 = vmatpush1.msra.mxu0 0.0
        %1816 = vmatprep.mubr.f32.mxu0 0.0
        %1817 = vmatmul.mubr.f32.gmra.mrb[0].mxu0 %v1750
        %v1818 = vpop.f32.mrb[0].mxu0
        %v1819 = vadd.f32 0.0, %v1818
        %v1820 = vpop.f32.mrb[0].mxu0
        %1821 = vdwg.mxu0
        %v1823 = vsel %vm804, %v1524, 0
        %1825 = vmatprep.subr.mxu0 0.0
        %1826 = vmatpush1.msra.mxu0 %v1746
        %1827 = vmatprep.subr.mxu0 0.0
        %1828 = vmatpush1.msra.mxu0 0.0
        %1829 = vmatprep.subr.mxu0 0.0
        %1830 = vmatpush1.msra.mxu0 0.0
        %1831 = vmatprep.subr.mxu0 0.0
        %1832 = vmatpush1.msra.mxu0 0.0
        %1833 = vmatprep.subr.mxu0 0.0
        %1834 = vmatpush1.msra.mxu0 0.0
        %1835 = vmatprep.subr.mxu0 0.0
        %1836 = vmatpush1.msra.mxu0 0.0
        %1837 = vmatprep.subr.mxu0 0.0
        %1838 = vmatpush1.msra.mxu0 0.0
        %1839 = vmatprep.subr.mxu0 0.0
        %1840 = vmatpush1.msra.mxu0 0.0
        %1841 = vmatprep.subr.mxu0 0.0
        %1842 = vmatpush1.msra.mxu0 0.0
        %1843 = vmatprep.subr.mxu0 0.0
        %1844 = vmatpush1.msra.mxu0 0.0
        %1845 = vmatprep.subr.mxu0 0.0
        %1846 = vmatpush1.msra.mxu0 0.0
        %1847 = vmatprep.subr.mxu0 0.0
        %1848 = vmatpush1.msra.mxu0 0.0
        %1849 = vmatprep.subr.mxu0 0.0
        %1850 = vmatpush1.msra.mxu0 0.0
        %1851 = vmatprep.subr.mxu0 0.0
        %1852 = vmatpush1.msra.mxu0 0.0
        %1853 = vmatprep.subr.mxu0 0.0
        %1854 = vmatpush1.msra.mxu0 0.0
        %1855 = vmatprep.subr.mxu0 0.0
        %1856 = vmatpush1.msra.mxu0 0.0
        %1857 = vmatprep.subr.mxu0 0.0
        %1858 = vmatpush1.msra.mxu0 0.0
        %1859 = vmatprep.subr.mxu0 0.0
        %1860 = vmatpush1.msra.mxu0 0.0
        %1861 = vmatprep.subr.mxu0 0.0
        %1862 = vmatpush1.msra.mxu0 0.0
        %1863 = vmatprep.subr.mxu0 0.0
        %1864 = vmatpush1.msra.mxu0 0.0
        %1865 = vmatprep.subr.mxu0 0.0
        %1866 = vmatpush1.msra.mxu0 0.0
        %1867 = vmatprep.subr.mxu0 0.0
        %1868 = vmatpush1.msra.mxu0 0.0
        %1869 = vmatprep.subr.mxu0 0.0
        %1870 = vmatpush1.msra.mxu0 0.0
        %1871 = vmatprep.subr.mxu0 0.0
        %1872 = vmatpush1.msra.mxu0 0.0
        %1873 = vmatprep.subr.mxu0 0.0
        %1874 = vmatpush1.msra.mxu0 0.0
        %1875 = vmatprep.subr.mxu0 0.0
        %1876 = vmatpush1.msra.mxu0 0.0
        %1877 = vmatprep.subr.mxu0 0.0
        %1878 = vmatpush1.msra.mxu0 0.0
        %1879 = vmatprep.subr.mxu0 0.0
        %1880 = vmatpush1.msra.mxu0 0.0
        %1881 = vmatprep.subr.mxu0 0.0
        %1882 = vmatpush1.msra.mxu0 0.0
        %1883 = vmatprep.subr.mxu0 0.0
        %1884 = vmatpush1.msra.mxu0 0.0
        %1885 = vmatprep.subr.mxu0 0.0
        %1886 = vmatpush1.msra.mxu0 0.0
        %1887 = vmatprep.subr.mxu0 0.0
        %1888 = vmatpush1.msra.mxu0 0.0
        %1889 = vmatprep.mubr.f32.mxu0 0.0
        %1890 = vmatmul.mubr.f32.gmra.mrb[0].mxu0 %v1823
        %v1891 = vpop.f32.mrb[0].mxu0
        %v1892 = vadd.f32 %v1819, %v1891
        %v1893 = vpop.f32.mrb[0].mxu0
        %1894 = vdwg.mxu0
        %s1895 = scalar_lea.vmem %s7, 16
        %v1896 = vld [vmem:[%s1895] sm:$0xff]
        %v1898 = vsel %vm804, %v1670, 0
        %1900 = vmatprep.subr.mxu0 0.0
        %1901 = vmatpush1.msra.mxu0 %v1896
        %1902 = vmatprep.subr.mxu0 0.0
        %1903 = vmatpush1.msra.mxu0 0.0
        %1904 = vmatprep.subr.mxu0 0.0
        %1905 = vmatpush1.msra.mxu0 0.0
        %1906 = vmatprep.subr.mxu0 0.0
        %1907 = vmatpush1.msra.mxu0 0.0
        %1908 = vmatprep.subr.mxu0 0.0
        %1909 = vmatpush1.msra.mxu0 0.0
        %1910 = vmatprep.subr.mxu0 0.0
        %1911 = vmatpush1.msra.mxu0 0.0
        %1912 = vmatprep.subr.mxu0 0.0
        %1913 = vmatpush1.msra.mxu0 0.0
        %1914 = vmatprep.subr.mxu0 0.0
        %1915 = vmatpush1.msra.mxu0 0.0
        %1916 = vmatprep.subr.mxu0 0.0
        %1917 = vmatpush1.msra.mxu0 0.0
        %1918 = vmatprep.subr.mxu0 0.0
        %1919 = vmatpush1.msra.mxu0 0.0
        %1920 = vmatprep.subr.mxu0 0.0
        %1921 = vmatpush1.msra.mxu0 0.0
        %1922 = vmatprep.subr.mxu0 0.0
        %1923 = vmatpush1.msra.mxu0 0.0
        %1924 = vmatprep.subr.mxu0 0.0
        %1925 = vmatpush1.msra.mxu0 0.0
        %1926 = vmatprep.subr.mxu0 0.0
        %1927 = vmatpush1.msra.mxu0 0.0
        %1928 = vmatprep.subr.mxu0 0.0
        %1929 = vmatpush1.msra.mxu0 0.0
        %1930 = vmatprep.subr.mxu0 0.0
        %1931 = vmatpush1.msra.mxu0 0.0
        %1932 = vmatprep.subr.mxu0 0.0
        %1933 = vmatpush1.msra.mxu0 0.0
        %1934 = vmatprep.subr.mxu0 0.0
        %1935 = vmatpush1.msra.mxu0 0.0
        %1936 = vmatprep.subr.mxu0 0.0
        %1937 = vmatpush1.msra.mxu0 0.0
        %1938 = vmatprep.subr.mxu0 0.0
        %1939 = vmatpush1.msra.mxu0 0.0
        %1940 = vmatprep.subr.mxu0 0.0
        %1941 = vmatpush1.msra.mxu0 0.0
        %1942 = vmatprep.subr.mxu0 0.0
        %1943 = vmatpush1.msra.mxu0 0.0
        %1944 = vmatprep.subr.mxu0 0.0
        %1945 = vmatpush1.msra.mxu0 0.0
        %1946 = vmatprep.subr.mxu0 0.0
        %1947 = vmatpush1.msra.mxu0 0.0
        %1948 = vmatprep.subr.mxu0 0.0
        %1949 = vmatpush1.msra.mxu0 0.0
        %1950 = vmatprep.subr.mxu0 0.0
        %1951 = vmatpush1.msra.mxu0 0.0
        %1952 = vmatprep.subr.mxu0 0.0
        %1953 = vmatpush1.msra.mxu0 0.0
        %1954 = vmatprep.subr.mxu0 0.0
        %1955 = vmatpush1.msra.mxu0 0.0
        %1956 = vmatprep.subr.mxu0 0.0
        %1957 = vmatpush1.msra.mxu0 0.0
        %1958 = vmatprep.subr.mxu0 0.0
        %1959 = vmatpush1.msra.mxu0 0.0
        %1960 = vmatprep.subr.mxu0 0.0
        %1961 = vmatpush1.msra.mxu0 0.0
        %1962 = vmatprep.subr.mxu0 0.0
        %1963 = vmatpush1.msra.mxu0 0.0
        %1964 = vmatprep.mubr.f32.mxu0 0.0
        %1965 = vmatmul.mubr.f32.gmra.mrb[0].mxu0 %v1898
        %v1966 = vpop.f32.mrb[0].mxu0
        %v1967 = vadd.f32 0.0, %v1966
        %v1968 = vpop.f32.mrb[0].mxu0
        %1969 = vdwg.mxu0
        %v1970 = vadd.f32 %v1892, %v1967
        %s1971 = scalar_lea.vmem %s7, 24
        %v1972 = vld [vmem:[%s1971] sm:$0xff]
        %v1974 = vsel %vm804, %v1743, 0
        %1976 = vmatprep.subr.mxu0 0.0
        %1977 = vmatpush1.msra.mxu0 %v1972
        %1978 = vmatprep.subr.mxu0 0.0
        %1979 = vmatpush1.msra.mxu0 0.0
        %1980 = vmatprep.subr.mxu0 0.0
        %1981 = vmatpush1.msra.mxu0 0.0
        %1982 = vmatprep.subr.mxu0 0.0
        %1983 = vmatpush1.msra.mxu0 0.0
        %1984 = vmatprep.subr.mxu0 0.0
        %1985 = vmatpush1.msra.mxu0 0.0
        %1986 = vmatprep.subr.mxu0 0.0
        %1987 = vmatpush1.msra.mxu0 0.0
        %1988 = vmatprep.subr.mxu0 0.0
        %1989 = vmatpush1.msra.mxu0 0.0
        %1990 = vmatprep.subr.mxu0 0.0
        %1991 = vmatpush1.msra.mxu0 0.0
        %1992 = vmatprep.subr.mxu0 0.0
        %1993 = vmatpush1.msra.mxu0 0.0
        %1994 = vmatprep.subr.mxu0 0.0
        %1995 = vmatpush1.msra.mxu0 0.0
        %1996 = vmatprep.subr.mxu0 0.0
        %1997 = vmatpush1.msra.mxu0 0.0
        %1998 = vmatprep.subr.mxu0 0.0
        %1999 = vmatpush1.msra.mxu0 0.0
        %2000 = vmatprep.subr.mxu0 0.0
        %2001 = vmatpush1.msra.mxu0 0.0
        %2002 = vmatprep.subr.mxu0 0.0
        %2003 = vmatpush1.msra.mxu0 0.0
        %2004 = vmatprep.subr.mxu0 0.0
        %2005 = vmatpush1.msra.mxu0 0.0
        %2006 = vmatprep.subr.mxu0 0.0
        %2007 = vmatpush1.msra.mxu0 0.0
        %2008 = vmatprep.subr.mxu0 0.0
        %2009 = vmatpush1.msra.mxu0 0.0
        %2010 = vmatprep.subr.mxu0 0.0
        %2011 = vmatpush1.msra.mxu0 0.0
        %2012 = vmatprep.subr.mxu0 0.0
        %2013 = vmatpush1.msra.mxu0 0.0
        %2014 = vmatprep.subr.mxu0 0.0
        %2015 = vmatpush1.msra.mxu0 0.0
        %2016 = vmatprep.subr.mxu0 0.0
        %2017 = vmatpush1.msra.mxu0 0.0
        %2018 = vmatprep.subr.mxu0 0.0
        %2019 = vmatpush1.msra.mxu0 0.0
        %2020 = vmatprep.subr.mxu0 0.0
        %2021 = vmatpush1.msra.mxu0 0.0
        %2022 = vmatprep.subr.mxu0 0.0
        %2023 = vmatpush1.msra.mxu0 0.0
        %2024 = vmatprep.subr.mxu0 0.0
        %2025 = vmatpush1.msra.mxu0 0.0
        %2026 = vmatprep.subr.mxu0 0.0
        %2027 = vmatpush1.msra.mxu0 0.0
        %2028 = vmatprep.subr.mxu0 0.0
        %2029 = vmatpush1.msra.mxu0 0.0
        %2030 = vmatprep.subr.mxu0 0.0
        %2031 = vmatpush1.msra.mxu0 0.0
        %2032 = vmatprep.subr.mxu0 0.0
        %2033 = vmatpush1.msra.mxu0 0.0
        %2034 = vmatprep.subr.mxu0 0.0
        %2035 = vmatpush1.msra.mxu0 0.0
        %2036 = vmatprep.subr.mxu0 0.0
        %2037 = vmatpush1.msra.mxu0 0.0
        %2038 = vmatprep.subr.mxu0 0.0
        %2039 = vmatpush1.msra.mxu0 0.0
        %2040 = vmatprep.mubr.f32.mxu0 0.0
        %2041 = vmatmul.mubr.f32.gmra.mrb[0].mxu0 %v1974
        %v2042 = vpop.f32.mrb[0].mxu0
        %v2043 = vadd.f32 0.0, %v2042
        %v2044 = vpop.f32.mrb[0].mxu0
        %2045 = vdwg.mxu0
        %v2046 = vadd.f32 %v1970, %v2043
        %v2047 = vld [vmem:[%s8] sm:$0x1]
        %v2049 = vlaneseq
        %v2050 = vshrl.u32 %v2049, 7
        %v2051 = vsub.s32 0, %v2050
        %v2052 = vrot.slane %v2047, %v2051
        %v2054 = vadd.f32 %v2046, %v2052
        %v2055 = vld [vmem:[%s715] sm:$0xff]
        %v2056 = vadd.f32 %v2054, %v2055
        %v2057 = vld [vmem:[#allocation10] sm:$0x1]
        %v2058 = vld [vmem:[#allocation12] sm:$0x1]
        %vm2059 = vcmask 261120
        %v2060 = vsel %vm2059, %v2056, 0.0
        %2061 = vadd.xlane.f32.xlu0 %v2060
        %v2062 = vpop.xlane.xlu0 %2061
        %v2063 = vrcp.pop 32.0
        %v2064 = vmul.f32 %v2062, %v2063
        %v2065 = vsub.f32 %v2056, %v2064
        %v2066 = vmul.f32 %v2065, %v2065
        %v2067 = vsel %vm2059, %v2066, 0.0
        %2068 = vadd.xlane.f32.xlu0 %v2067
        %v2069 = vpop.xlane.xlu0 %2068
        %v2070 = vmul.f32 %v2069, %v2063
        %v2071 = vadd.f32 %v2070, 1e-05
        %v2072 = vrsqrt.pop %v2071
        %v2073 = vmul.f32 %v2065, %v2072
        %v2075 = vlaneseq
        %v2076 = vshrl.u32 %v2075, 7
        %v2077 = vsub.s32 0, %v2076
        %v2078 = vrot.slane %v2057, %v2077
        %v2080 = vmul.f32 %v2073, %v2078
        %v2082 = vlaneseq
        %v2083 = vshrl.u32 %v2082, 7
        %v2084 = vsub.s32 0, %v2083
        %v2085 = vrot.slane %v2058, %v2084
        %v2087 = vadd.f32 %v2080, %v2085
        %v2088 = vld [vmem:[#allocation13] sm:$0xff]
        %v2089 = vld [vmem:[#allocation13 + $0x8] sm:$0xff]
        %v2090 = vld [vmem:[#allocation13 + $0x10] sm:$0xff]
        %v2091 = vld [vmem:[#allocation13 + $0x18] sm:$0xff]
        %v2092 = vld [vmem:[#allocation15] sm:$0x1]
        %v2094 = vlaneseq
        %v2095 = vshrl.u32 %v2094, 7
        %v2096 = vsub.s32 0, %v2095
        %v2097 = vrot.slane %v2092, %v2096
        %v2100 = vsel %vm2059, %v2087, 0
        %2102 = vmatprep.subr.mxu0 0.0
        %2103 = vmatpush1.msra.mxu0 %v2088
        %2104 = vmatprep.subr.mxu0 0.0
        %2105 = vmatpush1.msra.mxu0 %v2089
        %2106 = vmatprep.subr.mxu0 0.0
        %2107 = vmatpush1.msra.mxu0 %v2090
        %2108 = vmatprep.subr.mxu0 0.0
        %2109 = vmatpush1.msra.mxu0 %v2091
        %2110 = vmatprep.subr.mxu0 0.0
        %2111 = vmatpush1.msra.mxu0 0.0
        %2112 = vmatprep.subr.mxu0 0.0
        %2113 = vmatpush1.msra.mxu0 0.0
        %2114 = vmatprep.subr.mxu0 0.0
        %2115 = vmatpush1.msra.mxu0 0.0
        %2116 = vmatprep.subr.mxu0 0.0
        %2117 = vmatpush1.msra.mxu0 0.0
        %2118 = vmatprep.subr.mxu0 0.0
        %2119 = vmatpush1.msra.mxu0 0.0
        %2120 = vmatprep.subr.mxu0 0.0
        %2121 = vmatpush1.msra.mxu0 0.0
        %2122 = vmatprep.subr.mxu0 0.0
        %2123 = vmatpush1.msra.mxu0 0.0
        %2124 = vmatprep.subr.mxu0 0.0
        %2125 = vmatpush1.msra.mxu0 0.0
        %2126 = vmatprep.subr.mxu0 0.0
        %2127 = vmatpush1.msra.mxu0 0.0
        %2128 = vmatprep.subr.mxu0 0.0
        %2129 = vmatpush1.msra.mxu0 0.0
        %2130 = vmatprep.subr.mxu0 0.0
        %2131 = vmatpush1.msra.mxu0 0.0
        %2132 = vmatprep.subr.mxu0 0.0
        %2133 = vmatpush1.msra.mxu0 0.0
        %2134 = vmatprep.subr.mxu0 0.0
        %2135 = vmatpush1.msra.mxu0 0.0
        %2136 = vmatprep.subr.mxu0 0.0
        %2137 = vmatpush1.msra.mxu0 0.0
        %2138 = vmatprep.subr.mxu0 0.0
        %2139 = vmatpush1.msra.mxu0 0.0
        %2140 = vmatprep.subr.mxu0 0.0
        %2141 = vmatpush1.msra.mxu0 0.0
        %2142 = vmatprep.subr.mxu0 0.0
        %2143 = vmatpush1.msra.mxu0 0.0
        %2144 = vmatprep.subr.mxu0 0.0
        %2145 = vmatpush1.msra.mxu0 0.0
        %2146 = vmatprep.subr.mxu0 0.0
        %2147 = vmatpush1.msra.mxu0 0.0
        %2148 = vmatprep.subr.mxu0 0.0
        %2149 = vmatpush1.msra.mxu0 0.0
        %2150 = vmatprep.subr.mxu0 0.0
        %2151 = vmatpush1.msra.mxu0 0.0
        %2152 = vmatprep.subr.mxu0 0.0
        %2153 = vmatpush1.msra.mxu0 0.0
        %2154 = vmatprep.subr.mxu0 0.0
        %2155 = vmatpush1.msra.mxu0 0.0
        %2156 = vmatprep.subr.mxu0 0.0
        %2157 = vmatpush1.msra.mxu0 0.0
        %2158 = vmatprep.subr.mxu0 0.0
        %2159 = vmatpush1.msra.mxu0 0.0
        %2160 = vmatprep.subr.mxu0 0.0
        %2161 = vmatpush1.msra.mxu0 0.0
        %2162 = vmatprep.subr.mxu0 0.0
        %2163 = vmatpush1.msra.mxu0 0.0
        %2164 = vmatprep.subr.mxu0 0.0
        %2165 = vmatpush1.msra.mxu0 0.0
        %2166 = vmatprep.mubr.f32.mxu0 0.0
        %2167 = vmatmul.mubr.f32.gmra.mrb[0].mxu0 %v2100
        %v2168 = vpop.f32.mrb[0].mxu0
        %v2169 = vadd.f32 %v2097, %v2168
        %v2170 = vpop.f32.mrb[0].mxu0
        %2171 = vdwg.mxu0
        %v2172 = vmax.f32 %v2169, 0.0
        %v2173 = vld [vmem:[%s13] sm:$0xff]
        %v2174 = vld [vmem:[%s13 + $0x8] sm:$0xff]
        %v2175 = vld [vmem:[%s13 + $0x10] sm:$0xff]
        %v2176 = vld [vmem:[%s13 + $0x18] sm:$0xff]
        %v2177 = vld [vmem:[%s13 + $0x20] sm:$0xff]
        %v2178 = vld [vmem:[%s13 + $0x28] sm:$0xff]
        %v2179 = vld [vmem:[%s13 + $0x30] sm:$0xff]
        %v2180 = vld [vmem:[%s13 + $0x38] sm:$0xff]
        %v2181 = vld [vmem:[%s13 + $0x40] sm:$0xff]
        %v2182 = vld [vmem:[%s13 + $0x48] sm:$0xff]
        %v2183 = vld [vmem:[%s13 + $0x50] sm:$0xff]
        %v2184 = vld [vmem:[%s13 + $0x58] sm:$0xff]
        %v2185 = vld [vmem:[%s13 + $0x60] sm:$0xff]
        %v2186 = vld [vmem:[%s13 + $0x68] sm:$0xff]
        %v2187 = vld [vmem:[%s13 + $0x70] sm:$0xff]
        %v2188 = vld [vmem:[%s13 + $0x78] sm:$0xff]
        %v2189 = vld [vmem:[%s14] sm:$0x1]
        %v2191 = vlaneseq
        %v2192 = vshrl.u32 %v2191, 7
        %v2193 = vsub.s32 0, %v2192
        %v2194 = vrot.slane %v2189, %v2193
        %2196 = vmatprep.subr.mxu0 0.0
        %2197 = vmatpush1.msra.mxu0 %v2173
        %2198 = vmatprep.subr.mxu0 0.0
        %2199 = vmatpush1.msra.mxu0 %v2174
        %2200 = vmatprep.subr.mxu0 0.0
        %2201 = vmatpush1.msra.mxu0 %v2175
        %2202 = vmatprep.subr.mxu0 0.0
        %2203 = vmatpush1.msra.mxu0 %v2176
        %2204 = vmatprep.subr.mxu0 0.0
        %2205 = vmatpush1.msra.mxu0 %v2177
        %2206 = vmatprep.subr.mxu0 0.0
        %2207 = vmatpush1.msra.mxu0 %v2178
        %2208 = vmatprep.subr.mxu0 0.0
        %2209 = vmatpush1.msra.mxu0 %v2179
        %2210 = vmatprep.subr.mxu0 0.0
        %2211 = vmatpush1.msra.mxu0 %v2180
        %2212 = vmatprep.subr.mxu0 0.0
        %2213 = vmatpush1.msra.mxu0 %v2181
        %2214 = vmatprep.subr.mxu0 0.0
        %2215 = vmatpush1.msra.mxu0 %v2182
        %2216 = vmatprep.subr.mxu0 0.0
        %2217 = vmatpush1.msra.mxu0 %v2183
        %2218 = vmatprep.subr.mxu0 0.0
        %2219 = vmatpush1.msra.mxu0 %v2184
        %2220 = vmatprep.subr.mxu0 0.0
        %2221 = vmatpush1.msra.mxu0 %v2185
        %2222 = vmatprep.subr.mxu0 0.0
        %2223 = vmatpush1.msra.mxu0 %v2186
        %2224 = vmatprep.subr.mxu0 0.0
        %2225 = vmatpush1.msra.mxu0 %v2187
        %2226 = vmatprep.subr.mxu0 0.0
        %2227 = vmatpush1.msra.mxu0 %v2188
        %2228 = vmatprep.subr.mxu0 0.0
        %2229 = vmatpush1.msra.mxu0 0.0
        %2230 = vmatprep.subr.mxu0 0.0
        %2231 = vmatpush1.msra.mxu0 0.0
        %2232 = vmatprep.subr.mxu0 0.0
        %2233 = vmatpush1.msra.mxu0 0.0
        %2234 = vmatprep.subr.mxu0 0.0
        %2235 = vmatpush1.msra.mxu0 0.0
        %2236 = vmatprep.subr.mxu0 0.0
        %2237 = vmatpush1.msra.mxu0 0.0
        %2238 = vmatprep.subr.mxu0 0.0
        %2239 = vmatpush1.msra.mxu0 0.0
        %2240 = vmatprep.subr.mxu0 0.0
        %2241 = vmatpush1.msra.mxu0 0.0
        %2242 = vmatprep.subr.mxu0 0.0
        %2243 = vmatpush1.msra.mxu0 0.0
        %2244 = vmatprep.subr.mxu0 0.0
        %2245 = vmatpush1.msra.mxu0 0.0
        %2246 = vmatprep.subr.mxu0 0.0
        %2247 = vmatpush1.msra.mxu0 0.0
        %2248 = vmatprep.subr.mxu0 0.0
        %2249 = vmatpush1.msra.mxu0 0.0
        %2250 = vmatprep.subr.mxu0 0.0
        %2251 = vmatpush1.msra.mxu0 0.0
        %2252 = vmatprep.subr.mxu0 0.0
        %2253 = vmatpush1.msra.mxu0 0.0
        %2254 = vmatprep.subr.mxu0 0.0
        %2255 = vmatpush1.msra.mxu0 0.0
        %2256 = vmatprep.subr.mxu0 0.0
        %2257 = vmatpush1.msra.mxu0 0.0
        %2258 = vmatprep.subr.mxu0 0.0
        %2259 = vmatpush1.msra.mxu0 0.0
        %2260 = vmatprep.mubr.f32.mxu0 0.0
        %2261 = vmatmul.mubr.f32.gmra.mrb[0].mxu0 %v2172
        %v2262 = vpop.f32.mrb[0].mxu0
        %v2263 = vadd.f32 %v2194, %v2262
        %v2264 = vpop.f32.mrb[0].mxu0
        %2265 = vdwg.mxu0
        %v2266 = vadd.f32 %v2263, %v2087
        %v2267 = vld [vmem:[%s15] sm:$0x1]
        %v2268 = vld [vmem:[%s16] sm:$0x1]
        %v2269 = vsel %vm2059, %v2266, 0.0
        %2270 = vadd.xlane.f32.xlu0 %v2269
        %v2271 = vpop.xlane.xlu0 %2270
        %v2272 = vmul.f32 %v2271, %v2063
        %v2273 = vsub.f32 %v2266, %v2272
        %v2274 = vmul.f32 %v2273, %v2273
        %v2275 = vsel %vm2059, %v2274, 0.0
        %2276 = vadd.xlane.f32.xlu0 %v2275
        %v2277 = vpop.xlane.xlu0 %2276
        %v2278 = vmul.f32 %v2277, %v2063
        %v2279 = vadd.f32 %v2278, 1e-05
        %v2280 = vrsqrt.pop %v2279
        %v2281 = vmul.f32 %v2273, %v2280
        %v2283 = vlaneseq
        %v2284 = vshrl.u32 %v2283, 7
        %v2285 = vsub.s32 0, %v2284
        %v2286 = vrot.slane %v2267, %v2285
        %v2288 = vmul.f32 %v2281, %v2286
        %v2290 = vlaneseq
        %v2291 = vshrl.u32 %v2290, 7
        %v2292 = vsub.s32 0, %v2291
        %v2293 = vrot.slane %v2268, %v2292
        %v2295 = vadd.f32 %v2288, %v2293
        %2296 = vst.msk [vmem:[%s798] sm:$0xff] %vm2059, %v2295
        %s2297 = sand.u32 %s424, 1
        %s2298 = scalar_lea.sflag [#allocation6], %s2297
        %s2299 = sand.u32 %s424, 1
        %s2300 = smul.addr %s2299, 8
        %s2301 = scalar_lea.vmem [#allocation16], %s2300
        // Predicated region
        $region193: #{tpu_custom_call.1} parent=155 // pred_check
          %p2302 = pneg %p434
        $region194: #{tpu_custom_call.1} parent=155 // pred_check_branch
          %2304 = sbr.rel (%p2302) target = $region196
        $region195: #{tpu_custom_call.1} parent=155 // pred_region
          %s2306 = ssub.s32 128, 128
          %2307 = vsyncadd %s2298, %s2306
          %s2308 = smul.addr %s39, 128
          %s2309 = scalar_lea.hbm %s17, %s2308
          %s2311 = sshll.u32 %s2301, 4
          %s2312 = int_to_ptr.vmem [resolvable:$true] %s2311
          %2314 = dma.vmem_to_hbm [thread:$0]  %s2312, 128, %s2309, %s2298
        $region196: #{tpu_custom_call.1} parent=155 // pred_fallthru
          _
      $region156: #{tpu_custom_call.1} parent=5 // pred_fallthru
        _
      %p2315 = scmp.le.s32.totalorder 2, %s34
      // Predicated region
      $region197: #{tpu_custom_call.1} parent=5 // pred_check
        %p2316 = pneg %p2315
      $region198: #{tpu_custom_call.1} parent=5 // pred_check_branch
        %2318 = sbr.rel (%p2316) target = $region200
      $region199: #{tpu_custom_call.1} parent=5 // pred_region
        %s2319 = ssub.s32 %s34, 2
        // Predicated region
        $region201: #{tpu_custom_call.1} parent=199 // pred_check
          %p2320 = pneg %p440
        $region202: #{tpu_custom_call.1} parent=199 // pred_check_branch
          %2322 = sbr.rel (%p2320) target = $region204
        $region203: #{tpu_custom_call.1} parent=199 // pred_region
          %s2323 = sand.u32 %s425, 1
          %s2324 = scalar_lea.sflag [#allocation6], %s2323
          %s2325 = sand.u32 %s425, 1
          %s2326 = smul.addr %s2325, 8
          %s2327 = scalar_lea.vmem [#allocation16], %s2326
          %2328 = dma.done %s2324, 128
        $region204: #{tpu_custom_call.1} parent=199 // pred_fallthru
          _
      $region200: #{tpu_custom_call.1} parent=5 // pred_fallthru
        _
    $region6: #{tpu_custom_call.1} parent=1 // loop_footer
      %s38 = sadd.s32 1, %s34
    $region7: #{tpu_custom_call.1} parent=1 // loop_footer_branch
      %33 = sbr.rel target = $region3
    $region8: #{tpu_custom_call.1} parent=1 // loop_exit
      _
    %2329 = vsyncpa [#allocation5], 1
    %s2330 = scalar_lea.sflag [#allocation5], 1
    %2331 = vsyncpa %s2330, 1
    %2332 = vsyncpa [#allocation8], 1
    %s2333 = scalar_lea.sflag [#allocation8], 1
    %2334 = vsyncpa %s2333, 1
    %2335 = vsyncpa [#allocation11], 1
    %2336 = vsyncpa [#allocation14], 1
    %2337 = vsyncpa [#allocation6], 1
    %s2338 = scalar_lea.sflag [#allocation6], 1
    %2339 = vsyncpa %s2338, 1

// kernel: tpu_custom_call.1
$region0: #{tpu_custom_call.1}
  #allocation0 [shape = 'u32[]', space=smem, size = 0x4, offset = 0x4, fixed_abs, tag = 'smem constant byte address 0x4 - core index']
  #allocation1 [shape = 'u32[144,128]{1,0:T(1,128)}', space=vmem, size = 0x12000, scoped, tag = 'internal scratch']
  %s0 = inlined_call_operand.vmem [shape: f32[4,2,8,8], index: 0, kind: input, shape index: {}]
  %s1 = inlined_call_operand.vmem [shape: f32[4,2,8,8], index: 1, kind: input, shape index: {}]
  %s2 = inlined_call_operand.hbm [shape: f32[4,2,8,8], index: 2, kind: input, shape index: {}]
  %s3 = inlined_call_operand.hbm [shape: f32[16,32], index: 3, kind: input, shape index: {}]
  %s4 = inlined_call_operand.vmem [shape: f32[8,8], index: 4, kind: input, shape index: {}]
  %s5 = inlined_call_operand.vmem [shape: f32[8,8], index: 5, kind: input, shape index: {}]
  %s6 = inlined_call_operand.hbm [shape: f32[8,8], index: 6, kind: input, shape index: {}]
  %s7 = inlined_call_operand.vmem [shape: f32[4,8,32], index: 7, kind: input, shape index: {}]
  %s8 = inlined_call_operand.vmem [shape: f32[1,32], index: 8, kind: input, shape index: {}]
  %s9 = inlined_call_operand.hbm [shape: f32[1,32], index: 9, kind: input, shape index: {}]
  %s10 = inlined_call_operand.hbm [shape: f32[1,32], index: 10, kind: input, shape index: {}]
  %s11 = inlined_call_operand.hbm [shape: f32[32,128], index: 11, kind: input, shape index: {}]
  %s12 = inlined_call_operand.hbm [shape: f32[1,128], index: 12, kind: input, shape index: {}]
  %s13 = inlined_call_operand.vmem [shape: f32[128,32], index: 13, kind: input, shape index: {}]
  %s14 = inlined_call_operand.vmem [shape: f32[1,32], index: 14, kind: input, shape index: {}]
  %s15 = inlined_call_operand.vmem [shape: f32[1,32], index: 15, kind: input, shape index: {}]
  %s16 = inlined_call_operand.vmem [shape: f32[1,32], index: 16, kind: input, shape index: {}]
  %s17 = inlined_call_operand.hbm [shape: f32[16,32], index: 17, kind: output, shape index: {}]
  %s18 = sld [smem:[#allocation0]]
  $region205: #{tpu_custom_call.1} parent=0
    _
  %s20 = ssub.s32 1, %s18
  %s21 = scalar_select 0, %s20, %s18
  $region1: #{tpu_custom_call.1} parent=0
    #allocation2 [shape = 'u8[32768]{0}', space=vmem, size = 0x8000, scoped, tag = 'input window, operand 0']
    #allocation3 [shape = 'u8[32768]{0}', space=vmem, size = 0x8000, scoped, tag = 'input window, operand 1']
    #allocation4 [shape = 'u8[32768]{0}', space=vmem, size = 0x8000, scoped, tag = 'input window, operand 2']
    #allocation5 [shape = 's32[2]{0}', space=sflag, size = 0x8, scoped, tag = 'scoped memory for tpu_custom_call.1']
    #allocation6 [shape = 's32[2]{0}', space=sflag, size = 0x8, scoped, tag = 'scoped memory for tpu_custom_call.1']
    #allocation7 [shape = 'u8[8192]{0}', space=vmem, size = 0x2000, scoped, tag = 'input window, operand 3']
    #allocation8 [shape = 's32[2]{0}', space=sflag, size = 0x8, scoped, tag = 'scoped memory for tpu_custom_call.1']
    #allocation9 [shape = 'u8[4096]{0}', space=vmem, size = 0x1000, scoped, tag = 'input window, operand 6, single buffered']
    #allocation10 [shape = 'u8[512]{0}', space=vmem, size = 0x400, scoped, tag = 'input window, operand 9, single buffered']
    #allocation11 [shape = 's32[1]{0}', space=sflag, size = 0x4, scoped, tag = 'scoped memory for tpu_custom_call.1']
    #allocation12 [shape = 'u8[512]{0}', space=vmem, size = 0x400, scoped, tag = 'input window, operand 10, single buffered']
    #allocation13 [shape = 'u8[16384]{0}', space=vmem, size = 0x4000, scoped, tag = 'input window, operand 11, single buffered']
    #allocation14 [shape = 's32[1]{0}', space=sflag, size = 0x4, scoped, tag = 'scoped memory for tpu_custom_call.1']
    #allocation15 [shape = 'u8[512]{0}', space=vmem, size = 0x400, scoped, tag = 'input window, operand 12, single buffered']
    #allocation16 [shape = 'u8[8192]{0}', space=vmem, size = 0x2000, scoped, tag = 'output window, operand 0']
    %22 = vsyncpa [#allocation5], 0
    %s23 = scalar_lea.sflag [#allocation5], 1
    %24 = vsyncpa %s23, 0
    %25 = vsyncpa [#allocation8], 0
    %s26 = scalar_lea.sflag [#allocation8], 1
    %27 = vsyncpa %s26, 0
    %28 = vsyncpa [#allocation11], 0
    %29 = vsyncpa [#allocation14], 0
    %30 = vsyncpa [#allocation6], 0
    %s31 = scalar_lea.sflag [#allocation6], 1
    %32 = vsyncpa %s31, 0
    loop: start=0, step=1, limit=4
    $region2: #{tpu_custom_call.1} parent=1 // loop_pre_header
      _
    $region3: #{tpu_custom_call.1} parent=1 // loop_header
      %s34 = sphi 0, %s38
      %p35 = scmp.ge.s32.totalorder %s34, 4
      %s44 = sphi 0, %s46
      %s47 = sphi 0, %s44
      %s48 = sphi 0, %s47
      %s64 = sphi 0, %s48
      %s70 = sphi 0, %s72
      %s73 = sphi 0, %s70
      %s74 = sphi 0, %s73
      %s90 = sphi 0, %s74
      %s96 = sphi 0, %s98
      %s99 = sphi 0, %s96
      %s100 = sphi 0, %s99
      %s116 = sphi 0, %s100
      %s122 = sphi 0, %s124
      %s125 = sphi 0, %s122
      %s126 = sphi 0, %s125
      %s142 = sphi 0, %s126
      %s146 = sphi 0, %s146
      %s148 = sphi 0, %s146
      %s149 = sphi 0, %s148
      %s163 = sphi 0, %s149
      %s167 = sphi 0, %s167
      %s169 = sphi 0, %s167
      %s170 = sphi 0, %s169
      %s184 = sphi 0, %s170
      %s188 = sphi 0, %s188
      %s190 = sphi 0, %s188
      %s191 = sphi 0, %s190
      %s205 = sphi 0, %s191
      %s209 = sphi 0, %s209
      %s211 = sphi 0, %s209
      %s212 = sphi 0, %s211
      %s226 = sphi 0, %s212
      %s230 = sphi 0, %s230
      %s232 = sphi 0, %s230
      %s233 = sphi 0, %s232
      %s247 = sphi 0, %s233
      %s251 = sphi 0, %s251
      %s253 = sphi 0, %s251
      %s254 = sphi 0, %s253
      %s268 = sphi 0, %s254
      %s272 = sphi 0, %s272
      %s274 = sphi 0, %s272
      %s275 = sphi 0, %s274
      %s289 = sphi 0, %s275
      %s293 = sphi 0, %s293
      %s295 = sphi 0, %s293
      %s296 = sphi 0, %s295
      %s310 = sphi 0, %s296
      %s314 = sphi 0, %s314
      %s316 = sphi 0, %s314
      %s317 = sphi 0, %s316
      %s331 = sphi 0, %s317
      %s335 = sphi 0, %s335
      %s337 = sphi 0, %s335
      %s338 = sphi 0, %s337
      %s352 = sphi 0, %s338
      %s356 = sphi 0, %s356
      %s358 = sphi 0, %s356
      %s359 = sphi 0, %s358
      %s373 = sphi 0, %s359
      %s377 = sphi 0, %s377
      %s379 = sphi 0, %s377
      %s380 = sphi 0, %s379
      %s394 = sphi 0, %s380
      %s398 = sphi 0, %s398
      %s400 = sphi 0, %s398
      %s401 = sphi 0, %s400
      %s415 = sphi 0, %s401
      %s421 = sphi 0, %s423
      %s424 = sphi 0, %s421
      %s425 = sphi 0, %s424
      %s441 = sphi 0, %s425
    $region4: #{tpu_custom_call.1} parent=1 // loop_header_branch
      %37 = sbr.rel (%p35) target = $region8
    $region5: #{tpu_custom_call.1} parent=1 // loop_body
      %s39 = ssub.s32 %s34, 1
      %s40 = ssub.s32 %s34, 2
      %s41 = sadd.s32 %s34, 1
      %s42 = ssub.s32 %s34, %s41
      %p43 = scmp.eq.s32.totalorder %s42, 0
      %s45 = sadd.s32 %s44, 1
      %s46 = scalar_select %p43, %s44, %s45
      %p49 = pneg %p43
      %p50 = scmp.eq.s32.totalorder %s34, 1
      %p51 = por %p49, %p50
      %p52 = scmp.ne.s32.totalorder %s44, %s47
      %p53 = scmp.eq.s32.totalorder %s34, 0
      %p54 = por %p52, %p53
      %p55 = scmp.ne.s32.totalorder %s44, %s47
      %p56 = scmp.eq.s32.totalorder %s39, 1
      %p57 = por %p55, %p56
      %p58 = scmp.ne.s32.totalorder %s47, %s48
      %p59 = scmp.eq.s32.totalorder %s39, 0
      %p60 = por %p58, %p59
      %p61 = scmp.ne.s32.totalorder %s47, %s48
      %p62 = scmp.eq.s32.totalorder %s40, 1
      %p63 = por %p61, %p62
      %p65 = scmp.ne.s32.totalorder %s48, %s64
      %p66 = scmp.eq.s32.totalorder %s40, 0
      %p67 = por %p65, %p66
      %s68 = ssub.s32 %s34, %s41
      %p69 = scmp.eq.s32.totalorder %s68, 0
      %s71 = sadd.s32 %s70, 1
      %s72 = scalar_select %p69, %s70, %s71
      %p75 = pneg %p69
      %p76 = scmp.eq.s32.totalorder %s34, 1
      %p77 = por %p75, %p76
      %p78 = scmp.ne.s32.totalorder %s70, %s73
      %p79 = scmp.eq.s32.totalorder %s34, 0
      %p80 = por %p78, %p79
      %p81 = scmp.ne.s32.totalorder %s70, %s73
      %p82 = scmp.eq.s32.totalorder %s39, 1
      %p83 = por %p81, %p82
      %p84 = scmp.ne.s32.totalorder %s73, %s74
      %p85 = scmp.eq.s32.totalorder %s39, 0
      %p86 = por %p84, %p85
      %p87 = scmp.ne.s32.totalorder %s73, %s74
      %p88 = scmp.eq.s32.totalorder %s40, 1
      %p89 = por %p87, %p88
      %p91 = scmp.ne.s32.totalorder %s74, %s90
      %p92 = scmp.eq.s32.totalorder %s40, 0
      %p93 = por %p91, %p92
      %s94 = ssub.s32 %s34, %s41
      %p95 = scmp.eq.s32.totalorder %s94, 0
      %s97 = sadd.s32 %s96, 1
      %s98 = scalar_select %p95, %s96, %s97
      %p101 = pneg %p95
      %p102 = scmp.eq.s32.totalorder %s34, 1
      %p103 = por %p101, %p102
      %p104 = scmp.ne.s32.totalorder %s96, %s99
      %p105 = scmp.eq.s32.totalorder %s34, 0
      %p106 = por %p104, %p105
      %p107 = scmp.ne.s32.totalorder %s96, %s99
      %p108 = scmp.eq.s32.totalorder %s39, 1
      %p109 = por %p107, %p108
      %p110 = scmp.ne.s32.totalorder %s99, %s100
      %p111 = scmp.eq.s32.totalorder %s39, 0
      %p112 = por %p110, %p111
      %p113 = scmp.ne.s32.totalorder %s99, %s100
      %p114 = scmp.eq.s32.totalorder %s40, 1
      %p115 = por %p113, %p114
      %p117 = scmp.ne.s32.totalorder %s100, %s116
      %p118 = scmp.eq.s32.totalorder %s40, 0
      %p119 = por %p117, %p118
      %s120 = ssub.s32 %s34, %s41
      %p121 = scmp.eq.s32.totalorder %s120, 0
      %s123 = sadd.s32 %s122, 1
      %s124 = scalar_select %p121, %s122, %s123
      %p127 = pneg %p121
      %p128 = scmp.eq.s32.totalorder %s34, 1
      %p129 = por %p127, %p128
      %p130 = scmp.ne.s32.totalorder %s122, %s125
      %p131 = scmp.eq.s32.totalorder %s34, 0
      %p132 = por %p130, %p131
      %p133 = scmp.ne.s32.totalorder %s122, %s125
      %p134 = scmp.eq.s32.totalorder %s39, 1
      %p135 = por %p133, %p134
      %p136 = scmp.ne.s32.totalorder %s125, %s126
      %p137 = scmp.eq.s32.totalorder %s39, 0
      %p138 = por %p136, %p137
      %p139 = scmp.ne.s32.totalorder %s125, %s126
      %p140 = scmp.eq.s32.totalorder %s40, 1
      %p141 = por %p139, %p140
      %p143 = scmp.ne.s32.totalorder %s126, %s142
      %p144 = scmp.eq.s32.totalorder %s40, 0
      %p145 = por %p143, %p144
      %s147 = sadd.s32 %s146, 1
      %p150 = scmp.eq.s32.totalorder %s34, 1
      %p151 = scmp.ne.s32.totalorder %s146, %s148
      %p152 = scmp.eq.s32.totalorder %s34, 0
      %p153 = por %p151, %p152
      %p154 = scmp.ne.s32.totalorder %s146, %s148
      %p155 = scmp.eq.s32.totalorder %s39, 1
      %p156 = por %p154, %p155
      %p157 = scmp.ne.s32.totalorder %s148, %s149
      %p158 = scmp.eq.s32.totalorder %s39, 0
      %p159 = por %p157, %p158
      %p160 = scmp.ne.s32.totalorder %s148, %s149
      %p161 = scmp.eq.s32.totalorder %s40, 1
      %p162 = por %p160, %p161
      %p164 = scmp.ne.s32.totalorder %s149, %s163
      %p165 = scmp.eq.s32.totalorder %s40, 0
      %p166 = por %p164, %p165
      %s168 = sadd.s32 %s167, 1
      %p171 = scmp.eq.s32.totalorder %s34, 1
      %p172 = scmp.ne.s32.totalorder %s167, %s169
      %p173 = scmp.eq.s32.totalorder %s34, 0
      %p174 = por %p172, %p173
      %p175 = scmp.ne.s32.totalorder %s167, %s169
      %p176 = scmp.eq.s32.totalorder %s39, 1
      %p177 = por %p175, %p176
      %p178 = scmp.ne.s32.totalorder %s169, %s170
      %p179 = scmp.eq.s32.totalorder %s39, 0
      %p180 = por %p178, %p179
      %p181 = scmp.ne.s32.totalorder %s169, %s170
      %p182 = scmp.eq.s32.totalorder %s40, 1
      %p183 = por %p181, %p182
      %p185 = scmp.ne.s32.totalorder %s170, %s184
      %p186 = scmp.eq.s32.totalorder %s40, 0
      %p187 = por %p185, %p186
      %s189 = sadd.s32 %s188, 1
      %p192 = scmp.eq.s32.totalorder %s34, 1
      %p193 = scmp.ne.s32.totalorder %s188, %s190
      %p194 = scmp.eq.s32.totalorder %s34, 0
      %p195 = por %p193, %p194
      %p196 = scmp.ne.s32.totalorder %s188, %s190
      %p197 = scmp.eq.s32.totalorder %s39, 1
      %p198 = por %p196, %p197
      %p199 = scmp.ne.s32.totalorder %s190, %s191
      %p200 = scmp.eq.s32.totalorder %s39, 0
      %p201 = por %p199, %p200
      %p202 = scmp.ne.s32.totalorder %s190, %s191
      %p203 = scmp.eq.s32.totalorder %s40, 1
      %p204 = por %p202, %p203
      %p206 = scmp.ne.s32.totalorder %s191, %s205
      %p207 = scmp.eq.s32.totalorder %s40, 0
      %p208 = por %p206, %p207
      %s210 = sadd.s32 %s209, 1
      %p213 = scmp.eq.s32.totalorder %s34, 1
      %p214 = scmp.ne.s32.totalorder %s209, %s211
      %p215 = scmp.eq.s32.totalorder %s34, 0
      %p216 = por %p214, %p215
      %p217 = scmp.ne.s32.totalorder %s209, %s211
      %p218 = scmp.eq.s32.totalorder %s39, 1
      %p219 = por %p217, %p218
      %p220 = scmp.ne.s32.totalorder %s211, %s212
      %p221 = scmp.eq.s32.totalorder %s39, 0
      %p222 = por %p220, %p221
      %p223 = scmp.ne.s32.totalorder %s211, %s212
      %p224 = scmp.eq.s32.totalorder %s40, 1
      %p225 = por %p223, %p224
      %p227 = scmp.ne.s32.totalorder %s212, %s226
      %p228 = scmp.eq.s32.totalorder %s40, 0
      %p229 = por %p227, %p228
      %s231 = sadd.s32 %s230, 1
      %p234 = scmp.eq.s32.totalorder %s34, 1
      %p235 = scmp.ne.s32.totalorder %s230, %s232
      %p236 = scmp.eq.s32.totalorder %s34, 0
      %p237 = por %p235, %p236
      %p238 = scmp.ne.s32.totalorder %s230, %s232
      %p239 = scmp.eq.s32.totalorder %s39, 1
      %p240 = por %p238, %p239
      %p241 = scmp.ne.s32.totalorder %s232, %s233
      %p242 = scmp.eq.s32.totalorder %s39, 0
      %p243 = por %p241, %p242
      %p244 = scmp.ne.s32.totalorder %s232, %s233
      %p245 = scmp.eq.s32.totalorder %s40, 1
      %p246 = por %p244, %p245
      %p248 = scmp.ne.s32.totalorder %s233, %s247
      %p249 = scmp.eq.s32.totalorder %s40, 0
      %p250 = por %p248, %p249
      %s252 = sadd.s32 %s251, 1
      %p255 = scmp.eq.s32.totalorder %s34, 1
      %p256 = scmp.ne.s32.totalorder %s251, %s253
      %p257 = scmp.eq.s32.totalorder %s34, 0
      %p258 = por %p256, %p257
      %p259 = scmp.ne.s32.totalorder %s251, %s253
      %p260 = scmp.eq.s32.totalorder %s39, 1
      %p261 = por %p259, %p260
      %p262 = scmp.ne.s32.totalorder %s253, %s254
      %p263 = scmp.eq.s32.totalorder %s39, 0
      %p264 = por %p262, %p263
      %p265 = scmp.ne.s32.totalorder %s253, %s254
      %p266 = scmp.eq.s32.totalorder %s40, 1
      %p267 = por %p265, %p266
      %p269 = scmp.ne.s32.totalorder %s254, %s268
      %p270 = scmp.eq.s32.totalorder %s40, 0
      %p271 = por %p269, %p270
      %s273 = sadd.s32 %s272, 1
      %p276 = scmp.eq.s32.totalorder %s34, 1
      %p277 = scmp.ne.s32.totalorder %s272, %s274
      %p278 = scmp.eq.s32.totalorder %s34, 0
      %p279 = por %p277, %p278
      %p280 = scmp.ne.s32.totalorder %s272, %s274
      %p281 = scmp.eq.s32.totalorder %s39, 1
      %p282 = por %p280, %p281
      %p283 = scmp.ne.s32.totalorder %s274, %s275
      %p284 = scmp.eq.s32.totalorder %s39, 0
      %p285 = por %p283, %p284
      %p286 = scmp.ne.s32.totalorder %s274, %s275
      %p287 = scmp.eq.s32.totalorder %s40, 1
      %p288 = por %p286, %p287
      %p290 = scmp.ne.s32.totalorder %s275, %s289
      %p291 = scmp.eq.s32.totalorder %s40, 0
      %p292 = por %p290, %p291
      %s294 = sadd.s32 %s293, 1
      %p297 = scmp.eq.s32.totalorder %s34, 1
      %p298 = scmp.ne.s32.totalorder %s293, %s295
      %p299 = scmp.eq.s32.totalorder %s34, 0
      %p300 = por %p298, %p299
      %p301 = scmp.ne.s32.totalorder %s293, %s295
      %p302 = scmp.eq.s32.totalorder %s39, 1
      %p303 = por %p301, %p302
      %p304 = scmp.ne.s32.totalorder %s295, %s296
      %p305 = scmp.eq.s32.totalorder %s39, 0
      %p306 = por %p304, %p305
      %p307 = scmp.ne.s32.totalorder %s295, %s296
      %p308 = scmp.eq.s32.totalorder %s40, 1
      %p309 = por %p307, %p308
      %p311 = scmp.ne.s32.totalorder %s296, %s310
      %p312 = scmp.eq.s32.totalorder %s40, 0
      %p313 = por %p311, %p312
      %s315 = sadd.s32 %s314, 1
      %p318 = scmp.eq.s32.totalorder %s34, 1
      %p319 = scmp.ne.s32.totalorder %s314, %s316
      %p320 = scmp.eq.s32.totalorder %s34, 0
      %p321 = por %p319, %p320
      %p322 = scmp.ne.s32.totalorder %s314, %s316
      %p323 = scmp.eq.s32.totalorder %s39, 1
      %p324 = por %p322, %p323
      %p325 = scmp.ne.s32.totalorder %s316, %s317
      %p326 = scmp.eq.s32.totalorder %s39, 0
      %p327 = por %p325, %p326
      %p328 = scmp.ne.s32.totalorder %s316, %s317
      %p329 = scmp.eq.s32.totalorder %s40, 1
      %p330 = por %p328, %p329
      %p332 = scmp.ne.s32.totalorder %s317, %s331
      %p333 = scmp.eq.s32.totalorder %s40, 0
      %p334 = por %p332, %p333
      %s336 = sadd.s32 %s335, 1
      %p339 = scmp.eq.s32.totalorder %s34, 1
      %p340 = scmp.ne.s32.totalorder %s335, %s337
      %p341 = scmp.eq.s32.totalorder %s34, 0
      %p342 = por %p340, %p341
      %p343 = scmp.ne.s32.totalorder %s335, %s337
      %p344 = scmp.eq.s32.totalorder %s39, 1
      %p345 = por %p343, %p344
      %p346 = scmp.ne.s32.totalorder %s337, %s338
      %p347 = scmp.eq.s32.totalorder %s39, 0
      %p348 = por %p346, %p347
      %p349 = scmp.ne.s32.totalorder %s337, %s338
      %p350 = scmp.eq.s32.totalorder %s40, 1
      %p351 = por %p349, %p350
      %p353 = scmp.ne.s32.totalorder %s338, %s352
      %p354 = scmp.eq.s32.totalorder %s40, 0
      %p355 = por %p353, %p354
      %s357 = sadd.s32 %s356, 1
      %p360 = scmp.eq.s32.totalorder %s34, 1
      %p361 = scmp.ne.s32.totalorder %s356, %s358
      %p362 = scmp.eq.s32.totalorder %s34, 0
      %p363 = por %p361, %p362
      %p364 = scmp.ne.s32.totalorder %s356, %s358
      %p365 = scmp.eq.s32.totalorder %s39, 1
      %p366 = por %p364, %p365
      %p367 = scmp.ne.s32.totalorder %s358, %s359
      %p368 = scmp.eq.s32.totalorder %s39, 0
      %p369 = por %p367, %p368
      %p370 = scmp.ne.s32.totalorder %s358, %s359
      %p371 = scmp.eq.s32.totalorder %s40, 1
      %p372 = por %p370, %p371
      %p374 = scmp.ne.s32.totalorder %s359, %s373
      %p375 = scmp.eq.s32.totalorder %s40, 0
      %p376 = por %p374, %p375
      %s378 = sadd.s32 %s377, 1
      %p381 = scmp.eq.s32.totalorder %s34, 1
      %p382 = scmp.ne.s32.totalorder %s377, %s379
      %p383 = scmp.eq.s32.totalorder %s34, 0
      %p384 = por %p382, %p383
      %p385 = scmp.ne.s32.totalorder %s377, %s379
      %p386 = scmp.eq.s32.totalorder %s39, 1
      %p387 = por %p385, %p386
      %p388 = scmp.ne.s32.totalorder %s379, %s380
      %p389 = scmp.eq.s32.totalorder %s39, 0
      %p390 = por %p388, %p389
      %p391 = scmp.ne.s32.totalorder %s379, %s380
      %p392 = scmp.eq.s32.totalorder %s40, 1
      %p393 = por %p391, %p392
      %p395 = scmp.ne.s32.totalorder %s380, %s394
      %p396 = scmp.eq.s32.totalorder %s40, 0
      %p397 = por %p395, %p396
      %s399 = sadd.s32 %s398, 1
      %p402 = scmp.eq.s32.totalorder %s34, 1
      %p403 = scmp.ne.s32.totalorder %s398, %s400
      %p404 = scmp.eq.s32.totalorder %s34, 0
      %p405 = por %p403, %p404
      %p406 = scmp.ne.s32.totalorder %s398, %s400
      %p407 = scmp.eq.s32.totalorder %s39, 1
      %p408 = por %p406, %p407
      %p409 = scmp.ne.s32.totalorder %s400, %s401
      %p410 = scmp.eq.s32.totalorder %s39, 0
      %p411 = por %p409, %p410
      %p412 = scmp.ne.s32.totalorder %s400, %s401
      %p413 = scmp.eq.s32.totalorder %s40, 1
      %p414 = por %p412, %p413
      %p416 = scmp.ne.s32.totalorder %s401, %s415
      %p417 = scmp.eq.s32.totalorder %s40, 0
      %p418 = por %p416, %p417
      %s419 = ssub.s32 %s34, %s41
      %p420 = scmp.eq.s32.totalorder %s419, 0
      %s422 = sadd.s32 %s421, 1
      %s423 = scalar_select %p420, %s421, %s422
      %p426 = pneg %p420
      %p427 = scmp.eq.s32.totalorder %s34, 1
      %p428 = por %p426, %p427
      %p429 = scmp.ne.s32.totalorder %s421, %s424
      %p430 = scmp.eq.s32.totalorder %s34, 0
      %p431 = por %p429, %p430
      %p432 = scmp.ne.s32.totalorder %s421, %s424
      %p433 = scmp.eq.s32.totalorder %s39, 1
      %p434 = por %p432, %p433
      %p435 = scmp.ne.s32.totalorder %s424, %s425
      %p436 = scmp.eq.s32.totalorder %s39, 0
      %p437 = por %p435, %p436
      %p438 = scmp.ne.s32.totalorder %s424, %s425
      %p439 = scmp.eq.s32.totalorder %s40, 1
      %p440 = por %p438, %p439
      %p442 = scmp.ne.s32.totalorder %s425, %s441
      %p443 = scmp.eq.s32.totalorder %s40, 0
      %p444 = por %p442, %p443
      %p445 = scmp.le.s32.totalorder 1, %s34
      %p446 = scmp.lt.s32.totalorder %s34, 3
      %p447 = pnand %p445, %p446
      %p448 = pneg %p447
      // Predicated region
      $region9: #{tpu_custom_call.1} parent=5 // pred_check
        _
      $region10: #{tpu_custom_call.1} parent=5 // pred_check_branch
        %450 = sbr.rel (%p447) target = $region12
      $region11: #{tpu_custom_call.1} parent=5 // pred_region
        %s451 = ssub.s32 %s34, 1
        // Predicated region
        $region13: #{tpu_custom_call.1} parent=11 // pred_check
          %p452 = pneg %p159
        $region14: #{tpu_custom_call.1} parent=11 // pred_check_branch
          %454 = sbr.rel (%p452) target = $region16
        $region15: #{tpu_custom_call.1} parent=11 // pred_region
          _
        $region16: #{tpu_custom_call.1} parent=11 // pred_fallthru
          _
        // Predicated region
        $region17: #{tpu_custom_call.1} parent=11 // pred_check
          %p455 = pneg %p180
        $region18: #{tpu_custom_call.1} parent=11 // pred_check_branch
          %457 = sbr.rel (%p455) target = $region20
        $region19: #{tpu_custom_call.1} parent=11 // pred_region
          _
        $region20: #{tpu_custom_call.1} parent=11 // pred_fallthru
          _
        // Predicated region
        $region21: #{tpu_custom_call.1} parent=11 // pred_check
          %p458 = pneg %p201
        $region22: #{tpu_custom_call.1} parent=11 // pred_check_branch
          %460 = sbr.rel (%p458) target = $region24
        $region23: #{tpu_custom_call.1} parent=11 // pred_region
          %s462 = ssub.s32 128, 128
          %463 = vsyncadd [#allocation8], %s462
          %s465 = sshll.u32 [#allocation9], 4
          %s466 = int_to_ptr.vmem [resolvable:$true] %s465
          %468 = dma.hbm_to_vmem [thread:$0]  %s6, 128, %s466, [#allocation8]
        $region24: #{tpu_custom_call.1} parent=11 // pred_fallthru
          _
        // Predicated region
        $region25: #{tpu_custom_call.1} parent=11 // pred_check
          %p469 = pneg %p222
        $region26: #{tpu_custom_call.1} parent=11 // pred_check_branch
          %471 = sbr.rel (%p469) target = $region28
        $region27: #{tpu_custom_call.1} parent=11 // pred_region
          _
        $region28: #{tpu_custom_call.1} parent=11 // pred_fallthru
          _
        // Predicated region
        $region29: #{tpu_custom_call.1} parent=11 // pred_check
          %p472 = pneg %p243
        $region30: #{tpu_custom_call.1} parent=11 // pred_check_branch
          %474 = sbr.rel (%p472) target = $region32
        $region31: #{tpu_custom_call.1} parent=11 // pred_region
          _
        $region32: #{tpu_custom_call.1} parent=11 // pred_fallthru
          _
        // Predicated region
        $region33: #{tpu_custom_call.1} parent=11 // pred_check
          %p475 = pneg %p264
        $region34: #{tpu_custom_call.1} parent=11 // pred_check_branch
          %477 = sbr.rel (%p475) target = $region36
        $region35: #{tpu_custom_call.1} parent=11 // pred_region
          %s479 = ssub.s32 16, 16
          %480 = vsyncadd [#allocation11], %s479
          %s482 = sshll.u32 [#allocation10], 4
          %s483 = int_to_ptr.vmem [resolvable:$true] %s482
          %485 = dma.hbm_to_vmem [thread:$0]  %s9, 16, %s483, [#allocation11]
        $region36: #{tpu_custom_call.1} parent=11 // pred_fallthru
          _
        // Predicated region
        $region37: #{tpu_custom_call.1} parent=11 // pred_check
          %p486 = pneg %p285
        $region38: #{tpu_custom_call.1} parent=11 // pred_check_branch
          %488 = sbr.rel (%p486) target = $region40
        $region39: #{tpu_custom_call.1} parent=11 // pred_region
          %s490 = ssub.s32 16, 16
          %491 = vsyncadd [#allocation11], %s490
          %s493 = sshll.u32 [#allocation12], 4
          %s494 = int_to_ptr.vmem [resolvable:$true] %s493
          %496 = dma.hbm_to_vmem [thread:$0]  %s10, 16, %s494, [#allocation11]
        $region40: #{tpu_custom_call.1} parent=11 // pred_fallthru
          _
        // Predicated region
        $region41: #{tpu_custom_call.1} parent=11 // pred_check
          %p497 = pneg %p306
        $region42: #{tpu_custom_call.1} parent=11 // pred_check_branch
          %499 = sbr.rel (%p497) target = $region44
        $region43: #{tpu_custom_call.1} parent=11 // pred_region
          %s501 = ssub.s32 512, 512
          %502 = vsyncadd [#allocation14], %s501
          %s503 = sshll.u32 [#allocation13], 4
          %s504 = int_to_ptr.vmem [resolvable:$true] %s503
          %509 = dma.hbm_to_vmem [thread:$0]  %s11, 512, %s504, [#allocation14], 128, 128, 8
        $region44: #{tpu_custom_call.1} parent=11 // pred_fallthru
          _
        // Predicated region
        $region45: #{tpu_custom_call.1} parent=11 // pred_check
          %p510 = pneg %p327
        $region46: #{tpu_custom_call.1} parent=11 // pred_check_branch
          %512 = sbr.rel (%p510) target = $region48
        $region47: #{tpu_custom_call.1} parent=11 // pred_region
          %s514 = ssub.s32 16, 16
          %515 = vsyncadd [#allocation14], %s514
          %s517 = sshll.u32 [#allocation15], 4
          %s518 = int_to_ptr.vmem [resolvable:$true] %s517
          %520 = dma.hbm_to_vmem [thread:$0]  %s12, 16, %s518, [#allocation14]
        $region48: #{tpu_custom_call.1} parent=11 // pred_fallthru
          _
        // Predicated region
        $region49: #{tpu_custom_call.1} parent=11 // pred_check
          %p521 = pneg %p348
        $region50: #{tpu_custom_call.1} parent=11 // pred_check_branch
          %523 = sbr.rel (%p521) target = $region52
        $region51: #{tpu_custom_call.1} parent=11 // pred_region
          _
        $region52: #{tpu_custom_call.1} parent=11 // pred_fallthru
          _
        // Predicated region
        $region53: #{tpu_custom_call.1} parent=11 // pred_check
          %p524 = pneg %p369
        $region54: #{tpu_custom_call.1} parent=11 // pred_check_branch
          %526 = sbr.rel (%p524) target = $region56
        $region55: #{tpu_custom_call.1} parent=11 // pred_region
          _
        $region56: #{tpu_custom_call.1} parent=11 // pred_fallthru
          _
        // Predicated region
        $region57: #{tpu_custom_call.1} parent=11 // pred_check
          %p527 = pneg %p390
        $region58: #{tpu_custom_call.1} parent=11 // pred_check_branch
          %529 = sbr.rel (%p527) target = $region60
        $region59: #{tpu_custom_call.1} parent=11 // pred_region
          _
        $region60: #{tpu_custom_call.1} parent=11 // pred_fallthru
          _
        // Predicated region
        $region61: #{tpu_custom_call.1} parent=11 // pred_check
          %p530 = pneg %p411
        $region62: #{tpu_custom_call.1} parent=11 // pred_check_branch
          %532 = sbr.rel (%p530) target = $region64
        $region63: #{tpu_custom_call.1} parent=11 // pred_region
          _
        $region64: #{tpu_custom_call.1} parent=11 // pred_fallthru
          _
      $region12: #{tpu_custom_call.1} parent=5 // pred_fallthru
        _
      %p533 = scmp.lt.s32.totalorder %s34, 2
      // Predicated region
      $region65: #{tpu_custom_call.1} parent=5 // pred_check
        %p534 = pneg %p533
      $region66: #{tpu_custom_call.1} parent=5 // pred_check_branch
        %536 = sbr.rel (%p534) target = $region68
      $region67: #{tpu_custom_call.1} parent=5 // pred_region
        // Predicated region
        $region69: #{tpu_custom_call.1} parent=67 // pred_check
          %p537 = pneg %p54
        $region70: #{tpu_custom_call.1} parent=67 // pred_check_branch
          %539 = sbr.rel (%p537) target = $region72
        $region71: #{tpu_custom_call.1} parent=67 // pred_region
          %s540 = sand.u32 %s44, 1
          %s541 = sand.u32 %s44, 1
          %s542 = smul.addr %s541, 32
          %s543 = scalar_lea.vmem [#allocation2], %s542
          %s544 = smul.addr %s34, 8
          %s545 = scalar_lea.vmem %s0, %s544
          // Predicated region
          $region73: #{tpu_custom_call.1} parent=71 // pred_check
            _
          $region74: #{tpu_custom_call.1} parent=71 // pred_check_branch
            %547 = sbr.rel (0) target = $region76
          $region75: #{tpu_custom_call.1} parent=71 // pred_region
            // Predicated region
            $region77: #{tpu_custom_call.1} parent=75 // pred_check
              _
            $region78: #{tpu_custom_call.1} parent=75 // pred_check_branch
              %549 = sbr.rel (0) target = $region80
            $region79: #{tpu_custom_call.1} parent=75 // pred_region
              // Predicated region
              $region92: #{tpu_custom_call.1} parent=79 // pred_check
                _
              $region93: #{tpu_custom_call.1} parent=79 // pred_check_branch
                %570 = sbr.rel (0) target = $region95
              $region94: #{tpu_custom_call.1} parent=79 // pred_region
                loop: start=0, step=1, limit=1
                $region96: #{tpu_custom_call.1} parent=94 // loop_pre_header
                  _
                $region97: #{tpu_custom_call.1} parent=94 // loop_header
                  %s572 = sphi 0, %s576
                  %p573 = scmp.ge.s32.totalorder %s572, 1
                  %s577 = sphi %s545, %s545
                  %s578 = sphi %s543, %s543
                $region98: #{tpu_custom_call.1} parent=94 // loop_header_branch
                  %575 = sbr.rel (%p573) target = $region102
                $region99: #{tpu_custom_call.1} parent=94 // loop_body
                  %v579 = vld [vmem:[%s577] sm:$0xff]
                  %580 = vst [vmem:[%s578] sm:$0xff] %v579
                  %v581 = vld [vmem:[%s577 + $0x10] sm:$0xff]
                  %582 = vst [vmem:[%s578 + $0x8] sm:$0xff] %v581
                  %v583 = vld [vmem:[%s577 + $0x20] sm:$0xff]
                  %584 = vst [vmem:[%s578 + $0x10] sm:$0xff] %v583
                  %v585 = vld [vmem:[%s577 + $0x30] sm:$0xff]
                  %586 = vst [vmem:[%s578 + $0x18] sm:$0xff] %v585
                $region100: #{tpu_custom_call.1} parent=94 // loop_footer
                  %s576 = sadd.s32 1, %s572
                $region101: #{tpu_custom_call.1} parent=94 // loop_footer_branch
                  %571 = sbr.rel target = $region97
                $region102: #{tpu_custom_call.1} parent=94 // loop_exit
                  _
              $region95: #{tpu_custom_call.1} parent=79 // pred_fallthru
                _
              // Predicated region
              $region103: #{tpu_custom_call.1} parent=79 // pred_check
                _
              $region104: #{tpu_custom_call.1} parent=79 // pred_check_branch
                %588 = sbr.rel target = $region106
              $region105: #{tpu_custom_call.1} parent=79 // pred_region
                _
              $region106: #{tpu_custom_call.1} parent=79 // pred_fallthru
                _
            $region80: #{tpu_custom_call.1} parent=75 // pred_fallthru
              _
            // Predicated region
            $region81: #{tpu_custom_call.1} parent=75 // pred_check
              _
            $region82: #{tpu_custom_call.1} parent=75 // pred_check_branch
              %551 = sbr.rel target = $region84
            $region83: #{tpu_custom_call.1} parent=75 // pred_region
              loop: start=0, step=1, limit=1
              $region85: #{tpu_custom_call.1} parent=83 // loop_pre_header
                _
              $region86: #{tpu_custom_call.1} parent=83 // loop_header
                %s554 = sphi 0, %s558
                %p555 = scmp.ge.s32.totalorder %s554, 1
                %s559 = sphi %s545, %s545
                %s560 = sphi %s543, %s543
              $region87: #{tpu_custom_call.1} parent=83 // loop_header_branch
                %557 = sbr.rel (%p555) target = $region91
              $region88: #{tpu_custom_call.1} parent=83 // loop_body
                %v561 = vld [vmem:[%s559] sm:$0xff]
                %562 = vst [vmem:[%s560] sm:$0xff] %v561
                %v563 = vld [vmem:[%s559 + $0x10] sm:$0xff]
                %564 = vst [vmem:[%s560 + $0x8] sm:$0xff] %v563
                %v565 = vld [vmem:[%s559 + $0x20] sm:$0xff]
                %566 = vst [vmem:[%s560 + $0x10] sm:$0xff] %v565
                %v567 = vld [vmem:[%s559 + $0x30] sm:$0xff]
                %568 = vst [vmem:[%s560 + $0x18] sm:$0xff] %v567
              $region89: #{tpu_custom_call.1} parent=83 // loop_footer
                %s558 = sadd.s32 1, %s554
              $region90: #{tpu_custom_call.1} parent=83 // loop_footer_branch
                %553 = sbr.rel target = $region86
              $region91: #{tpu_custom_call.1} parent=83 // loop_exit
                _
            $region84: #{tpu_custom_call.1} parent=75 // pred_fallthru
              _
          $region76: #{tpu_custom_call.1} parent=71 // pred_fallthru
            _
          %589 = vnop
        $region72: #{tpu_custom_call.1} parent=67 // pred_fallthru
          _
        // Predicated region
        $region107: #{tpu_custom_call.1} parent=67 // pred_check
          %p590 = pneg %p80
        $region108: #{tpu_custom_call.1} parent=67 // pred_check_branch
          %592 = sbr.rel (%p590) target = $region110
        $region109: #{tpu_custom_call.1} parent=67 // pred_region
          %s593 = sand.u32 %s70, 1
          %s594 = sand.u32 %s70, 1
          %s595 = smul.addr %s594, 32
          %s596 = scalar_lea.vmem [#allocation3], %s595
          %s597 = smul.addr %s34, 8
          %s598 = scalar_lea.vmem %s1, %s597
          // Predicated region
          $region111: #{tpu_custom_call.1} parent=109 // pred_check
            _
          $region112: #{tpu_custom_call.1} parent=109 // pred_check_branch
            %600 = sbr.rel (0) target = $region114
          $region113: #{tpu_custom_call.1} parent=109 // pred_region
            // Predicated region
            $region115: #{tpu_custom_call.1} parent=113 // pred_check
              _
            $region116: #{tpu_custom_call.1} parent=113 // pred_check_branch
              %602 = sbr.rel (0) target = $region118
            $region117: #{tpu_custom_call.1} parent=113 // pred_region
              // Predicated region
              $region130: #{tpu_custom_call.1} parent=117 // pred_check
                _
              $region131: #{tpu_custom_call.1} parent=117 // pred_check_branch
                %623 = sbr.rel (0) target = $region133
              $region132: #{tpu_custom_call.1} parent=117 // pred_region
                loop: start=0, step=1, limit=1
                $region134: #{tpu_custom_call.1} parent=132 // loop_pre_header
                  _
                $region135: #{tpu_custom_call.1} parent=132 // loop_header
                  %s625 = sphi 0, %s629
                  %p626 = scmp.ge.s32.totalorder %s625, 1
                  %s630 = sphi %s598, %s598
                  %s631 = sphi %s596, %s596
                $region136: #{tpu_custom_call.1} parent=132 // loop_header_branch
                  %628 = sbr.rel (%p626) target = $region140
                $region137: #{tpu_custom_call.1} parent=132 // loop_body
                  %v632 = vld [vmem:[%s630] sm:$0xff]
                  %633 = vst [vmem:[%s631] sm:$0xff] %v632
                  %v634 = vld [vmem:[%s630 + $0x10] sm:$0xff]
                  %635 = vst [vmem:[%s631 + $0x8] sm:$0xff] %v634
                  %v636 = vld [vmem:[%s630 + $0x20] sm:$0xff]
                  %637 = vst [vmem:[%s631 + $0x10] sm:$0xff] %v636
                  %v638 = vld [vmem:[%s630 + $0x30] sm:$0xff]
                  %639 = vst [vmem:[%s631 + $0x18] sm:$0xff] %v638
                $region138: #{tpu_custom_call.1} parent=132 // loop_footer
                  %s629 = sadd.s32 1, %s625
                $region139: #{tpu_custom_call.1} parent=132 // loop_footer_branch
                  %624 = sbr.rel target = $region135
                $region140: #{tpu_custom_call.1} parent=132 // loop_exit
                  _
              $region133: #{tpu_custom_call.1} parent=117 // pred_fallthru
                _
              // Predicated region
              $region141: #{tpu_custom_call.1} parent=117 // pred_check
                _
              $region142: #{tpu_custom_call.1} parent=117 // pred_check_branch
                %641 = sbr.rel target = $region144
              $region143: #{tpu_custom_call.1} parent=117 // pred_region
                _
              $region144: #{tpu_custom_call.1} parent=117 // pred_fallthru
                _
            $region118: #{tpu_custom_call.1} parent=113 // pred_fallthru
              _
            // Predicated region
            $region119: #{tpu_custom_call.1} parent=113 // pred_check
              _
            $region120: #{tpu_custom_call.1} parent=113 // pred_check_branch
              %604 = sbr.rel target = $region122
            $region121: #{tpu_custom_call.1} parent=113 // pred_region
              loop: start=0, step=1, limit=1
              $region123: #{tpu_custom_call.1} parent=121 // loop_pre_header
                _
              $region124: #{tpu_custom_call.1} parent=121 // loop_header
                %s607 = sphi 0, %s611
                %p608 = scmp.ge.s32.totalorder %s607, 1
                %s612 = sphi %s598, %s598
                %s613 = sphi %s596, %s596
              $region125: #{tpu_custom_call.1} parent=121 // loop_header_branch
                %610 = sbr.rel (%p608) target = $region129
              $region126: #{tpu_custom_call.1} parent=121 // loop_body
                %v614 = vld [vmem:[%s612] sm:$0xff]
                %615 = vst [vmem:[%s613] sm:$0xff] %v614
                %v616 = vld [vmem:[%s612 + $0x10] sm:$0xff]
                %617 = vst [vmem:[%s613 + $0x8] sm:$0xff] %v616
                %v618 = vld [vmem:[%s612 + $0x20] sm:$0xff]
                %619 = vst [vmem:[%s613 + $0x10] sm:$0xff] %v618
                %v620 = vld [vmem:[%s612 + $0x30] sm:$0xff]
                %621 = vst [vmem:[%s613 + $0x18] sm:$0xff] %v620
              $region127: #{tpu_custom_call.1} parent=121 // loop_footer
                %s611 = sadd.s32 1, %s607
              $region128: #{tpu_custom_call.1} parent=121 // loop_footer_branch
                %606 = sbr.rel target = $region124
              $region129: #{tpu_custom_call.1} parent=121 // loop_exit
                _
            $region122: #{tpu_custom_call.1} parent=113 // pred_fallthru
              _
          $region114: #{tpu_custom_call.1} parent=109 // pred_fallthru
            _
          %642 = vnop
        $region110: #{tpu_custom_call.1} parent=67 // pred_fallthru
          _
        // Predicated region
        $region145: #{tpu_custom_call.1} parent=67 // pred_check
          %p643 = pneg %p106
        $region146: #{tpu_custom_call.1} parent=67 // pred_check_branch
          %645 = sbr.rel (%p643) target = $region148
        $region147: #{tpu_custom_call.1} parent=67 // pred_region
          %s646 = sand.u32 %s96, 1
          %s647 = scalar_lea.sflag [#allocation5], %s646
          %s648 = sand.u32 %s96, 1
          %s649 = smul.addr %s648, 32
          %s650 = scalar_lea.vmem [#allocation4], %s649
          %s652 = ssub.s32 512, 512
          %653 = vsyncadd %s647, %s652
          %s654 = smul.addr %s34, 128
          %s655 = scalar_lea.hbm %s2, %s654
          %s656 = sshll.u32 %s650, 4
          %s657 = int_to_ptr.vmem [resolvable:$true] %s656
          %662 = dma.hbm_to_vmem [thread:$0]  %s655, 512, %s657, %s647, 256, 128, 8
        $region148: #{tpu_custom_call.1} parent=67 // pred_fallthru
          _
        // Predicated region
        $region149: #{tpu_custom_call.1} parent=67 // pred_check
          %p663 = pneg %p132
        $region150: #{tpu_custom_call.1} parent=67 // pred_check_branch
          %665 = sbr.rel (%p663) target = $region152
        $region151: #{tpu_custom_call.1} parent=67 // pred_region
          %s666 = sand.u32 %s34, 1
          %s667 = scalar_lea.sflag [#allocation8], %s666
          %s668 = sand.u32 %s122, 1
          %s669 = smul.addr %s668, 8
          %s670 = scalar_lea.vmem [#allocation7], %s669
          %s672 = ssub.s32 128, 128
          %673 = vsyncadd %s667, %s672
          %s674 = smul.addr %s34, 128
          %s675 = scalar_lea.hbm %s3, %s674
          %s677 = sshll.u32 %s670, 4
          %s678 = int_to_ptr.vmem [resolvable:$true] %s677
          %680 = dma.hbm_to_vmem [thread:$0]  %s675, 128, %s678, %s667
        $region152: #{tpu_custom_call.1} parent=67 // pred_fallthru
          _
      $region68: #{tpu_custom_call.1} parent=5 // pred_fallthru
        _
      %p681 = scmp.le.s32.totalorder 1, %s34
      %p682 = scmp.lt.s32.totalorder %s34, 3
      %p683 = pnand %p681, %p682
      %p684 = pneg %p683
      // Predicated region
      $region153: #{tpu_custom_call.1} parent=5 // pred_check
        _
      $region154: #{tpu_custom_call.1} parent=5 // pred_check_branch
        %686 = sbr.rel (%p683) target = $region156
      $region155: #{tpu_custom_call.1} parent=5 // pred_region
        %s687 = ssub.s32 %s34, 1
        %s688 = sand.u32 %s47, 1
        %s689 = sand.u32 %s47, 1
        %s690 = smul.addr %s689, 32
        %s691 = scalar_lea.vmem [#allocation2], %s690
        // Predicated region
        $region157: #{tpu_custom_call.1} parent=155 // pred_check
          %p692 = pneg %p60
        $region158: #{tpu_custom_call.1} parent=155 // pred_check_branch
          %694 = sbr.rel (%p692) target = $region160
        $region159: #{tpu_custom_call.1} parent=155 // pred_region
          _
        $region160: #{tpu_custom_call.1} parent=155 // pred_fallthru
          _
        %s695 = sand.u32 %s73, 1
        %s696 = sand.u32 %s73, 1
        %s697 = smul.addr %s696, 32
        %s698 = scalar_lea.vmem [#allocation3], %s697
        // Predicated region
        $region161: #{tpu_custom_call.1} parent=155 // pred_check
          %p699 = pneg %p86
        $region162: #{tpu_custom_call.1} parent=155 // pred_check_branch
          %701 = sbr.rel (%p699) target = $region164
        $region163: #{tpu_custom_call.1} parent=155 // pred_region
          _
        $region164: #{tpu_custom_call.1} parent=155 // pred_fallthru
          _
        %s702 = sand.u32 %s99, 1
        %s703 = scalar_lea.sflag [#allocation5], %s702
        %s704 = sand.u32 %s99, 1
        %s705 = smul.addr %s704, 32
        %s706 = scalar_lea.vmem [#allocation4], %s705
        // Predicated region
        $region165: #{tpu_custom_call.1} parent=155 // pred_check
          %p707 = pneg %p112
        $region166: #{tpu_custom_call.1} parent=155 // pred_check_branch
          %709 = sbr.rel (%p707) target = $region168
        $region167: #{tpu_custom_call.1} parent=155 // pred_region
          %710 = dma.done %s703, 512
        $region168: #{tpu_custom_call.1} parent=155 // pred_fallthru
          _
        %s711 = sand.u32 %s39, 1
        %s712 = scalar_lea.sflag [#allocation8], %s711
        %s713 = sand.u32 %s125, 1
        %s714 = smul.addr %s713, 8
        %s715 = scalar_lea.vmem [#allocation7], %s714
        // Predicated region
        $region169: #{tpu_custom_call.1} parent=155 // pred_check
          %p716 = pneg %p138
        $region170: #{tpu_custom_call.1} parent=155 // pred_check_branch
          %718 = sbr.rel (%p716) target = $region172
        $region171: #{tpu_custom_call.1} parent=155 // pred_region
          %719 = dma.done %s712, 128
        $region172: #{tpu_custom_call.1} parent=155 // pred_fallthru
          _
        // Predicated region
        $region173: #{tpu_custom_call.1} parent=155 // pred_check
          %p720 = pneg %p201
        $region174: #{tpu_custom_call.1} parent=155 // pred_check_branch
          %722 = sbr.rel (%p720) target = $region176
        $region175: #{tpu_custom_call.1} parent=155 // pred_region
          %723 = dma.done [#allocation8], 128
        $region176: #{tpu_custom_call.1} parent=155 // pred_fallthru
          _
        // Predicated region
        $region177: #{tpu_custom_call.1} parent=155 // pred_check
          %p724 = pneg %p264
        $region178: #{tpu_custom_call.1} parent=155 // pred_check_branch
          %726 = sbr.rel (%p724) target = $region180
        $region179: #{tpu_custom_call.1} parent=155 // pred_region
          %727 = dma.done [#allocation11], 16
        $region180: #{tpu_custom_call.1} parent=155 // pred_fallthru
          _
        // Predicated region
        $region181: #{tpu_custom_call.1} parent=155 // pred_check
          %p728 = pneg %p285
        $region182: #{tpu_custom_call.1} parent=155 // pred_check_branch
          %730 = sbr.rel (%p728) target = $region184
        $region183: #{tpu_custom_call.1} parent=155 // pred_region
          %731 = dma.done [#allocation11], 16
        $region184: #{tpu_custom_call.1} parent=155 // pred_fallthru
          _
        // Predicated region
        $region185: #{tpu_custom_call.1} parent=155 // pred_check
          %p732 = pneg %p306
        $region186: #{tpu_custom_call.1} parent=155 // pred_check_branch
          %734 = sbr.rel (%p732) target = $region188
        $region187: #{tpu_custom_call.1} parent=155 // pred_region
          %735 = dma.done [#allocation14], 512
        $region188: #{tpu_custom_call.1} parent=155 // pred_fallthru
          _
        // Predicated region
        $region189: #{tpu_custom_call.1} parent=155 // pred_check
          %p736 = pneg %p327
        $region190: #{tpu_custom_call.1} parent=155 // pred_check_branch
          %738 = sbr.rel (%p736) target = $region192
        $region191: #{tpu_custom_call.1} parent=155 // pred_region
          %739 = dma.done [#allocation14], 16
        $region192: #{tpu_custom_call.1} parent=155 // pred_fallthru
          _
        %s740 = sand.u32 %s47, 1
        %s741 = sand.u32 %s47, 1
        %s742 = smul.addr %s741, 32
        %s743 = scalar_lea.vmem [#allocation2], %s742
        %p744 = pneg %p60
        %p745 = pneg %p57
        %s746 = sand.u32 %s73, 1
        %s747 = sand.u32 %s73, 1
        %s748 = smul.addr %s747, 32
        %s749 = scalar_lea.vmem [#allocation3], %s748
        %p750 = pneg %p86
        %p751 = pneg %p83
        %s752 = sand.u32 %s99, 1
        %s753 = scalar_lea.sflag [#allocation5], %s752
        %s754 = sand.u32 %s99, 1
        %s755 = smul.addr %s754, 32
        %s756 = scalar_lea.vmem [#allocation4], %s755
        %p757 = pneg %p112
        %p758 = pneg %p109
        %s759 = sand.u32 %s39, 1
        %s760 = scalar_lea.sflag [#allocation8], %s759
        %s761 = sand.u32 %s125, 1
        %s762 = smul.addr %s761, 8
        %s763 = scalar_lea.vmem [#allocation7], %s762
        %p764 = pneg %p138
        %p765 = pneg %p135
        %p766 = pneg %p159
        %p767 = pneg %p156
        %p768 = pneg %p180
        %p769 = pneg %p177
        %p770 = pneg %p201
        %p771 = pneg %p198
        %p772 = pneg %p222
        %p773 = pneg %p219
        %p774 = pneg %p243
        %p775 = pneg %p240
        %p776 = pneg %p264
        %p777 = pneg %p261
        %p778 = pneg %p285
        %p779 = pneg %p282
        %p780 = pneg %p306
        %p781 = pneg %p303
        %p782 = pneg %p327
        %p783 = pneg %p324
        %p784 = pneg %p348
        %p785 = pneg %p345
        %p786 = pneg %p369
        %p787 = pneg %p366
        %p788 = pneg %p390
        %p789 = pneg %p387
        %p790 = pneg %p411
        %p791 = pneg %p408
        %p792 = pneg %p437
        %p793 = pneg %p434
        %s794 = sand.u32 %s424, 1
        %s795 = scalar_lea.sflag [#allocation6], %s794
        %s796 = sand.u32 %s424, 1
        %s797 = smul.addr %s796, 8
        %s798 = scalar_lea.vmem [#allocation16], %s797
        %v799 = vld [vmem:[%s691] sm:$0xff]
        %v800 = vld [vmem:[%s691 + $0x8] sm:$0xff]
        %v801 = vld [vmem:[%s691 + $0x10] sm:$0xff]
        %v802 = vld [vmem:[%s691 + $0x18] sm:$0xff]
        %v803 = vld [vmem:[%s4] sm:$0xff]
        %vm804 = vcmask 64512
        %v806 = vsel %vm804, %v799, 0
        %v809 = vsel %vm804, %v800, 0
        %v812 = vsel %vm804, %v801, 0
        %v815 = vsel %vm804, %v802, 0
        %817 = vmatprep.subr.mxu0 0.0
        %818 = vmatpush1.msra.mxu0 %v803
        %819 = vmatprep.subr.mxu0 0.0
        %820 = vmatpush1.msra.mxu0 0.0
        %821 = vmatprep.subr.mxu0 0.0
        %822 = vmatpush1.msra.mxu0 0.0
        %823 = vmatprep.subr.mxu0 0.0
        %824 = vmatpush1.msra.mxu0 0.0
        %825 = vmatprep.subr.mxu0 0.0
        %826 = vmatpush1.msra.mxu0 0.0
        %827 = vmatprep.subr.mxu0 0.0
        %828 = vmatpush1.msra.mxu0 0.0
        %829 = vmatprep.subr.mxu0 0.0
        %830 = vmatpush1.msra.mxu0 0.0
        %831 = vmatprep.subr.mxu0 0.0
        %832 = vmatpush1.msra.mxu0 0.0
        %833 = vmatprep.subr.mxu0 0.0
        %834 = vmatpush1.msra.mxu0 0.0
        %835 = vmatprep.subr.mxu0 0.0
        %836 = vmatpush1.msra.mxu0 0.0
        %837 = vmatprep.subr.mxu0 0.0
        %838 = vmatpush1.msra.mxu0 0.0
        %839 = vmatprep.subr.mxu0 0.0
        %840 = vmatpush1.msra.mxu0 0.0
        %841 = vmatprep.subr.mxu0 0.0
        %842 = vmatpush1.msra.mxu0 0.0
        %843 = vmatprep.subr.mxu0 0.0
        %844 = vmatpush1.msra.mxu0 0.0
        %845 = vmatprep.subr.mxu0 0.0
        %846 = vmatpush1.msra.mxu0 0.0
        %847 = vmatprep.subr.mxu0 0.0
        %848 = vmatpush1.msra.mxu0 0.0
        %849 = vmatprep.subr.mxu0 0.0
        %850 = vmatpush1.msra.mxu0 0.0
        %851 = vmatprep.subr.mxu0 0.0
        %852 = vmatpush1.msra.mxu0 0.0
        %853 = vmatprep.subr.mxu0 0.0
        %854 = vmatpush1.msra.mxu0 0.0
        %855 = vmatprep.subr.mxu0 0.0
        %856 = vmatpush1.msra.mxu0 0.0
        %857 = vmatprep.subr.mxu0 0.0
        %858 = vmatpush1.msra.mxu0 0.0
        %859 = vmatprep.subr.mxu0 0.0
        %860 = vmatpush1.msra.mxu0 0.0
        %861 = vmatprep.subr.mxu0 0.0
        %862 = vmatpush1.msra.mxu0 0.0
        %863 = vmatprep.subr.mxu0 0.0
        %864 = vmatpush1.msra.mxu0 0.0
        %865 = vmatprep.subr.mxu0 0.0
        %866 = vmatpush1.msra.mxu0 0.0
        %867 = vmatprep.subr.mxu0 0.0
        %868 = vmatpush1.msra.mxu0 0.0
        %869 = vmatprep.subr.mxu0 0.0
        %870 = vmatpush1.msra.mxu0 0.0
        %871 = vmatprep.subr.mxu0 0.0
        %872 = vmatpush1.msra.mxu0 0.0
        %873 = vmatprep.subr.mxu0 0.0
        %874 = vmatpush1.msra.mxu0 0.0
        %875 = vmatprep.subr.mxu0 0.0
        %876 = vmatpush1.msra.mxu0 0.0
        %877 = vmatprep.subr.mxu0 0.0
        %878 = vmatpush1.msra.mxu0 0.0
        %879 = vmatprep.subr.mxu0 0.0
        %880 = vmatpush1.msra.mxu0 0.0
        %881 = vmatprep.mubr.f32.mxu0 0.0
        %882 = vmatmul.mubr.f32.gmra.mrb[0].mxu0 %v806
        %v883 = vpop.f32.mrb[0].mxu0
        %v884 = vadd.f32 0.0, %v883
        %v885 = vpop.f32.mrb[0].mxu0
        %886 = vmatprep.mubr.f32.mxu0 0.0
        %887 = vmatmul.mubr.f32.gmra.mrb[0].mxu0 %v809
        %v888 = vpop.f32.mrb[0].mxu0
        %v889 = vadd.f32 0.0, %v888
        %v890 = vpop.f32.mrb[0].mxu0
        %891 = vmatprep.mubr.f32.mxu0 0.0
        %892 = vmatmul.mubr.f32.gmra.mrb[0].mxu0 %v812
        %v893 = vpop.f32.mrb[0].mxu0
        %v894 = vadd.f32 0.0, %v893
        %v895 = vpop.f32.mrb[0].mxu0
        %896 = vmatprep.mubr.f32.mxu0 0.0
        %897 = vmatmul.mubr.f32.gmra.mrb[0].mxu0 %v815
        %v898 = vpop.f32.mrb[0].mxu0
        %v899 = vadd.f32 0.0, %v898
        %v900 = vpop.f32.mrb[0].mxu0
        %901 = vdwg.mxu0
        %v902 = vld [vmem:[%s698] sm:$0xff]
        %v903 = vld [vmem:[%s698 + $0x8] sm:$0xff]
        %v904 = vld [vmem:[%s698 + $0x10] sm:$0xff]
        %v905 = vld [vmem:[%s698 + $0x18] sm:$0xff]
        %v906 = vld [vmem:[%s5] sm:$0xff]
        %v908 = vsel %vm804, %v902, 0
        %v911 = vsel %vm804, %v903, 0
        %v914 = vsel %vm804, %v904, 0
        %v917 = vsel %vm804, %v905, 0
        %919 = vmatprep.subr.mxu0 0.0
        %920 = vmatpush1.msra.mxu0 %v906
        %921 = vmatprep.subr.mxu0 0.0
        %922 = vmatpush1.msra.mxu0 0.0
        %923 = vmatprep.subr.mxu0 0.0
        %924 = vmatpush1.msra.mxu0 0.0
        %925 = vmatprep.subr.mxu0 0.0
        %926 = vmatpush1.msra.mxu0 0.0
        %927 = vmatprep.subr.mxu0 0.0
        %928 = vmatpush1.msra.mxu0 0.0
        %929 = vmatprep.subr.mxu0 0.0
        %930 = vmatpush1.msra.mxu0 0.0
        %931 = vmatprep.subr.mxu0 0.0
        %932 = vmatpush1.msra.mxu0 0.0
        %933 = vmatprep.subr.mxu0 0.0
        %934 = vmatpush1.msra.mxu0 0.0
        %935 = vmatprep.subr.mxu0 0.0
        %936 = vmatpush1.msra.mxu0 0.0
        %937 = vmatprep.subr.mxu0 0.0
        %938 = vmatpush1.msra.mxu0 0.0
        %939 = vmatprep.subr.mxu0 0.0
        %940 = vmatpush1.msra.mxu0 0.0
        %941 = vmatprep.subr.mxu0 0.0
        %942 = vmatpush1.msra.mxu0 0.0
        %943 = vmatprep.subr.mxu0 0.0
        %944 = vmatpush1.msra.mxu0 0.0
        %945 = vmatprep.subr.mxu0 0.0
        %946 = vmatpush1.msra.mxu0 0.0
        %947 = vmatprep.subr.mxu0 0.0
        %948 = vmatpush1.msra.mxu0 0.0
        %949 = vmatprep.subr.mxu0 0.0
        %950 = vmatpush1.msra.mxu0 0.0
        %951 = vmatprep.subr.mxu0 0.0
        %952 = vmatpush1.msra.mxu0 0.0
        %953 = vmatprep.subr.mxu0 0.0
        %954 = vmatpush1.msra.mxu0 0.0
        %955 = vmatprep.subr.mxu0 0.0
        %956 = vmatpush1.msra.mxu0 0.0
        %957 = vmatprep.subr.mxu0 0.0
        %958 = vmatpush1.msra.mxu0 0.0
        %959 = vmatprep.subr.mxu0 0.0
        %960 = vmatpush1.msra.mxu0 0.0
        %961 = vmatprep.subr.mxu0 0.0
        %962 = vmatpush1.msra.mxu0 0.0
        %963 = vmatprep.subr.mxu0 0.0
        %964 = vmatpush1.msra.mxu0 0.0
        %965 = vmatprep.subr.mxu0 0.0
        %966 = vmatpush1.msra.mxu0 0.0
        %967 = vmatprep.subr.mxu0 0.0
        %968 = vmatpush1.msra.mxu0 0.0
        %969 = vmatprep.subr.mxu0 0.0
        %970 = vmatpush1.msra.mxu0 0.0
        %971 = vmatprep.subr.mxu0 0.0
        %972 = vmatpush1.msra.mxu0 0.0
        %973 = vmatprep.subr.mxu0 0.0
        %974 = vmatpush1.msra.mxu0 0.0
        %975 = vmatprep.subr.mxu0 0.0
        %976 = vmatpush1.msra.mxu0 0.0
        %977 = vmatprep.subr.mxu0 0.0
        %978 = vmatpush1.msra.mxu0 0.0
        %979 = vmatprep.subr.mxu0 0.0
        %980 = vmatpush1.msra.mxu0 0.0
        %981 = vmatprep.subr.mxu0 0.0
        %982 = vmatpush1.msra.mxu0 0.0
        %983 = vmatprep.mubr.f32.mxu0 0.0
        %984 = vmatmul.mubr.f32.gmra.mrb[0].mxu0 %v908
        %v985 = vpop.f32.mrb[0].mxu0
        %v986 = vadd.f32 0.0, %v985
        %v987 = vpop.f32.mrb[0].mxu0
        %988 = vmatprep.mubr.f32.mxu0 0.0
        %989 = vmatmul.mubr.f32.gmra.mrb[0].mxu0 %v911
        %v990 = vpop.f32.mrb[0].mxu0
        %v991 = vadd.f32 0.0, %v990
        %v992 = vpop.f32.mrb[0].mxu0
        %993 = vmatprep.mubr.f32.mxu0 0.0
        %994 = vmatmul.mubr.f32.gmra.mrb[0].mxu0 %v914
        %v995 = vpop.f32.mrb[0].mxu0
        %v996 = vadd.f32 0.0, %v995
        %v997 = vpop.f32.mrb[0].mxu0
        %998 = vmatprep.mubr.f32.mxu0 0.0
        %999 = vmatmul.mubr.f32.gmra.mrb[0].mxu0 %v917
        %v1000 = vpop.f32.mrb[0].mxu0
        %v1001 = vadd.f32 0.0, %v1000
        %v1002 = vpop.f32.mrb[0].mxu0
        %1003 = vdwg.mxu0
        %v1004 = vld [vmem:[%s706] sm:$0xff]
        %v1005 = vld [vmem:[%s706 + $0x8] sm:$0xff]
        %v1006 = vld [vmem:[%s706 + $0x10] sm:$0xff]
        %v1007 = vld [vmem:[%s706 + $0x18] sm:$0xff]
        %v1008 = vld [vmem:[#allocation9] sm:$0xff]
        %v1010 = vsel %vm804, %v1004, 0
        %v1013 = vsel %vm804, %v1005, 0
        %v1016 = vsel %vm804, %v1006, 0
        %v1019 = vsel %vm804, %v1007, 0
        %1021 = vmatprep.subr.mxu0 0.0
        %1022 = vmatpush1.msra.mxu0 %v1008
        %1023 = vmatprep.subr.mxu0 0.0
        %1024 = vmatpush1.msra.mxu0 0.0
        %1025 = vmatprep.subr.mxu0 0.0
        %1026 = vmatpush1.msra.mxu0 0.0
        %1027 = vmatprep.subr.mxu0 0.0
        %1028 = vmatpush1.msra.mxu0 0.0
        %1029 = vmatprep.subr.mxu0 0.0
        %1030 = vmatpush1.msra.mxu0 0.0
        %1031 = vmatprep.subr.mxu0 0.0
        %1032 = vmatpush1.msra.mxu0 0.0
        %1033 = vmatprep.subr.mxu0 0.0
        %1034 = vmatpush1.msra.mxu0 0.0
        %1035 = vmatprep.subr.mxu0 0.0
        %1036 = vmatpush1.msra.mxu0 0.0
        %1037 = vmatprep.subr.mxu0 0.0
        %1038 = vmatpush1.msra.mxu0 0.0
        %1039 = vmatprep.subr.mxu0 0.0
        %1040 = vmatpush1.msra.mxu0 0.0
        %1041 = vmatprep.subr.mxu0 0.0
        %1042 = vmatpush1.msra.mxu0 0.0
        %1043 = vmatprep.subr.mxu0 0.0
        %1044 = vmatpush1.msra.mxu0 0.0
        %1045 = vmatprep.subr.mxu0 0.0
        %1046 = vmatpush1.msra.mxu0 0.0
        %1047 = vmatprep.subr.mxu0 0.0
        %1048 = vmatpush1.msra.mxu0 0.0
        %1049 = vmatprep.subr.mxu0 0.0
        %1050 = vmatpush1.msra.mxu0 0.0
        %1051 = vmatprep.subr.mxu0 0.0
        %1052 = vmatpush1.msra.mxu0 0.0
        %1053 = vmatprep.subr.mxu0 0.0
        %1054 = vmatpush1.msra.mxu0 0.0
        %1055 = vmatprep.subr.mxu0 0.0
        %1056 = vmatpush1.msra.mxu0 0.0
        %1057 = vmatprep.subr.mxu0 0.0
        %1058 = vmatpush1.msra.mxu0 0.0
        %1059 = vmatprep.subr.mxu0 0.0
        %1060 = vmatpush1.msra.mxu0 0.0
        %1061 = vmatprep.subr.mxu0 0.0
        %1062 = vmatpush1.msra.mxu0 0.0
        %1063 = vmatprep.subr.mxu0 0.0
        %1064 = vmatpush1.msra.mxu0 0.0
        %1065 = vmatprep.subr.mxu0 0.0
        %1066 = vmatpush1.msra.mxu0 0.0
        %1067 = vmatprep.subr.mxu0 0.0
        %1068 = vmatpush1.msra.mxu0 0.0
        %1069 = vmatprep.subr.mxu0 0.0
        %1070 = vmatpush1.msra.mxu0 0.0
        %1071 = vmatprep.subr.mxu0 0.0
        %1072 = vmatpush1.msra.mxu0 0.0
        %1073 = vmatprep.subr.mxu0 0.0
        %1074 = vmatpush1.msra.mxu0 0.0
        %1075 = vmatprep.subr.mxu0 0.0
        %1076 = vmatpush1.msra.mxu0 0.0
        %1077 = vmatprep.subr.mxu0 0.0
        %1078 = vmatpush1.msra.mxu0 0.0
        %1079 = vmatprep.subr.mxu0 0.0
        %1080 = vmatpush1.msra.mxu0 0.0
        %1081 = vmatprep.subr.mxu0 0.0
        %1082 = vmatpush1.msra.mxu0 0.0
        %1083 = vmatprep.subr.mxu0 0.0
        %1084 = vmatpush1.msra.mxu0 0.0
        %1085 = vmatprep.mubr.f32.mxu0 0.0
        %1086 = vmatmul.mubr.f32.gmra.mrb[0].mxu0 %v1010
        %v1087 = vpop.f32.mrb[0].mxu0
        %v1088 = vadd.f32 0.0, %v1087
        %v1089 = vpop.f32.mrb[0].mxu0
        %1090 = vmatprep.mubr.f32.mxu0 0.0
        %1091 = vmatmul.mubr.f32.gmra.mrb[0].mxu0 %v1013
        %v1092 = vpop.f32.mrb[0].mxu0
        %v1093 = vadd.f32 0.0, %v1092
        %v1094 = vpop.f32.mrb[0].mxu0
        %1095 = vmatprep.mubr.f32.mxu0 0.0
        %1096 = vmatmul.mubr.f32.gmra.mrb[0].mxu0 %v1016
        %v1097 = vpop.f32.mrb[0].mxu0
        %v1098 = vadd.f32 0.0, %v1097
        %v1099 = vpop.f32.mrb[0].mxu0
        %1100 = vmatprep.mubr.f32.mxu0 0.0
        %1101 = vmatmul.mubr.f32.gmra.mrb[0].mxu0 %v1019
        %v1102 = vpop.f32.mrb[0].mxu0
        %v1103 = vadd.f32 0.0, %v1102
        %v1104 = vpop.f32.mrb[0].mxu0
        %1105 = vdwg.mxu0
        %v1107 = vsel %vm804, %v884, 0
        %v1110 = vsel %vm804, %v986, 0
        %1112 = vmatprep.subr.mxu0 0.0
        %1113 = vmatpush1.xpose.msra.mxu0 %v1110
        %1114 = vmatprep.subr.mxu0 0.0
        %1115 = vmatpush1.xpose.msra.mxu0 0.0
        %1116 = vmatprep.subr.mxu0 0.0
        %1117 = vmatpush1.xpose.msra.mxu0 0.0
        %1118 = vmatprep.subr.mxu0 0.0
        %1119 = vmatpush1.xpose.msra.mxu0 0.0
        %1120 = vmatprep.subr.mxu0 0.0
        %1121 = vmatpush1.xpose.msra.mxu0 0.0
        %1122 = vmatprep.subr.mxu0 0.0
        %1123 = vmatpush1.xpose.msra.mxu0 0.0
        %1124 = vmatprep.subr.mxu0 0.0
        %1125 = vmatpush1.xpose.msra.mxu0 0.0
        %1126 = vmatprep.subr.mxu0 0.0
        %1127 = vmatpush1.xpose.msra.mxu0 0.0
        %1128 = vmatprep.subr.mxu0 0.0
        %1129 = vmatpush1.xpose.msra.mxu0 0.0
        %1130 = vmatprep.subr.mxu0 0.0
        %1131 = vmatpush1.xpose.msra.mxu0 0.0
        %1132 = vmatprep.subr.mxu0 0.0
        %1133 = vmatpush1.xpose.msra.mxu0 0.0
        %1134 = vmatprep.subr.mxu0 0.0
        %1135 = vmatpush1.xpose.msra.mxu0 0.0
        %1136 = vmatprep.subr.mxu0 0.0
        %1137 = vmatpush1.xpose.msra.mxu0 0.0
        %1138 = vmatprep.subr.mxu0 0.0
        %1139 = vmatpush1.xpose.msra.mxu0 0.0
        %1140 = vmatprep.subr.mxu0 0.0
        %1141 = vmatpush1.xpose.msra.mxu0 0.0
        %1142 = vmatprep.subr.mxu0 0.0
        %1143 = vmatpush1.xpose.msra.mxu0 0.0
        %1144 = vmatprep.subr.mxu0 0.0
        %1145 = vmatpush1.xpose.msra.mxu0 0.0
        %1146 = vmatprep.subr.mxu0 0.0
        %1147 = vmatpush1.xpose.msra.mxu0 0.0
        %1148 = vmatprep.subr.mxu0 0.0
        %1149 = vmatpush1.xpose.msra.mxu0 0.0
        %1150 = vmatprep.subr.mxu0 0.0
        %1151 = vmatpush1.xpose.msra.mxu0 0.0
        %1152 = vmatprep.subr.mxu0 0.0
        %1153 = vmatpush1.xpose.msra.mxu0 0.0
        %1154 = vmatprep.subr.mxu0 0.0
        %1155 = vmatpush1.xpose.msra.mxu0 0.0
        %1156 = vmatprep.subr.mxu0 0.0
        %1157 = vmatpush1.xpose.msra.mxu0 0.0
        %1158 = vmatprep.subr.mxu0 0.0
        %1159 = vmatpush1.xpose.msra.mxu0 0.0
        %1160 = vmatprep.subr.mxu0 0.0
        %1161 = vmatpush1.xpose.msra.mxu0 0.0
        %1162 = vmatprep.subr.mxu0 0.0
        %1163 = vmatpush1.xpose.msra.mxu0 0.0
        %1164 = vmatprep.subr.mxu0 0.0
        %1165 = vmatpush1.xpose.msra.mxu0 0.0
        %1166 = vmatprep.subr.mxu0 0.0
        %1167 = vmatpush1.xpose.msra.mxu0 0.0
        %1168 = vmatprep.subr.mxu0 0.0
        %1169 = vmatpush1.xpose.msra.mxu0 0.0
        %1170 = vmatprep.subr.mxu0 0.0
        %1171 = vmatpush1.xpose.msra.mxu0 0.0
        %1172 = vmatprep.subr.mxu0 0.0
        %1173 = vmatpush1.xpose.msra.mxu0 0.0
        %1174 = vmatprep.subr.mxu0 0.0
        %1175 = vmatpush1.xpose.msra.mxu0 0.0
        %1176 = vmatprep.mubr.f32.mxu0 0.0
        %1177 = vmatmul.mubr.f32.gmra.mrb[0].mxu0 %v1107
        %v1178 = vpop.f32.mrb[0].mxu0
        %v1179 = vadd.f32 0.0, %v1178
        %v1180 = vpop.f32.mrb[0].mxu0
        %1181 = vdwg.mxu0
        %v1183 = vsel %vm804, %v889, 0
        %v1186 = vsel %vm804, %v991, 0
        %1188 = vmatprep.subr.mxu0 0.0
        %1189 = vmatpush1.xpose.msra.mxu0 %v1186
        %1190 = vmatprep.subr.mxu0 0.0
        %1191 = vmatpush1.xpose.msra.mxu0 0.0
        %1192 = vmatprep.subr.mxu0 0.0
        %1193 = vmatpush1.xpose.msra.mxu0 0.0
        %1194 = vmatprep.subr.mxu0 0.0
        %1195 = vmatpush1.xpose.msra.mxu0 0.0
        %1196 = vmatprep.subr.mxu0 0.0
        %1197 = vmatpush1.xpose.msra.mxu0 0.0
        %1198 = vmatprep.subr.mxu0 0.0
        %1199 = vmatpush1.xpose.msra.mxu0 0.0
        %1200 = vmatprep.subr.mxu0 0.0
        %1201 = vmatpush1.xpose.msra.mxu0 0.0
        %1202 = vmatprep.subr.mxu0 0.0
        %1203 = vmatpush1.xpose.msra.mxu0 0.0
        %1204 = vmatprep.subr.mxu0 0.0
        %1205 = vmatpush1.xpose.msra.mxu0 0.0
        %1206 = vmatprep.subr.mxu0 0.0
        %1207 = vmatpush1.xpose.msra.mxu0 0.0
        %1208 = vmatprep.subr.mxu0 0.0
        %1209 = vmatpush1.xpose.msra.mxu0 0.0
        %1210 = vmatprep.subr.mxu0 0.0
        %1211 = vmatpush1.xpose.msra.mxu0 0.0
        %1212 = vmatprep.subr.mxu0 0.0
        %1213 = vmatpush1.xpose.msra.mxu0 0.0
        %1214 = vmatprep.subr.mxu0 0.0
        %1215 = vmatpush1.xpose.msra.mxu0 0.0
        %1216 = vmatprep.subr.mxu0 0.0
        %1217 = vmatpush1.xpose.msra.mxu0 0.0
        %1218 = vmatprep.subr.mxu0 0.0
        %1219 = vmatpush1.xpose.msra.mxu0 0.0
        %1220 = vmatprep.subr.mxu0 0.0
        %1221 = vmatpush1.xpose.msra.mxu0 0.0
        %1222 = vmatprep.subr.mxu0 0.0
        %1223 = vmatpush1.xpose.msra.mxu0 0.0
        %1224 = vmatprep.subr.mxu0 0.0
        %1225 = vmatpush1.xpose.msra.mxu0 0.0
        %1226 = vmatprep.subr.mxu0 0.0
        %1227 = vmatpush1.xpose.msra.mxu0 0.0
        %1228 = vmatprep.subr.mxu0 0.0
        %1229 = vmatpush1.xpose.msra.mxu0 0.0
        %1230 = vmatprep.subr.mxu0 0.0
        %1231 = vmatpush1.xpose.msra.mxu0 0.0
        %1232 = vmatprep.subr.mxu0 0.0
        %1233 = vmatpush1.xpose.msra.mxu0 0.0
        %1234 = vmatprep.subr.mxu0 0.0
        %1235 = vmatpush1.xpose.msra.mxu0 0.0
        %1236 = vmatprep.subr.mxu0 0.0
        %1237 = vmatpush1.xpose.msra.mxu0 0.0
        %1238 = vmatprep.subr.mxu0 0.0
        %1239 = vmatpush1.xpose.msra.mxu0 0.0
        %1240 = vmatprep.subr.mxu0 0.0
        %1241 = vmatpush1.xpose.msra.mxu0 0.0
        %1242 = vmatprep.subr.mxu0 0.0
        %1243 = vmatpush1.xpose.msra.mxu0 0.0
        %1244 = vmatprep.subr.mxu0 0.0
        %1245 = vmatpush1.xpose.msra.mxu0 0.0
        %1246 = vmatprep.subr.mxu0 0.0
        %1247 = vmatpush1.xpose.msra.mxu0 0.0
        %1248 = vmatprep.subr.mxu0 0.0
        %1249 = vmatpush1.xpose.msra.mxu0 0.0
        %1250 = vmatprep.subr.mxu0 0.0
        %1251 = vmatpush1.xpose.msra.mxu0 0.0
        %1252 = vmatprep.mubr.f32.mxu0 0.0
        %1253 = vmatmul.mubr.f32.gmra.mrb[0].mxu0 %v1183
        %v1254 = vpop.f32.mrb[0].mxu0
        %v1255 = vadd.f32 0.0, %v1254
        %v1256 = vpop.f32.mrb[0].mxu0
        %1257 = vdwg.mxu0
        %v1259 = vsel %vm804, %v894, 0
        %v1262 = vsel %vm804, %v996, 0
        %1264 = vmatprep.subr.mxu0 0.0
        %1265 = vmatpush1.xpose.msra.mxu0 %v1262
        %1266 = vmatprep.subr.mxu0 0.0
        %1267 = vmatpush1.xpose.msra.mxu0 0.0
        %1268 = vmatprep.subr.mxu0 0.0
        %1269 = vmatpush1.xpose.msra.mxu0 0.0
        %1270 = vmatprep.subr.mxu0 0.0
        %1271 = vmatpush1.xpose.msra.mxu0 0.0
        %1272 = vmatprep.subr.mxu0 0.0
        %1273 = vmatpush1.xpose.msra.mxu0 0.0
        %1274 = vmatprep.subr.mxu0 0.0
        %1275 = vmatpush1.xpose.msra.mxu0 0.0
        %1276 = vmatprep.subr.mxu0 0.0
        %1277 = vmatpush1.xpose.msra.mxu0 0.0
        %1278 = vmatprep.subr.mxu0 0.0
        %1279 = vmatpush1.xpose.msra.mxu0 0.0
        %1280 = vmatprep.subr.mxu0 0.0
        %1281 = vmatpush1.xpose.msra.mxu0 0.0
        %1282 = vmatprep.subr.mxu0 0.0
        %1283 = vmatpush1.xpose.msra.mxu0 0.0
        %1284 = vmatprep.subr.mxu0 0.0
        %1285 = vmatpush1.xpose.msra.mxu0 0.0
        %1286 = vmatprep.subr.mxu0 0.0
        %1287 = vmatpush1.xpose.msra.mxu0 0.0
        %1288 = vmatprep.subr.mxu0 0.0
        %1289 = vmatpush1.xpose.msra.mxu0 0.0
        %1290 = vmatprep.subr.mxu0 0.0
        %1291 = vmatpush1.xpose.msra.mxu0 0.0
        %1292 = vmatprep.subr.mxu0 0.0
        %1293 = vmatpush1.xpose.msra.mxu0 0.0
        %1294 = vmatprep.subr.mxu0 0.0
        %1295 = vmatpush1.xpose.msra.mxu0 0.0
        %1296 = vmatprep.subr.mxu0 0.0
        %1297 = vmatpush1.xpose.msra.mxu0 0.0
        %1298 = vmatprep.subr.mxu0 0.0
        %1299 = vmatpush1.xpose.msra.mxu0 0.0
        %1300 = vmatprep.subr.mxu0 0.0
        %1301 = vmatpush1.xpose.msra.mxu0 0.0
        %1302 = vmatprep.subr.mxu0 0.0
        %1303 = vmatpush1.xpose.msra.mxu0 0.0
        %1304 = vmatprep.subr.mxu0 0.0
        %1305 = vmatpush1.xpose.msra.mxu0 0.0
        %1306 = vmatprep.subr.mxu0 0.0
        %1307 = vmatpush1.xpose.msra.mxu0 0.0
        %1308 = vmatprep.subr.mxu0 0.0
        %1309 = vmatpush1.xpose.msra.mxu0 0.0
        %1310 = vmatprep.subr.mxu0 0.0
        %1311 = vmatpush1.xpose.msra.mxu0 0.0
        %1312 = vmatprep.subr.mxu0 0.0
        %1313 = vmatpush1.xpose.msra.mxu0 0.0
        %1314 = vmatprep.subr.mxu0 0.0
        %1315 = vmatpush1.xpose.msra.mxu0 0.0
        %1316 = vmatprep.subr.mxu0 0.0
        %1317 = vmatpush1.xpose.msra.mxu0 0.0
        %1318 = vmatprep.subr.mxu0 0.0
        %1319 = vmatpush1.xpose.msra.mxu0 0.0
        %1320 = vmatprep.subr.mxu0 0.0
        %1321 = vmatpush1.xpose.msra.mxu0 0.0
        %1322 = vmatprep.subr.mxu0 0.0
        %1323 = vmatpush1.xpose.msra.mxu0 0.0
        %1324 = vmatprep.subr.mxu0 0.0
        %1325 = vmatpush1.xpose.msra.mxu0 0.0
        %1326 = vmatprep.subr.mxu0 0.0
        %1327 = vmatpush1.xpose.msra.mxu0 0.0
        %1328 = vmatprep.mubr.f32.mxu0 0.0
        %1329 = vmatmul.mubr.f32.gmra.mrb[0].mxu0 %v1259
        %v1330 = vpop.f32.mrb[0].mxu0
        %v1331 = vadd.f32 0.0, %v1330
        %v1332 = vpop.f32.mrb[0].mxu0
        %1333 = vdwg.mxu0
        %v1335 = vsel %vm804, %v899, 0
        %v1338 = vsel %vm804, %v1001, 0
        %1340 = vmatprep.subr.mxu0 0.0
        %1341 = vmatpush1.xpose.msra.mxu0 %v1338
        %1342 = vmatprep.subr.mxu0 0.0
        %1343 = vmatpush1.xpose.msra.mxu0 0.0
        %1344 = vmatprep.subr.mxu0 0.0
        %1345 = vmatpush1.xpose.msra.mxu0 0.0
        %1346 = vmatprep.subr.mxu0 0.0
        %1347 = vmatpush1.xpose.msra.mxu0 0.0
        %1348 = vmatprep.subr.mxu0 0.0
        %1349 = vmatpush1.xpose.msra.mxu0 0.0
        %1350 = vmatprep.subr.mxu0 0.0
        %1351 = vmatpush1.xpose.msra.mxu0 0.0
        %1352 = vmatprep.subr.mxu0 0.0
        %1353 = vmatpush1.xpose.msra.mxu0 0.0
        %1354 = vmatprep.subr.mxu0 0.0
        %1355 = vmatpush1.xpose.msra.mxu0 0.0
        %1356 = vmatprep.subr.mxu0 0.0
        %1357 = vmatpush1.xpose.msra.mxu0 0.0
        %1358 = vmatprep.subr.mxu0 0.0
        %1359 = vmatpush1.xpose.msra.mxu0 0.0
        %1360 = vmatprep.subr.mxu0 0.0
        %1361 = vmatpush1.xpose.msra.mxu0 0.0
        %1362 = vmatprep.subr.mxu0 0.0
        %1363 = vmatpush1.xpose.msra.mxu0 0.0
        %1364 = vmatprep.subr.mxu0 0.0
        %1365 = vmatpush1.xpose.msra.mxu0 0.0
        %1366 = vmatprep.subr.mxu0 0.0
        %1367 = vmatpush1.xpose.msra.mxu0 0.0
        %1368 = vmatprep.subr.mxu0 0.0
        %1369 = vmatpush1.xpose.msra.mxu0 0.0
        %1370 = vmatprep.subr.mxu0 0.0
        %1371 = vmatpush1.xpose.msra.mxu0 0.0
        %1372 = vmatprep.subr.mxu0 0.0
        %1373 = vmatpush1.xpose.msra.mxu0 0.0
        %1374 = vmatprep.subr.mxu0 0.0
        %1375 = vmatpush1.xpose.msra.mxu0 0.0
        %1376 = vmatprep.subr.mxu0 0.0
        %1377 = vmatpush1.xpose.msra.mxu0 0.0
        %1378 = vmatprep.subr.mxu0 0.0
        %1379 = vmatpush1.xpose.msra.mxu0 0.0
        %1380 = vmatprep.subr.mxu0 0.0
        %1381 = vmatpush1.xpose.msra.mxu0 0.0
        %1382 = vmatprep.subr.mxu0 0.0
        %1383 = vmatpush1.xpose.msra.mxu0 0.0
        %1384 = vmatprep.subr.mxu0 0.0
        %1385 = vmatpush1.xpose.msra.mxu0 0.0
        %1386 = vmatprep.subr.mxu0 0.0
        %1387 = vmatpush1.xpose.msra.mxu0 0.0
        %1388 = vmatprep.subr.mxu0 0.0
        %1389 = vmatpush1.xpose.msra.mxu0 0.0
        %1390 = vmatprep.subr.mxu0 0.0
        %1391 = vmatpush1.xpose.msra.mxu0 0.0
        %1392 = vmatprep.subr.mxu0 0.0
        %1393 = vmatpush1.xpose.msra.mxu0 0.0
        %1394 = vmatprep.subr.mxu0 0.0
        %1395 = vmatpush1.xpose.msra.mxu0 0.0
        %1396 = vmatprep.subr.mxu0 0.0
        %1397 = vmatpush1.xpose.msra.mxu0 0.0
        %1398 = vmatprep.subr.mxu0 0.0
        %1399 = vmatpush1.xpose.msra.mxu0 0.0
        %1400 = vmatprep.subr.mxu0 0.0
        %1401 = vmatpush1.xpose.msra.mxu0 0.0
        %1402 = vmatprep.subr.mxu0 0.0
        %1403 = vmatpush1.xpose.msra.mxu0 0.0
        %1404 = vmatprep.mubr.f32.mxu0 0.0
        %1405 = vmatmul.mubr.f32.gmra.mrb[0].mxu0 %v1335
        %v1406 = vpop.f32.mrb[0].mxu0
        %v1407 = vadd.f32 0.0, %v1406
        %v1408 = vpop.f32.mrb[0].mxu0
        %1409 = vdwg.mxu0
        %v1410 = vsel %vm804, %v1179, -inf
        %1411 = vmax.xlane.f32.xlu0 %v1410
        %v1412 = vpop.xlane.xlu0 %1411
        %v1413 = vsel %vm804, %v1255, -inf
        %1414 = vmax.xlane.f32.xlu0 %v1413
        %v1415 = vpop.xlane.xlu0 %1414
        %v1416 = vsel %vm804, %v1331, -inf
        %1417 = vmax.xlane.f32.xlu0 %v1416
        %v1418 = vpop.xlane.xlu0 %1417
        %v1419 = vsel %vm804, %v1407, -inf
        %1420 = vmax.xlane.f32.xlu0 %v1419
        %v1421 = vpop.xlane.xlu0 %1420
        %v1422 = vsub.f32 %v1179, %v1412
        %v1423 = vsub.f32 %v1255, %v1415
        %v1424 = vsub.f32 %v1331, %v1418
        %v1425 = vsub.f32 %v1407, %v1421
        %v1426 = vmul.f32 %v1422, 1.442695
        %v1427 = vpow.pop %v1426
        %v1428 = vmul.f32 %v1423, 1.442695
        %v1429 = vpow.pop %v1428
        %v1430 = vmul.f32 %v1424, 1.442695
        %v1431 = vpow.pop %v1430
        %v1432 = vmul.f32 %v1425, 1.442695
        %v1433 = vpow.pop %v1432
        %v1434 = vsel %vm804, %v1427, 0.0
        %1435 = vadd.xlane.f32.xlu0 %v1434
        %v1436 = vpop.xlane.xlu0 %1435
        %v1437 = vsel %vm804, %v1429, 0.0
        %1438 = vadd.xlane.f32.xlu0 %v1437
        %v1439 = vpop.xlane.xlu0 %1438
        %v1440 = vsel %vm804, %v1431, 0.0
        %1441 = vadd.xlane.f32.xlu0 %v1440
        %v1442 = vpop.xlane.xlu0 %1441
        %v1443 = vsel %vm804, %v1433, 0.0
        %1444 = vadd.xlane.f32.xlu0 %v1443
        %v1445 = vpop.xlane.xlu0 %1444
        %v1446 = vrcp.pop %v1436
        %v1447 = vrcp.pop %v1439
        %v1448 = vrcp.pop %v1442
        %v1449 = vrcp.pop %v1445
        %v1450 = vmul.f32 %v1427, %v1446
        %v1451 = vmul.f32 %v1429, %v1447
        %v1452 = vmul.f32 %v1431, %v1448
        %v1453 = vmul.f32 %v1433, %v1449
        %v1455 = vsel %vm804, %v1450, 0
        %1457 = vmatprep.subr.mxu0 0.0
        %1458 = vmatpush1.msra.mxu0 %v1088
        %1459 = vmatprep.subr.mxu0 0.0
        %1460 = vmatpush1.msra.mxu0 0.0
        %1461 = vmatprep.subr.mxu0 0.0
        %1462 = vmatpush1.msra.mxu0 0.0
        %1463 = vmatprep.subr.mxu0 0.0
        %1464 = vmatpush1.msra.mxu0 0.0
        %1465 = vmatprep.subr.mxu0 0.0
        %1466 = vmatpush1.msra.mxu0 0.0
        %1467 = vmatprep.subr.mxu0 0.0
        %1468 = vmatpush1.msra.mxu0 0.0
        %1469 = vmatprep.subr.mxu0 0.0
        %1470 = vmatpush1.msra.mxu0 0.0
        %1471 = vmatprep.subr.mxu0 0.0
        %1472 = vmatpush1.msra.mxu0 0.0
        %1473 = vmatprep.subr.mxu0 0.0
        %1474 = vmatpush1.msra.mxu0 0.0
        %1475 = vmatprep.subr.mxu0 0.0
        %1476 = vmatpush1.msra.mxu0 0.0
        %1477 = vmatprep.subr.mxu0 0.0
        %1478 = vmatpush1.msra.mxu0 0.0
        %1479 = vmatprep.subr.mxu0 0.0
        %1480 = vmatpush1.msra.mxu0 0.0
        %1481 = vmatprep.subr.mxu0 0.0
        %1482 = vmatpush1.msra.mxu0 0.0
        %1483 = vmatprep.subr.mxu0 0.0
        %1484 = vmatpush1.msra.mxu0 0.0
        %1485 = vmatprep.subr.mxu0 0.0
        %1486 = vmatpush1.msra.mxu0 0.0
        %1487 = vmatprep.subr.mxu0 0.0
        %1488 = vmatpush1.msra.mxu0 0.0
        %1489 = vmatprep.subr.mxu0 0.0
        %1490 = vmatpush1.msra.mxu0 0.0
        %1491 = vmatprep.subr.mxu0 0.0
        %1492 = vmatpush1.msra.mxu0 0.0
        %1493 = vmatprep.subr.mxu0 0.0
        %1494 = vmatpush1.msra.mxu0 0.0
        %1495 = vmatprep.subr.mxu0 0.0
        %1496 = vmatpush1.msra.mxu0 0.0
        %1497 = vmatprep.subr.mxu0 0.0
        %1498 = vmatpush1.msra.mxu0 0.0
        %1499 = vmatprep.subr.mxu0 0.0
        %1500 = vmatpush1.msra.mxu0 0.0
        %1501 = vmatprep.subr.mxu0 0.0
        %1502 = vmatpush1.msra.mxu0 0.0
        %1503 = vmatprep.subr.mxu0 0.0
        %1504 = vmatpush1.msra.mxu0 0.0
        %1505 = vmatprep.subr.mxu0 0.0
        %1506 = vmatpush1.msra.mxu0 0.0
        %1507 = vmatprep.subr.mxu0 0.0
        %1508 = vmatpush1.msra.mxu0 0.0
        %1509 = vmatprep.subr.mxu0 0.0
        %1510 = vmatpush1.msra.mxu0 0.0
        %1511 = vmatprep.subr.mxu0 0.0
        %1512 = vmatpush1.msra.mxu0 0.0
        %1513 = vmatprep.subr.mxu0 0.0
        %1514 = vmatpush1.msra.mxu0 0.0
        %1515 = vmatprep.subr.mxu0 0.0
        %1516 = vmatpush1.msra.mxu0 0.0
        %1517 = vmatprep.subr.mxu0 0.0
        %1518 = vmatpush1.msra.mxu0 0.0
        %1519 = vmatprep.subr.mxu0 0.0
        %1520 = vmatpush1.msra.mxu0 0.0
        %1521 = vmatprep.mubr.f32.mxu0 0.0
        %1522 = vmatmul.mubr.f32.gmra.mrb[0].mxu0 %v1455
        %v1523 = vpop.f32.mrb[0].mxu0
        %v1524 = vadd.f32 0.0, %v1523
        %v1525 = vpop.f32.mrb[0].mxu0
        %1526 = vdwg.mxu0
        %v1528 = vsel %vm804, %v1451, 0
        %1530 = vmatprep.subr.mxu0 0.0
        %1531 = vmatpush1.msra.mxu0 %v1093
        %1532 = vmatprep.subr.mxu0 0.0
        %1533 = vmatpush1.msra.mxu0 0.0
        %1534 = vmatprep.subr.mxu0 0.0
        %1535 = vmatpush1.msra.mxu0 0.0
        %1536 = vmatprep.subr.mxu0 0.0
        %1537 = vmatpush1.msra.mxu0 0.0
        %1538 = vmatprep.subr.mxu0 0.0
        %1539 = vmatpush1.msra.mxu0 0.0
        %1540 = vmatprep.subr.mxu0 0.0
        %1541 = vmatpush1.msra.mxu0 0.0
        %1542 = vmatprep.subr.mxu0 0.0
        %1543 = vmatpush1.msra.mxu0 0.0
        %1544 = vmatprep.subr.mxu0 0.0
        %1545 = vmatpush1.msra.mxu0 0.0
        %1546 = vmatprep.subr.mxu0 0.0
        %1547 = vmatpush1.msra.mxu0 0.0
        %1548 = vmatprep.subr.mxu0 0.0
        %1549 = vmatpush1.msra.mxu0 0.0
        %1550 = vmatprep.subr.mxu0 0.0
        %1551 = vmatpush1.msra.mxu0 0.0
        %1552 = vmatprep.subr.mxu0 0.0
        %1553 = vmatpush1.msra.mxu0 0.0
        %1554 = vmatprep.subr.mxu0 0.0
        %1555 = vmatpush1.msra.mxu0 0.0
        %1556 = vmatprep.subr.mxu0 0.0
        %1557 = vmatpush1.msra.mxu0 0.0
        %1558 = vmatprep.subr.mxu0 0.0
        %1559 = vmatpush1.msra.mxu0 0.0
        %1560 = vmatprep.subr.mxu0 0.0
        %1561 = vmatpush1.msra.mxu0 0.0
        %1562 = vmatprep.subr.mxu0 0.0
        %1563 = vmatpush1.msra.mxu0 0.0
        %1564 = vmatprep.subr.mxu0 0.0
        %1565 = vmatpush1.msra.mxu0 0.0
        %1566 = vmatprep.subr.mxu0 0.0
        %1567 = vmatpush1.msra.mxu0 0.0
        %1568 = vmatprep.subr.mxu0 0.0
        %1569 = vmatpush1.msra.mxu0 0.0
        %1570 = vmatprep.subr.mxu0 0.0
        %1571 = vmatpush1.msra.mxu0 0.0
        %1572 = vmatprep.subr.mxu0 0.0
        %1573 = vmatpush1.msra.mxu0 0.0
        %1574 = vmatprep.subr.mxu0 0.0
        %1575 = vmatpush1.msra.mxu0 0.0
        %1576 = vmatprep.subr.mxu0 0.0
        %1577 = vmatpush1.msra.mxu0 0.0
        %1578 = vmatprep.subr.mxu0 0.0
        %1579 = vmatpush1.msra.mxu0 0.0
        %1580 = vmatprep.subr.mxu0 0.0
        %1581 = vmatpush1.msra.mxu0 0.0
        %1582 = vmatprep.subr.mxu0 0.0
        %1583 = vmatpush1.msra.mxu0 0.0
        %1584 = vmatprep.subr.mxu0 0.0
        %1585 = vmatpush1.msra.mxu0 0.0
        %1586 = vmatprep.subr.mxu0 0.0
        %1587 = vmatpush1.msra.mxu0 0.0
        %1588 = vmatprep.subr.mxu0 0.0
        %1589 = vmatpush1.msra.mxu0 0.0
        %1590 = vmatprep.subr.mxu0 0.0
        %1591 = vmatpush1.msra.mxu0 0.0
        %1592 = vmatprep.subr.mxu0 0.0
        %1593 = vmatpush1.msra.mxu0 0.0
        %1594 = vmatprep.mubr.f32.mxu0 0.0
        %1595 = vmatmul.mubr.f32.gmra.mrb[0].mxu0 %v1528
        %v1596 = vpop.f32.mrb[0].mxu0
        %v1597 = vadd.f32 0.0, %v1596
        %v1598 = vpop.f32.mrb[0].mxu0
        %1599 = vdwg.mxu0
        %v1601 = vsel %vm804, %v1452, 0
        %1603 = vmatprep.subr.mxu0 0.0
        %1604 = vmatpush1.msra.mxu0 %v1098
        %1605 = vmatprep.subr.mxu0 0.0
        %1606 = vmatpush1.msra.mxu0 0.0
        %1607 = vmatprep.subr.mxu0 0.0
        %1608 = vmatpush1.msra.mxu0 0.0
        %1609 = vmatprep.subr.mxu0 0.0
        %1610 = vmatpush1.msra.mxu0 0.0
        %1611 = vmatprep.subr.mxu0 0.0
        %1612 = vmatpush1.msra.mxu0 0.0
        %1613 = vmatprep.subr.mxu0 0.0
        %1614 = vmatpush1.msra.mxu0 0.0
        %1615 = vmatprep.subr.mxu0 0.0
        %1616 = vmatpush1.msra.mxu0 0.0
        %1617 = vmatprep.subr.mxu0 0.0
        %1618 = vmatpush1.msra.mxu0 0.0
        %1619 = vmatprep.subr.mxu0 0.0
        %1620 = vmatpush1.msra.mxu0 0.0
        %1621 = vmatprep.subr.mxu0 0.0
        %1622 = vmatpush1.msra.mxu0 0.0
        %1623 = vmatprep.subr.mxu0 0.0
        %1624 = vmatpush1.msra.mxu0 0.0
        %1625 = vmatprep.subr.mxu0 0.0
        %1626 = vmatpush1.msra.mxu0 0.0
        %1627 = vmatprep.subr.mxu0 0.0
        %1628 = vmatpush1.msra.mxu0 0.0
        %1629 = vmatprep.subr.mxu0 0.0
        %1630 = vmatpush1.msra.mxu0 0.0
        %1631 = vmatprep.subr.mxu0 0.0
        %1632 = vmatpush1.msra.mxu0 0.0
        %1633 = vmatprep.subr.mxu0 0.0
        %1634 = vmatpush1.msra.mxu0 0.0
        %1635 = vmatprep.subr.mxu0 0.0
        %1636 = vmatpush1.msra.mxu0 0.0
        %1637 = vmatprep.subr.mxu0 0.0
        %1638 = vmatpush1.msra.mxu0 0.0
        %1639 = vmatprep.subr.mxu0 0.0
        %1640 = vmatpush1.msra.mxu0 0.0
        %1641 = vmatprep.subr.mxu0 0.0
        %1642 = vmatpush1.msra.mxu0 0.0
        %1643 = vmatprep.subr.mxu0 0.0
        %1644 = vmatpush1.msra.mxu0 0.0
        %1645 = vmatprep.subr.mxu0 0.0
        %1646 = vmatpush1.msra.mxu0 0.0
        %1647 = vmatprep.subr.mxu0 0.0
        %1648 = vmatpush1.msra.mxu0 0.0
        %1649 = vmatprep.subr.mxu0 0.0
        %1650 = vmatpush1.msra.mxu0 0.0
        %1651 = vmatprep.subr.mxu0 0.0
        %1652 = vmatpush1.msra.mxu0 0.0
        %1653 = vmatprep.subr.mxu0 0.0
        %1654 = vmatpush1.msra.mxu0 0.0
        %1655 = vmatprep.subr.mxu0 0.0
        %1656 = vmatpush1.msra.mxu0 0.0
        %1657 = vmatprep.subr.mxu0 0.0
        %1658 = vmatpush1.msra.mxu0 0.0
        %1659 = vmatprep.subr.mxu0 0.0
        %1660 = vmatpush1.msra.mxu0 0.0
        %1661 = vmatprep.subr.mxu0 0.0
        %1662 = vmatpush1.msra.mxu0 0.0
        %1663 = vmatprep.subr.mxu0 0.0
        %1664 = vmatpush1.msra.mxu0 0.0
        %1665 = vmatprep.subr.mxu0 0.0
        %1666 = vmatpush1.msra.mxu0 0.0
        %1667 = vmatprep.mubr.f32.mxu0 0.0
        %1668 = vmatmul.mubr.f32.gmra.mrb[0].mxu0 %v1601
        %v1669 = vpop.f32.mrb[0].mxu0
        %v1670 = vadd.f32 0.0, %v1669
        %v1671 = vpop.f32.mrb[0].mxu0
        %1672 = vdwg.mxu0
        %v1674 = vsel %vm804, %v1453, 0
        %1676 = vmatprep.subr.mxu0 0.0
        %1677 = vmatpush1.msra.mxu0 %v1103
        %1678 = vmatprep.subr.mxu0 0.0
        %1679 = vmatpush1.msra.mxu0 0.0
        %1680 = vmatprep.subr.mxu0 0.0
        %1681 = vmatpush1.msra.mxu0 0.0
        %1682 = vmatprep.subr.mxu0 0.0
        %1683 = vmatpush1.msra.mxu0 0.0
        %1684 = vmatprep.subr.mxu0 0.0
        %1685 = vmatpush1.msra.mxu0 0.0
        %1686 = vmatprep.subr.mxu0 0.0
        %1687 = vmatpush1.msra.mxu0 0.0
        %1688 = vmatprep.subr.mxu0 0.0
        %1689 = vmatpush1.msra.mxu0 0.0
        %1690 = vmatprep.subr.mxu0 0.0
        %1691 = vmatpush1.msra.mxu0 0.0
        %1692 = vmatprep.subr.mxu0 0.0
        %1693 = vmatpush1.msra.mxu0 0.0
        %1694 = vmatprep.subr.mxu0 0.0
        %1695 = vmatpush1.msra.mxu0 0.0
        %1696 = vmatprep.subr.mxu0 0.0
        %1697 = vmatpush1.msra.mxu0 0.0
        %1698 = vmatprep.subr.mxu0 0.0
        %1699 = vmatpush1.msra.mxu0 0.0
        %1700 = vmatprep.subr.mxu0 0.0
        %1701 = vmatpush1.msra.mxu0 0.0
        %1702 = vmatprep.subr.mxu0 0.0
        %1703 = vmatpush1.msra.mxu0 0.0
        %1704 = vmatprep.subr.mxu0 0.0
        %1705 = vmatpush1.msra.mxu0 0.0
        %1706 = vmatprep.subr.mxu0 0.0
        %1707 = vmatpush1.msra.mxu0 0.0
        %1708 = vmatprep.subr.mxu0 0.0
        %1709 = vmatpush1.msra.mxu0 0.0
        %1710 = vmatprep.subr.mxu0 0.0
        %1711 = vmatpush1.msra.mxu0 0.0
        %1712 = vmatprep.subr.mxu0 0.0
        %1713 = vmatpush1.msra.mxu0 0.0
        %1714 = vmatprep.subr.mxu0 0.0
        %1715 = vmatpush1.msra.mxu0 0.0
        %1716 = vmatprep.subr.mxu0 0.0
        %1717 = vmatpush1.msra.mxu0 0.0
        %1718 = vmatprep.subr.mxu0 0.0
        %1719 = vmatpush1.msra.mxu0 0.0
        %1720 = vmatprep.subr.mxu0 0.0
        %1721 = vmatpush1.msra.mxu0 0.0
        %1722 = vmatprep.subr.mxu0 0.0
        %1723 = vmatpush1.msra.mxu0 0.0
        %1724 = vmatprep.subr.mxu0 0.0
        %1725 = vmatpush1.msra.mxu0 0.0
        %1726 = vmatprep.subr.mxu0 0.0
        %1727 = vmatpush1.msra.mxu0 0.0
        %1728 = vmatprep.subr.mxu0 0.0
        %1729 = vmatpush1.msra.mxu0 0.0
        %1730 = vmatprep.subr.mxu0 0.0
        %1731 = vmatpush1.msra.mxu0 0.0
        %1732 = vmatprep.subr.mxu0 0.0
        %1733 = vmatpush1.msra.mxu0 0.0
        %1734 = vmatprep.subr.mxu0 0.0
        %1735 = vmatpush1.msra.mxu0 0.0
        %1736 = vmatprep.subr.mxu0 0.0
        %1737 = vmatpush1.msra.mxu0 0.0
        %1738 = vmatprep.subr.mxu0 0.0
        %1739 = vmatpush1.msra.mxu0 0.0
        %1740 = vmatprep.mubr.f32.mxu0 0.0
        %1741 = vmatmul.mubr.f32.gmra.mrb[0].mxu0 %v1674
        %v1742 = vpop.f32.mrb[0].mxu0
        %v1743 = vadd.f32 0.0, %v1742
        %v1744 = vpop.f32.mrb[0].mxu0
        %1745 = vdwg.mxu0
        %v1746 = vld [vmem:[%s7] sm:$0xff]
        %s1747 = scalar_lea.vmem %s7, 8
        %v1748 = vld [vmem:[%s1747] sm:$0xff]
        %v1750 = vsel %vm804, %v1597, 0
        %1752 = vmatprep.subr.mxu0 0.0
        %1753 = vmatpush1.msra.mxu0 %v1748
        %1754 = vmatprep.subr.mxu0 0.0
        %1755 = vmatpush1.msra.mxu0 0.0
        %1756 = vmatprep.subr.mxu0 0.0
        %1757 = vmatpush1.msra.mxu0 0.0
        %1758 = vmatprep.subr.mxu0 0.0
        %1759 = vmatpush1.msra.mxu0 0.0
        %1760 = vmatprep.subr.mxu0 0.0
        %1761 = vmatpush1.msra.mxu0 0.0
        %1762 = vmatprep.subr.mxu0 0.0
        %1763 = vmatpush1.msra.mxu0 0.0
        %1764 = vmatprep.subr.mxu0 0.0
        %1765 = vmatpush1.msra.mxu0 0.0
        %1766 = vmatprep.subr.mxu0 0.0
        %1767 = vmatpush1.msra.mxu0 0.0
        %1768 = vmatprep.subr.mxu0 0.0
        %1769 = vmatpush1.msra.mxu0 0.0
        %1770 = vmatprep.subr.mxu0 0.0
        %1771 = vmatpush1.msra.mxu0 0.0
        %1772 = vmatprep.subr.mxu0 0.0
        %1773 = vmatpush1.msra.mxu0 0.0
        %1774 = vmatprep.subr.mxu0 0.0
        %1775 = vmatpush1.msra.mxu0 0.0
        %1776 = vmatprep.subr.mxu0 0.0
        %1777 = vmatpush1.msra.mxu0 0.0
        %1778 = vmatprep.subr.mxu0 0.0
        %1779 = vmatpush1.msra.mxu0 0.0
        %1780 = vmatprep.subr.mxu0 0.0
        %1781 = vmatpush1.msra.mxu0 0.0
        %1782 = vmatprep.subr.mxu0 0.0
        %1783 = vmatpush1.msra.mxu0 0.0
        %1784 = vmatprep.subr.mxu0 0.0
        %1785 = vmatpush1.msra.mxu0 0.0
        %1786 = vmatprep.subr.mxu0 0.0
        %1787 = vmatpush1.msra.mxu0 0.0
        %1788 = vmatprep.subr.mxu0 0.0
        %1789 = vmatpush1.msra.mxu0 0.0
        %1790 = vmatprep.subr.mxu0 0.0
        %1791 = vmatpush1.msra.mxu0 0.0
        %1792 = vmatprep.subr.mxu0 0.0
        %1793 = vmatpush1.msra.mxu0 0.0
        %1794 = vmatprep.subr.mxu0 0.0
        %1795 = vmatpush1.msra.mxu0 0.0
        %1796 = vmatprep.subr.mxu0 0.0
        %1797 = vmatpush1.msra.mxu0 0.0
        %1798 = vmatprep.subr.mxu0 0.0
        %1799 = vmatpush1.msra.mxu0 0.0
        %1800 = vmatprep.subr.mxu0 0.0
        %1801 = vmatpush1.msra.mxu0 0.0
        %1802 = vmatprep.subr.mxu0 0.0
        %1803 = vmatpush1.msra.mxu0 0.0
        %1804 = vmatprep.subr.mxu0 0.0
        %1805 = vmatpush1.msra.mxu0 0.0
        %1806 = vmatprep.subr.mxu0 0.0
        %1807 = vmatpush1.msra.mxu0 0.0
        %1808 = vmatprep.subr.mxu0 0.0
        %1809 = vmatpush1.msra.mxu0 0.0
        %1810 = vmatprep.subr.mxu0 0.0
        %1811 = vmatpush1.msra.mxu0 0.0
        %1812 = vmatprep.subr.mxu0 0.0
        %1813 = vmatpush1.msra.mxu0 0.0
        %1814 = vmatprep.subr.mxu0 0.0
        %1815 = vmatpush1.msra.mxu0 0.0
        %1816 = vmatprep.mubr.f32.mxu0 0.0
        %1817 = vmatmul.mubr.f32.gmra.mrb[0].mxu0 %v1750
        %v1818 = vpop.f32.mrb[0].mxu0
        %v1819 = vadd.f32 0.0, %v1818
        %v1820 = vpop.f32.mrb[0].mxu0
        %1821 = vdwg.mxu0
        %v1823 = vsel %vm804, %v1524, 0
        %1825 = vmatprep.subr.mxu0 0.0
        %1826 = vmatpush1.msra.mxu0 %v1746
        %1827 = vmatprep.subr.mxu0 0.0
        %1828 = vmatpush1.msra.mxu0 0.0
        %1829 = vmatprep.subr.mxu0 0.0
        %1830 = vmatpush1.msra.mxu0 0.0
        %1831 = vmatprep.subr.mxu0 0.0
        %1832 = vmatpush1.msra.mxu0 0.0
        %1833 = vmatprep.subr.mxu0 0.0
        %1834 = vmatpush1.msra.mxu0 0.0
        %1835 = vmatprep.subr.mxu0 0.0
        %1836 = vmatpush1.msra.mxu0 0.0
        %1837 = vmatprep.subr.mxu0 0.0
        %1838 = vmatpush1.msra.mxu0 0.0
        %1839 = vmatprep.subr.mxu0 0.0
        %1840 = vmatpush1.msra.mxu0 0.0
        %1841 = vmatprep.subr.mxu0 0.0
        %1842 = vmatpush1.msra.mxu0 0.0
        %1843 = vmatprep.subr.mxu0 0.0
        %1844 = vmatpush1.msra.mxu0 0.0
        %1845 = vmatprep.subr.mxu0 0.0
        %1846 = vmatpush1.msra.mxu0 0.0
        %1847 = vmatprep.subr.mxu0 0.0
        %1848 = vmatpush1.msra.mxu0 0.0
        %1849 = vmatprep.subr.mxu0 0.0
        %1850 = vmatpush1.msra.mxu0 0.0
        %1851 = vmatprep.subr.mxu0 0.0
        %1852 = vmatpush1.msra.mxu0 0.0
        %1853 = vmatprep.subr.mxu0 0.0
        %1854 = vmatpush1.msra.mxu0 0.0
        %1855 = vmatprep.subr.mxu0 0.0
        %1856 = vmatpush1.msra.mxu0 0.0
        %1857 = vmatprep.subr.mxu0 0.0
        %1858 = vmatpush1.msra.mxu0 0.0
        %1859 = vmatprep.subr.mxu0 0.0
        %1860 = vmatpush1.msra.mxu0 0.0
        %1861 = vmatprep.subr.mxu0 0.0
        %1862 = vmatpush1.msra.mxu0 0.0
        %1863 = vmatprep.subr.mxu0 0.0
        %1864 = vmatpush1.msra.mxu0 0.0
        %1865 = vmatprep.subr.mxu0 0.0
        %1866 = vmatpush1.msra.mxu0 0.0
        %1867 = vmatprep.subr.mxu0 0.0
        %1868 = vmatpush1.msra.mxu0 0.0
        %1869 = vmatprep.subr.mxu0 0.0
        %1870 = vmatpush1.msra.mxu0 0.0
        %1871 = vmatprep.subr.mxu0 0.0
        %1872 = vmatpush1.msra.mxu0 0.0
        %1873 = vmatprep.subr.mxu0 0.0
        %1874 = vmatpush1.msra.mxu0 0.0
        %1875 = vmatprep.subr.mxu0 0.0
        %1876 = vmatpush1.msra.mxu0 0.0
        %1877 = vmatprep.subr.mxu0 0.0
        %1878 = vmatpush1.msra.mxu0 0.0
        %1879 = vmatprep.subr.mxu0 0.0
        %1880 = vmatpush1.msra.mxu0 0.0
        %1881 = vmatprep.subr.mxu0 0.0
        %1882 = vmatpush1.msra.mxu0 0.0
        %1883 = vmatprep.subr.mxu0 0.0
        %1884 = vmatpush1.msra.mxu0 0.0
        %1885 = vmatprep.subr.mxu0 0.0
        %1886 = vmatpush1.msra.mxu0 0.0
        %1887 = vmatprep.subr.mxu0 0.0
        %1888 = vmatpush1.msra.mxu0 0.0
        %1889 = vmatprep.mubr.f32.mxu0 0.0
        %1890 = vmatmul.mubr.f32.gmra.mrb[0].mxu0 %v1823
        %v1891 = vpop.f32.mrb[0].mxu0
        %v1892 = vadd.f32 %v1819, %v1891
        %v1893 = vpop.f32.mrb[0].mxu0
        %1894 = vdwg.mxu0
        %s1895 = scalar_lea.vmem %s7, 16
        %v1896 = vld [vmem:[%s1895] sm:$0xff]
        %v1898 = vsel %vm804, %v1670, 0
        %1900 = vmatprep.subr.mxu0 0.0
        %1901 = vmatpush1.msra.mxu0 %v1896
        %1902 = vmatprep.subr.mxu0 0.0
        %1903 = vmatpush1.msra.mxu0 0.0
        %1904 = vmatprep.subr.mxu0 0.0
        %1905 = vmatpush1.msra.mxu0 0.0
        %1906 = vmatprep.subr.mxu0 0.0
        %1907 = vmatpush1.msra.mxu0 0.0
        %1908 = vmatprep.subr.mxu0 0.0
        %1909 = vmatpush1.msra.mxu0 0.0
        %1910 = vmatprep.subr.mxu0 0.0
        %1911 = vmatpush1.msra.mxu0 0.0
        %1912 = vmatprep.subr.mxu0 0.0
        %1913 = vmatpush1.msra.mxu0 0.0
        %1914 = vmatprep.subr.mxu0 0.0
        %1915 = vmatpush1.msra.mxu0 0.0
        %1916 = vmatprep.subr.mxu0 0.0
        %1917 = vmatpush1.msra.mxu0 0.0
        %1918 = vmatprep.subr.mxu0 0.0
        %1919 = vmatpush1.msra.mxu0 0.0
        %1920 = vmatprep.subr.mxu0 0.0
        %1921 = vmatpush1.msra.mxu0 0.0
        %1922 = vmatprep.subr.mxu0 0.0
        %1923 = vmatpush1.msra.mxu0 0.0
        %1924 = vmatprep.subr.mxu0 0.0
        %1925 = vmatpush1.msra.mxu0 0.0
        %1926 = vmatprep.subr.mxu0 0.0
        %1927 = vmatpush1.msra.mxu0 0.0
        %1928 = vmatprep.subr.mxu0 0.0
        %1929 = vmatpush1.msra.mxu0 0.0
        %1930 = vmatprep.subr.mxu0 0.0
        %1931 = vmatpush1.msra.mxu0 0.0
        %1932 = vmatprep.subr.mxu0 0.0
        %1933 = vmatpush1.msra.mxu0 0.0
        %1934 = vmatprep.subr.mxu0 0.0
        %1935 = vmatpush1.msra.mxu0 0.0
        %1936 = vmatprep.subr.mxu0 0.0
        %1937 = vmatpush1.msra.mxu0 0.0
        %1938 = vmatprep.subr.mxu0 0.0
        %1939 = vmatpush1.msra.mxu0 0.0
        %1940 = vmatprep.subr.mxu0 0.0
        %1941 = vmatpush1.msra.mxu0 0.0
        %1942 = vmatprep.subr.mxu0 0.0
        %1943 = vmatpush1.msra.mxu0 0.0
        %1944 = vmatprep.subr.mxu0 0.0
        %1945 = vmatpush1.msra.mxu0 0.0
        %1946 = vmatprep.subr.mxu0 0.0
        %1947 = vmatpush1.msra.mxu0 0.0
        %1948 = vmatprep.subr.mxu0 0.0
        %1949 = vmatpush1.msra.mxu0 0.0
        %1950 = vmatprep.subr.mxu0 0.0
        %1951 = vmatpush1.msra.mxu0 0.0
        %1952 = vmatprep.subr.mxu0 0.0
        %1953 = vmatpush1.msra.mxu0 0.0
        %1954 = vmatprep.subr.mxu0 0.0
        %1955 = vmatpush1.msra.mxu0 0.0
        %1956 = vmatprep.subr.mxu0 0.0
        %1957 = vmatpush1.msra.mxu0 0.0
        %1958 = vmatprep.subr.mxu0 0.0
        %1959 = vmatpush1.msra.mxu0 0.0
        %1960 = vmatprep.subr.mxu0 0.0
        %1961 = vmatpush1.msra.mxu0 0.0
        %1962 = vmatprep.subr.mxu0 0.0
        %1963 = vmatpush1.msra.mxu0 0.0
        %1964 = vmatprep.mubr.f32.mxu0 0.0
        %1965 = vmatmul.mubr.f32.gmra.mrb[0].mxu0 %v1898
        %v1966 = vpop.f32.mrb[0].mxu0
        %v1967 = vadd.f32 0.0, %v1966
        %v1968 = vpop.f32.mrb[0].mxu0
        %1969 = vdwg.mxu0
        %v1970 = vadd.f32 %v1892, %v1967
        %s1971 = scalar_lea.vmem %s7, 24
        %v1972 = vld [vmem:[%s1971] sm:$0xff]
        %v1974 = vsel %vm804, %v1743, 0
        %1976 = vmatprep.subr.mxu0 0.0
        %1977 = vmatpush1.msra.mxu0 %v1972
        %1978 = vmatprep.subr.mxu0 0.0
        %1979 = vmatpush1.msra.mxu0 0.0
        %1980 = vmatprep.subr.mxu0 0.0
        %1981 = vmatpush1.msra.mxu0 0.0
        %1982 = vmatprep.subr.mxu0 0.0
        %1983 = vmatpush1.msra.mxu0 0.0
        %1984 = vmatprep.subr.mxu0 0.0
        %1985 = vmatpush1.msra.mxu0 0.0
        %1986 = vmatprep.subr.mxu0 0.0
        %1987 = vmatpush1.msra.mxu0 0.0
        %1988 = vmatprep.subr.mxu0 0.0
        %1989 = vmatpush1.msra.mxu0 0.0
        %1990 = vmatprep.subr.mxu0 0.0
        %1991 = vmatpush1.msra.mxu0 0.0
        %1992 = vmatprep.subr.mxu0 0.0
        %1993 = vmatpush1.msra.mxu0 0.0
        %1994 = vmatprep.subr.mxu0 0.0
        %1995 = vmatpush1.msra.mxu0 0.0
        %1996 = vmatprep.subr.mxu0 0.0
        %1997 = vmatpush1.msra.mxu0 0.0
        %1998 = vmatprep.subr.mxu0 0.0
        %1999 = vmatpush1.msra.mxu0 0.0
        %2000 = vmatprep.subr.mxu0 0.0
        %2001 = vmatpush1.msra.mxu0 0.0
        %2002 = vmatprep.subr.mxu0 0.0
        %2003 = vmatpush1.msra.mxu0 0.0
        %2004 = vmatprep.subr.mxu0 0.0
        %2005 = vmatpush1.msra.mxu0 0.0
        %2006 = vmatprep.subr.mxu0 0.0
        %2007 = vmatpush1.msra.mxu0 0.0
        %2008 = vmatprep.subr.mxu0 0.0
        %2009 = vmatpush1.msra.mxu0 0.0
        %2010 = vmatprep.subr.mxu0 0.0
        %2011 = vmatpush1.msra.mxu0 0.0
        %2012 = vmatprep.subr.mxu0 0.0
        %2013 = vmatpush1.msra.mxu0 0.0
        %2014 = vmatprep.subr.mxu0 0.0
        %2015 = vmatpush1.msra.mxu0 0.0
        %2016 = vmatprep.subr.mxu0 0.0
        %2017 = vmatpush1.msra.mxu0 0.0
        %2018 = vmatprep.subr.mxu0 0.0
        %2019 = vmatpush1.msra.mxu0 0.0
        %2020 = vmatprep.subr.mxu0 0.0
        %2021 = vmatpush1.msra.mxu0 0.0
        %2022 = vmatprep.subr.mxu0 0.0
        %2023 = vmatpush1.msra.mxu0 0.0
        %2024 = vmatprep.subr.mxu0 0.0
        %2025 = vmatpush1.msra.mxu0 0.0
        %2026 = vmatprep.subr.mxu0 0.0
        %2027 = vmatpush1.msra.mxu0 0.0
        %2028 = vmatprep.subr.mxu0 0.0
        %2029 = vmatpush1.msra.mxu0 0.0
        %2030 = vmatprep.subr.mxu0 0.0
        %2031 = vmatpush1.msra.mxu0 0.0
        %2032 = vmatprep.subr.mxu0 0.0
        %2033 = vmatpush1.msra.mxu0 0.0
        %2034 = vmatprep.subr.mxu0 0.0
        %2035 = vmatpush1.msra.mxu0 0.0
        %2036 = vmatprep.subr.mxu0 0.0
        %2037 = vmatpush1.msra.mxu0 0.0
        %2038 = vmatprep.subr.mxu0 0.0
        %2039 = vmatpush1.msra.mxu0 0.0
        %2040 = vmatprep.mubr.f32.mxu0 0.0
        %2041 = vmatmul.mubr.f32.gmra.mrb[0].mxu0 %v1974
        %v2042 = vpop.f32.mrb[0].mxu0
        %v2043 = vadd.f32 0.0, %v2042
        %v2044 = vpop.f32.mrb[0].mxu0
        %2045 = vdwg.mxu0
        %v2046 = vadd.f32 %v1970, %v2043
        %v2047 = vld [vmem:[%s8] sm:$0x1]
        %v2049 = vlaneseq
        %v2050 = vshrl.u32 %v2049, 7
        %v2051 = vsub.s32 0, %v2050
        %v2052 = vrot.slane %v2047, %v2051
        %v2054 = vadd.f32 %v2046, %v2052
        %v2055 = vld [vmem:[%s715] sm:$0xff]
        %v2056 = vadd.f32 %v2054, %v2055
        %v2057 = vld [vmem:[#allocation10] sm:$0x1]
        %v2058 = vld [vmem:[#allocation12] sm:$0x1]
        %vm2059 = vcmask 261120
        %v2060 = vsel %vm2059, %v2056, 0.0
        %2061 = vadd.xlane.f32.xlu0 %v2060
        %v2062 = vpop.xlane.xlu0 %2061
        %v2063 = vrcp.pop 32.0
        %v2064 = vmul.f32 %v2062, %v2063
        %v2065 = vsub.f32 %v2056, %v2064
        %v2066 = vmul.f32 %v2065, %v2065
        %v2067 = vsel %vm2059, %v2066, 0.0
        %2068 = vadd.xlane.f32.xlu0 %v2067
        %v2069 = vpop.xlane.xlu0 %2068
        %v2070 = vmul.f32 %v2069, %v2063
        %v2071 = vadd.f32 %v2070, 1e-05
        %v2072 = vrsqrt.pop %v2071
        %v2073 = vmul.f32 %v2065, %v2072
        %v2075 = vlaneseq
        %v2076 = vshrl.u32 %v2075, 7
        %v2077 = vsub.s32 0, %v2076
        %v2078 = vrot.slane %v2057, %v2077
        %v2080 = vmul.f32 %v2073, %v2078
        %v2082 = vlaneseq
        %v2083 = vshrl.u32 %v2082, 7
        %v2084 = vsub.s32 0, %v2083
        %v2085 = vrot.slane %v2058, %v2084
        %v2087 = vadd.f32 %v2080, %v2085
        %v2088 = vld [vmem:[#allocation13] sm:$0xff]
        %v2089 = vld [vmem:[#allocation13 + $0x8] sm:$0xff]
        %v2090 = vld [vmem:[#allocation13 + $0x10] sm:$0xff]
        %v2091 = vld [vmem:[#allocation13 + $0x18] sm:$0xff]
        %v2092 = vld [vmem:[#allocation15] sm:$0x1]
        %v2094 = vlaneseq
        %v2095 = vshrl.u32 %v2094, 7
        %v2096 = vsub.s32 0, %v2095
        %v2097 = vrot.slane %v2092, %v2096
        %v2100 = vsel %vm2059, %v2087, 0
        %2102 = vmatprep.subr.mxu0 0.0
        %2103 = vmatpush1.msra.mxu0 %v2088
        %2104 = vmatprep.subr.mxu0 0.0
        %2105 = vmatpush1.msra.mxu0 %v2089
        %2106 = vmatprep.subr.mxu0 0.0
        %2107 = vmatpush1.msra.mxu0 %v2090
        %2108 = vmatprep.subr.mxu0 0.0
        %2109 = vmatpush1.msra.mxu0 %v2091
        %2110 = vmatprep.subr.mxu0 0.0
        %2111 = vmatpush1.msra.mxu0 0.0
        %2112 = vmatprep.subr.mxu0 0.0
        %2113 = vmatpush1.msra.mxu0 0.0
        %2114 = vmatprep.subr.mxu0 0.0
        %2115 = vmatpush1.msra.mxu0 0.0
        %2116 = vmatprep.subr.mxu0 0.0
        %2117 = vmatpush1.msra.mxu0 0.0
        %2118 = vmatprep.subr.mxu0 0.0
        %2119 = vmatpush1.msra.mxu0 0.0
        %2120 = vmatprep.subr.mxu0 0.0
        %2121 = vmatpush1.msra.mxu0 0.0
        %2122 = vmatprep.subr.mxu0 0.0
        %2123 = vmatpush1.msra.mxu0 0.0
        %2124 = vmatprep.subr.mxu0 0.0
        %2125 = vmatpush1.msra.mxu0 0.0
        %2126 = vmatprep.subr.mxu0 0.0
        %2127 = vmatpush1.msra.mxu0 0.0
        %2128 = vmatprep.subr.mxu0 0.0
        %2129 = vmatpush1.msra.mxu0 0.0
        %2130 = vmatprep.subr.mxu0 0.0
        %2131 = vmatpush1.msra.mxu0 0.0
        %2132 = vmatprep.subr.mxu0 0.0
        %2133 = vmatpush1.msra.mxu0 0.0
        %2134 = vmatprep.subr.mxu0 0.0
        %2135 = vmatpush1.msra.mxu0 0.0
        %2136 = vmatprep.subr.mxu0 0.0
        %2137 = vmatpush1.msra.mxu0 0.0
        %2138 = vmatprep.subr.mxu0 0.0
        %2139 = vmatpush1.msra.mxu0 0.0
        %2140 = vmatprep.subr.mxu0 0.0
        %2141 = vmatpush1.msra.mxu0 0.0
        %2142 = vmatprep.subr.mxu0 0.0
        %2143 = vmatpush1.msra.mxu0 0.0
        %2144 = vmatprep.subr.mxu0 0.0
        %2145 = vmatpush1.msra.mxu0 0.0
        %2146 = vmatprep.subr.mxu0 0.0
        %2147 = vmatpush1.msra.mxu0 0.0
        %2148 = vmatprep.subr.mxu0 0.0
        %2149 = vmatpush1.msra.mxu0 0.0
        %2150 = vmatprep.subr.mxu0 0.0
        %2151 = vmatpush1.msra.mxu0 0.0
        %2152 = vmatprep.subr.mxu0 0.0
        %2153 = vmatpush1.msra.mxu0 0.0
        %2154 = vmatprep.subr.mxu0 0.0
        %2155 = vmatpush1.msra.mxu0 0.0
        %2156 = vmatprep.subr.mxu0 0.0
        %2157 = vmatpush1.msra.mxu0 0.0
        %2158 = vmatprep.subr.mxu0 0.0
        %2159 = vmatpush1.msra.mxu0 0.0
        %2160 = vmatprep.subr.mxu0 0.0
        %2161 = vmatpush1.msra.mxu0 0.0
        %2162 = vmatprep.subr.mxu0 0.0
        %2163 = vmatpush1.msra.mxu0 0.0
        %2164 = vmatprep.subr.mxu0 0.0
        %2165 = vmatpush1.msra.mxu0 0.0
        %2166 = vmatprep.mubr.f32.mxu0 0.0
        %2167 = vmatmul.mubr.f32.gmra.mrb[0].mxu0 %v2100
        %v2168 = vpop.f32.mrb[0].mxu0
        %v2169 = vadd.f32 %v2097, %v2168
        %v2170 = vpop.f32.mrb[0].mxu0
        %2171 = vdwg.mxu0
        %v2172 = vmax.f32 %v2169, 0.0
        %v2173 = vld [vmem:[%s13] sm:$0xff]
        %v2174 = vld [vmem:[%s13 + $0x8] sm:$0xff]
        %v2175 = vld [vmem:[%s13 + $0x10] sm:$0xff]
        %v2176 = vld [vmem:[%s13 + $0x18] sm:$0xff]
        %v2177 = vld [vmem:[%s13 + $0x20] sm:$0xff]
        %v2178 = vld [vmem:[%s13 + $0x28] sm:$0xff]
        %v2179 = vld [vmem:[%s13 + $0x30] sm:$0xff]
        %v2180 = vld [vmem:[%s13 + $0x38] sm:$0xff]
        %v2181 = vld [vmem:[%s13 + $0x40] sm:$0xff]
        %v2182 = vld [vmem:[%s13 + $0x48] sm:$0xff]
        %v2183 = vld [vmem:[%s13 + $0x50] sm:$0xff]
        %v2184 = vld [vmem:[%s13 + $0x58] sm:$0xff]
        %v2185 = vld [vmem:[%s13 + $0x60] sm:$0xff]
        %v2186 = vld [vmem:[%s13 + $0x68] sm:$0xff]
        %v2187 = vld [vmem:[%s13 + $0x70] sm:$0xff]
        %v2188 = vld [vmem:[%s13 + $0x78] sm:$0xff]
        %v2189 = vld [vmem:[%s14] sm:$0x1]
        %v2191 = vlaneseq
        %v2192 = vshrl.u32 %v2191, 7
        %v2193 = vsub.s32 0, %v2192
        %v2194 = vrot.slane %v2189, %v2193
        %2196 = vmatprep.subr.mxu0 0.0
        %2197 = vmatpush1.msra.mxu0 %v2173
        %2198 = vmatprep.subr.mxu0 0.0
        %2199 = vmatpush1.msra.mxu0 %v2174
        %2200 = vmatprep.subr.mxu0 0.0
        %2201 = vmatpush1.msra.mxu0 %v2175
        %2202 = vmatprep.subr.mxu0 0.0
        %2203 = vmatpush1.msra.mxu0 %v2176
        %2204 = vmatprep.subr.mxu0 0.0
        %2205 = vmatpush1.msra.mxu0 %v2177
        %2206 = vmatprep.subr.mxu0 0.0
        %2207 = vmatpush1.msra.mxu0 %v2178
        %2208 = vmatprep.subr.mxu0 0.0
        %2209 = vmatpush1.msra.mxu0 %v2179
        %2210 = vmatprep.subr.mxu0 0.0
        %2211 = vmatpush1.msra.mxu0 %v2180
        %2212 = vmatprep.subr.mxu0 0.0
        %2213 = vmatpush1.msra.mxu0 %v2181
        %2214 = vmatprep.subr.mxu0 0.0
        %2215 = vmatpush1.msra.mxu0 %v2182
        %2216 = vmatprep.subr.mxu0 0.0
        %2217 = vmatpush1.msra.mxu0 %v2183
        %2218 = vmatprep.subr.mxu0 0.0
        %2219 = vmatpush1.msra.mxu0 %v2184
        %2220 = vmatprep.subr.mxu0 0.0
        %2221 = vmatpush1.msra.mxu0 %v2185
        %2222 = vmatprep.subr.mxu0 0.0
        %2223 = vmatpush1.msra.mxu0 %v2186
        %2224 = vmatprep.subr.mxu0 0.0
        %2225 = vmatpush1.msra.mxu0 %v2187
        %2226 = vmatprep.subr.mxu0 0.0
        %2227 = vmatpush1.msra.mxu0 %v2188
        %2228 = vmatprep.subr.mxu0 0.0
        %2229 = vmatpush1.msra.mxu0 0.0
        %2230 = vmatprep.subr.mxu0 0.0
        %2231 = vmatpush1.msra.mxu0 0.0
        %2232 = vmatprep.subr.mxu0 0.0
        %2233 = vmatpush1.msra.mxu0 0.0
        %2234 = vmatprep.subr.mxu0 0.0
        %2235 = vmatpush1.msra.mxu0 0.0
        %2236 = vmatprep.subr.mxu0 0.0
        %2237 = vmatpush1.msra.mxu0 0.0
        %2238 = vmatprep.subr.mxu0 0.0
        %2239 = vmatpush1.msra.mxu0 0.0
        %2240 = vmatprep.subr.mxu0 0.0
        %2241 = vmatpush1.msra.mxu0 0.0
        %2242 = vmatprep.subr.mxu0 0.0
        %2243 = vmatpush1.msra.mxu0 0.0
        %2244 = vmatprep.subr.mxu0 0.0
        %2245 = vmatpush1.msra.mxu0 0.0
        %2246 = vmatprep.subr.mxu0 0.0
        %2247 = vmatpush1.msra.mxu0 0.0
        %2248 = vmatprep.subr.mxu0 0.0
        %2249 = vmatpush1.msra.mxu0 0.0
        %2250 = vmatprep.subr.mxu0 0.0
        %2251 = vmatpush1.msra.mxu0 0.0
        %2252 = vmatprep.subr.mxu0 0.0
        %2253 = vmatpush1.msra.mxu0 0.0
        %2254 = vmatprep.subr.mxu0 0.0
        %2255 = vmatpush1.msra.mxu0 0.0
        %2256 = vmatprep.subr.mxu0 0.0
        %2257 = vmatpush1.msra.mxu0 0.0
        %2258 = vmatprep.subr.mxu0 0.0
        %2259 = vmatpush1.msra.mxu0 0.0
        %2260 = vmatprep.mubr.f32.mxu0 0.0
        %2261 = vmatmul.mubr.f32.gmra.mrb[0].mxu0 %v2172
        %v2262 = vpop.f32.mrb[0].mxu0
        %v2263 = vadd.f32 %v2194, %v2262
        %v2264 = vpop.f32.mrb[0].mxu0
        %2265 = vdwg.mxu0
        %v2266 = vadd.f32 %v2263, %v2087
        %v2267 = vld [vmem:[%s15] sm:$0x1]
        %v2268 = vld [vmem:[%s16] sm:$0x1]
        %v2269 = vsel %vm2059, %v2266, 0.0
        %2270 = vadd.xlane.f32.xlu0 %v2269
        %v2271 = vpop.xlane.xlu0 %2270
        %v2272 = vmul.f32 %v2271, %v2063
        %v2273 = vsub.f32 %v2266, %v2272
        %v2274 = vmul.f32 %v2273, %v2273
        %v2275 = vsel %vm2059, %v2274, 0.0
        %2276 = vadd.xlane.f32.xlu0 %v2275
        %v2277 = vpop.xlane.xlu0 %2276
        %v2278 = vmul.f32 %v2277, %v2063
        %v2279 = vadd.f32 %v2278, 1e-05
        %v2280 = vrsqrt.pop %v2279
        %v2281 = vmul.f32 %v2273, %v2280
        %v2283 = vlaneseq
        %v2284 = vshrl.u32 %v2283, 7
        %v2285 = vsub.s32 0, %v2284
        %v2286 = vrot.slane %v2267, %v2285
        %v2288 = vmul.f32 %v2281, %v2286
        %v2290 = vlaneseq
        %v2291 = vshrl.u32 %v2290, 7
        %v2292 = vsub.s32 0, %v2291
        %v2293 = vrot.slane %v2268, %v2292
        %v2295 = vadd.f32 %v2288, %v2293
        %2296 = vst.msk [vmem:[%s798] sm:$0xff] %vm2059, %v2295
        %s2297 = sand.u32 %s424, 1
        %s2298 = scalar_lea.sflag [#allocation6], %s2297
        %s2299 = sand.u32 %s424, 1
        %s2300 = smul.addr %s2299, 8
        %s2301 = scalar_lea.vmem [#allocation16], %s2300
        // Predicated region
        $region193: #{tpu_custom_call.1} parent=155 // pred_check
          %p2302 = pneg %p434
        $region194: #{tpu_custom_call.1} parent=155 // pred_check_branch
          %2304 = sbr.rel (%p2302) target = $region196
        $region195: #{tpu_custom_call.1} parent=155 // pred_region
          %s2306 = ssub.s32 128, 128
          %2307 = vsyncadd %s2298, %s2306
          %s2308 = smul.addr %s39, 128
          %s2309 = scalar_lea.hbm %s17, %s2308
          %s2311 = sshll.u32 %s2301, 4
          %s2312 = int_to_ptr.vmem [resolvable:$true] %s2311
          %2314 = dma.vmem_to_hbm [thread:$0]  %s2312, 128, %s2309, %s2298
        $region196: #{tpu_custom_call.1} parent=155 // pred_fallthru
          _
      $region156: #{tpu_custom_call.1} parent=5 // pred_fallthru
        _
      %p2315 = scmp.le.s32.totalorder 2, %s34
      // Predicated region
      $region197: #{tpu_custom_call.1} parent=5 // pred_check
        %p2316 = pneg %p2315
      $region198: #{tpu_custom_call.1} parent=5 // pred_check_branch
        %2318 = sbr.rel (%p2316) target = $region200
      $region199: #{tpu_custom_call.1} parent=5 // pred_region
        %s2319 = ssub.s32 %s34, 2
        // Predicated region
        $region201: #{tpu_custom_call.1} parent=199 // pred_check
          %p2320 = pneg %p440
        $region202: #{tpu_custom_call.1} parent=199 // pred_check_branch
          %2322 = sbr.rel (%p2320) target = $region204
        $region203: #{tpu_custom_call.1} parent=199 // pred_region
          %s2323 = sand.u32 %s425, 1
          %s2324 = scalar_lea.sflag [#allocation6], %s2323
          %s2325 = sand.u32 %s425, 1
          %s2326 = smul.addr %s2325, 8
          %s2327 = scalar_lea.vmem [#allocation16], %s2326
          %2328 = dma.done %s2324, 128
        $region204: #{tpu_custom_call.1} parent=199 // pred_fallthru
          _
      $region200: #{tpu_custom_call.1} parent=5 // pred_fallthru
        _
    $region6: #{tpu_custom_call.1} parent=1 // loop_footer
      %s38 = sadd.s32 1, %s34
    $region7: #{tpu_custom_call.1} parent=1 // loop_footer_branch
      %33 = sbr.rel target = $region3
    $region8: #{tpu_custom_call.1} parent=1 // loop_exit
      _
    %2329 = vsyncpa [#allocation5], 1
    %s2330 = scalar_lea.sflag [#allocation5], 1
    %2331 = vsyncpa %s2330, 1
    %2332 = vsyncpa [#allocation8], 1
    %s2333 = scalar_lea.sflag [#allocation8], 1
    %2334 = vsyncpa %s2333, 1
    %2335 = vsyncpa [#allocation11], 1
    %2336 = vsyncpa [#allocation14], 1
    %2337 = vsyncpa [#allocation6], 1
    %s2338 = scalar_lea.sflag [#allocation6], 1
    %2339 = vsyncpa %s2338, 1

</llo_original>
